<compile_context>
chip_gen: v5e
topology: v5e:2x2
jax: 0.10.0
libtpu: 0.0.40
codegen_flags: <defaults>
</compile_context>

<pallas_src>
import functools
import math

import jax
import jax.numpy as jnp
from jax.experimental import pallas as pl
from jax.experimental.pallas import tpu as pltpu

LORA_R = 8
LORA_ALPHA = 32
LORA_SCALE = LORA_ALPHA / LORA_R
LN_EPS = 1e-12


# ----------------------------------------------------------------------------
# device-dependent constants (computed once)
# ----------------------------------------------------------------------------
def _device_kind():
    try:
        return jax.devices()[0].device_kind.lower()
    except Exception:
        return ""


_KIND = _device_kind()
_EXP_BF16 = ("v6" in _KIND) or ("v7" in _KIND)          # EUP bf16 path
if "v7" in _KIND:
    _VMEM_LIMIT = 56 * 1024 * 1024                      # 64 MiB physical on v7x
elif ("v6" in _KIND) or ("v5" in _KIND):
    _VMEM_LIMIT = 96 * 1024 * 1024                      # 128 MiB physical
else:
    _VMEM_LIMIT = None                                  # leave compiler default


def _cparams(dims):
    return pltpu.CompilerParams(dimension_semantics=dims,
                                vmem_limit_bytes=_VMEM_LIMIT)


# ----------------------------------------------------------------------------
# small helpers
# ----------------------------------------------------------------------------
def _pick_bm(M):
    """Largest row block <= 512 that divides M, preferring >=2 grid steps."""
    for bm in (512, 256, 128, 64, 32, 16, 8):
        if bm < M and M % bm == 0:
            return bm
    return M


def _pick_bf(F):
    """FFN contraction chunk (columns of w1 / rows of w2)."""
    for bf in (512, 256, 128, 64):
        if F % bf == 0:
            return bf
    return F


def _pick_tq(T):
    """Query block for attention."""
    for tq in (128, 256):
        if tq < T and T % tq == 0:
            return tq
    return T


def _ln_math(x, g, b):
    mu = jnp.mean(x, axis=-1, keepdims=True)
    var = jnp.mean(jnp.square(x - mu), axis=-1, keepdims=True)
    return (x - mu) * jax.lax.rsqrt(var + LN_EPS) * g + b


# constant-index (weight/bias/LN) blocks: single buffer, no pointless 2nd copy
def _const_spec(shape):
    return pl.BlockSpec(shape, lambda *idx: tuple(0 for _ in shape),
                        pipeline_mode=pl.Buffered(1))


# ----------------------------------------------------------------------------
# Kernel 1: embedding LayerNorm fused with layer-0 Q / KV projections
# ----------------------------------------------------------------------------
def _embed_ln_qkv_kernel(x_ref, g_ref, b_ref, wq_ref, bq_ref, wkv_ref, bkv_ref,
                         xout_ref, qout_ref, kvout_ref):
    y = _ln_math(x_ref[...], g_ref[...], b_ref[...])          # f32
    xout_ref[...] = y.astype(xout_ref.dtype)                  # bf16 residual carry
    yb = y.astype(jnp.bfloat16)
    q = jnp.dot(yb, wq_ref[...], preferred_element_type=jnp.float32) + bq_ref[...]
    kv = jnp.dot(yb, wkv_ref[...], preferred_element_type=jnp.float32) + bkv_ref[...]
    qout_ref[...] = q.astype(qout_ref.dtype)
    kvout_ref[...] = kv.astype(kvout_ref.dtype)


def embed_ln_qkv(x, g, b, w_q, b_q, w_kv, b_kv):
    M, H = x.shape
    bm = _pick_bm(M)
    return pl.pallas_call(
        _embed_ln_qkv_kernel,
        out_shape=(jax.ShapeDtypeStruct((M, H), jnp.bfloat16),
                   jax.ShapeDtypeStruct((M, H), jnp.bfloat16),
                   jax.ShapeDtypeStruct((M, 2 * H), jnp.bfloat16)),
        grid=(M // bm,),
        in_specs=[
            pl.BlockSpec((bm, H), lambda i: (i, 0)),
            _const_spec((1, H)), _const_spec((1, H)),
            _const_spec((H, H)), _const_spec((1, H)),
            _const_spec((H, 2 * H)), _const_spec((1, 2 * H)),
        ],
        out_specs=(pl.BlockSpec((bm, H), lambda i: (i, 0)),
                   pl.BlockSpec((bm, H), lambda i: (i, 0)),
                   pl.BlockSpec((bm, 2 * H), lambda i: (i, 0))),
        compiler_params=_cparams(("parallel",)),
    )(x, g, b, w_q, b_q, w_kv, b_kv)


# ----------------------------------------------------------------------------
# Kernel 2: query-blocked multi-head self-attention
#   in:  q (B,T,H) bf16, kv (B,T,2H) bf16, bias (B,1,T) f32
#   out: merged-head context (B,T,H) bf16 (lane-dense writes)
# ----------------------------------------------------------------------------
def _attention_kernel(q_ref, kv_ref, bias_ref, o_ref, *, nh, hd, scale, exp_bf16):
    H = nh * hd
    tq = q_ref.shape[1]
    T = kv_ref.shape[1]

    q = q_ref[0]                                   # (tq, H)  bf16
    kv = kv_ref[0]                                 # (T, 2H)  bf16
    k = kv[:, :H]
    v = kv[:, H:]

    # in-kernel head split (XLU relayout; no wrapper HBM transposes)
    qh = q.reshape(tq, nh, hd).swapaxes(0, 1)      # (nh, tq, hd)
    kh = k.reshape(T, nh, hd).swapaxes(0, 1)       # (nh, T, hd)
    vh = v.reshape(T, nh, hd).swapaxes(0, 1)       # (nh, T, hd)

    bias = bias_ref[...]                           # (1, 1, T) f32
    s = jnp.einsum('hqd,hkd->hqk', qh, kh,
                   preferred_element_type=jnp.float32) * scale + bias
    m = jnp.max(s, axis=-1, keepdims=True)
    sm = s - m
    if exp_bf16:
        pb = jnp.exp(sm.astype(jnp.bfloat16))                    # EUP bf16
        denom = jnp.sum(pb.astype(jnp.float32), axis=-1, keepdims=True)
    else:
        p32 = jnp.exp(sm)                                         # f32 on v5e
        denom = jnp.sum(p32, axis=-1, keepdims=True)
        pb = p32.astype(jnp.bfloat16)
    ctx = jnp.einsum('hqk,hkd->hqd', pb, vh,
                     preferred_element_type=jnp.float32)
    ctx = ctx / denom                                             # exact divide
    merged = ctx.swapaxes(0, 1).reshape(tq, H)                    # (tq, H) lane-dense
    o_ref[0] = merged.astype(o_ref.dtype)


def attention(q_bt, kv_bt, bias, nh, hd):
    B, T, H = q_bt.shape
    tq = _pick_tq(T)
    scale = 1.0 / math.sqrt(hd)
    return pl.pallas_call(
        functools.partial(_attention_kernel, nh=nh, hd=hd, scale=scale,
                          exp_bf16=_EXP_BF16),
        out_shape=jax.ShapeDtypeStruct((B, T, H), jnp.bfloat16),
        grid=(B, T // tq),
        in_specs=[
            pl.BlockSpec((1, tq, H), lambda b, qi: (b, qi, 0)),
            pl.BlockSpec((1, T, 2 * H), lambda b, qi: (b, 0, 0)),
            pl.BlockSpec((1, 1, T), lambda b, qi: (b, 0, 0)),
        ],
        out_specs=pl.BlockSpec((1, tq, H), lambda b, qi: (b, qi, 0)),
        compiler_params=_cparams(("parallel", "parallel")),
    )(q_bt, kv_bt, bias)


# ----------------------------------------------------------------------------
# Kernel 3: fused encoder "post" block, FFN tiled over F
#   out-proj + residual + LN1 + FFN(gelu) + residual + LN2 (+ next layer Q/KV)
# ----------------------------------------------------------------------------
def _block_kernel(*refs, with_qkv):
    if with_qkv:
        (ctx_ref, x_ref, wo_ref, bo_ref, g1_ref, b1_ref,
         w1_ref, bb1_ref, w2_ref, bb2_ref, g2_ref, b2_ref,
         wq_ref, bq_ref, wkv_ref, bkv_ref,
         xout_ref, qout_ref, kvout_ref, h_scr, acc_scr) = refs
    else:
        (ctx_ref, x_ref, wo_ref, bo_ref, g1_ref, b1_ref,
         w1_ref, bb1_ref, w2_ref, bb2_ref, g2_ref, b2_ref,
         xout_ref, h_scr, acc_scr) = refs

    f = pl.program_id(1)
    nf = pl.num_programs(1)

    @pl.when(f == 0)
    def _():
        att = jnp.dot(ctx_ref[...], wo_ref[...],
                      preferred_element_type=jnp.float32) + bo_ref[...]
        h = _ln_math(x_ref[...].astype(jnp.float32) + att, g1_ref[...], b1_ref[...])
        h_scr[...] = h
        acc_scr[...] = jnp.zeros_like(acc_scr)

    # FFN chunk: gelu(h @ w1[:, f0:f1] + b1[f0:f1]) @ w2[f0:f1, :]
    h_b = h_scr[...].astype(jnp.bfloat16)
    ff = jnp.dot(h_b, w1_ref[...], preferred_element_type=jnp.float32) + bb1_ref[...]
    # TODO(synk): HF BERT uses exact (erf) gelu; tanh approximation used here.
    ff = jax.nn.gelu(ff, approximate=True)
    acc_scr[...] += jnp.dot(ff.astype(jnp.bfloat16), w2_ref[...],
                            preferred_element_type=jnp.float32)

    @pl.when(f == nf - 1)
    def _():
        x_new = _ln_math(h_scr[...] + acc_scr[...] + bb2_ref[...],
                         g2_ref[...], b2_ref[...])
        xout_ref[...] = x_new.astype(xout_ref.dtype)
        if with_qkv:
            xb = x_new.astype(jnp.bfloat16)
            qout_ref[...] = (jnp.dot(xb, wq_ref[...],
                                     preferred_element_type=jnp.float32)
                             + bq_ref[...]).astype(qout_ref.dtype)
            kvout_ref[...] = (jnp.dot(xb, wkv_ref[...],
                                      preferred_element_type=jnp.float32)
                              + bkv_ref[...]).astype(kvout_ref.dtype)


def encoder_block(ctx, x, layer, next_layer=None):
    M, H = x.shape
    F = layer["w1"].shape[1]
    bm = _pick_bm(M)
    bf = _pick_bf(F)
    nf = F // bf
    with_qkv = next_layer is not None

    in_arrays = [ctx, x, layer["wo"], layer["bo"], layer["ln1_g"], layer["ln1_b"],
                 layer["w1"], layer["b1"], layer["w2"], layer["b2"],
                 layer["ln2_g"], layer["ln2_b"]]
    in_specs = [
        pl.BlockSpec((bm, H), lambda i, f: (i, 0)),    # ctx (bf16)
        pl.BlockSpec((bm, H), lambda i, f: (i, 0)),    # residual x (bf16)
        _const_spec((H, H)),                           # wo
        _const_spec((1, H)),                           # bo
        _const_spec((1, H)),                           # ln1_g
        _const_spec((1, H)),                           # ln1_b
        pl.BlockSpec((H, bf), lambda i, f: (0, f)),    # w1 chunk (streamed over f)
        pl.BlockSpec((1, bf), lambda i, f: (0, f)),    # b1 chunk
        pl.BlockSpec((bf, H), lambda i, f: (f, 0)),    # w2 chunk
        _const_spec((1, H)),                           # b2
        _const_spec((1, H)),                           # ln2_g
        _const_spec((1, H)),                           # ln2_b
    ]
    if with_qkv:
        in_arrays += [next_layer["w_q"], next_layer["b_q"],
                      next_layer["w_kv"], next_layer["b_kv"]]
        in_specs += [_const_spec((H, H)), _const_spec((1, H)),
                     _const_spec((H, 2 * H)), _const_spec((1, 2 * H))]
        out_shape = (jax.ShapeDtypeStruct((M, H), jnp.bfloat16),
                     jax.ShapeDtypeStruct((M, H), jnp.bfloat16),
                     jax.ShapeDtypeStruct((M, 2 * H), jnp.bfloat16))
        out_specs = (pl.BlockSpec((bm, H), lambda i, f: (i, 0)),
                     pl.BlockSpec((bm, H), lambda i, f: (i, 0)),
                     pl.BlockSpec((bm, 2 * H), lambda i, f: (i, 0)))
    else:
        out_shape = jax.ShapeDtypeStruct((M, H), jnp.bfloat16)
        out_specs = pl.BlockSpec((bm, H), lambda i, f: (i, 0))

    return pl.pallas_call(
        functools.partial(_block_kernel, with_qkv=with_qkv),
        out_shape=out_shape,
        grid=(M // bm, nf),
        in_specs=in_specs,
        out_specs=out_specs,
        scratch_shapes=[pltpu.VMEM((bm, H), jnp.float32),   # h (post-LN1)
                        pltpu.VMEM((bm, H), jnp.float32)],  # FFN accumulator
        compiler_params=_cparams(("parallel", "arbitrary")),
    )(*in_arrays)


# ----------------------------------------------------------------------------
# Kernel 4: masked mean pooling (multiple batch rows per grid step)
# ----------------------------------------------------------------------------
def _pool_kernel(x_ref, m_ref, o_ref):
    x = x_ref[...].astype(jnp.float32)                        # (Bblk, T, H)
    m = m_ref[...]                                            # (Bblk, T) f32
    s = jnp.sum(x * m[:, :, None], axis=1)                    # masked sum (Bblk, H)
    denom = jnp.maximum(jnp.sum(m, axis=-1, keepdims=True), 1e-9)  # clamp(1e-9)
    o_ref[...] = s / denom


def masked_mean_pool(token_embeddings, mask):
    B, T, H = token_embeddings.shape
    bb = 8 if B % 8 == 0 else B
    return pl.pallas_call(
        _pool_kernel,
        out_shape=jax.ShapeDtypeStruct((B, H), jnp.float32),
        grid=(B // bb,),
        in_specs=[
            pl.BlockSpec((bb, T, H), lambda b: (b, 0, 0)),
            pl.BlockSpec((bb, T), lambda b: (b, 0)),
        ],
        out_specs=pl.BlockSpec((bb, H), lambda b: (b, 0)),
        compiler_params=_cparams(("parallel",)),
    )(token_embeddings, mask)


# ----------------------------------------------------------------------------
# Kernel 5: pair scoring (sigmoid(cosine)) + log losses
# ----------------------------------------------------------------------------
def _score_loss_kernel(ap_ref, bp_ref, an_ref, bn_ref, pos_ref, neg_ref, loss_ref):
    # TODO(synk): score_func is injected at construction in PyTorch; a
    # sigmoid(cosine_similarity) scorer is assumed here.
    def score(a, b):
        dot = jnp.sum(a * b, axis=-1, keepdims=True)
        na = jnp.sqrt(jnp.sum(a * a, axis=-1, keepdims=True))
        nb = jnp.sqrt(jnp.sum(b * b, axis=-1, keepdims=True))
        cos = dot / (na * nb + 1e-8)
        return jax.nn.sigmoid(cos)                            # (G, 1)

    pos = score(ap_ref[...], bp_ref[...])
    neg = score(an_ref[...], bn_ref[...])
    pos_ref[...] = pos
    neg_ref[...] = neg
    pos_loss = -jnp.mean(jnp.log(pos + 1e-15), keepdims=True)
    neg_loss = -jnp.mean(jnp.log(1.0 - neg + 1e-15), keepdims=True)
    loss_ref[...] = pos_loss + neg_loss


def score_and_loss(ap, bp, an, bn):
    G, H = ap.shape
    pos, neg, loss = pl.pallas_call(
        _score_loss_kernel,
        out_shape=(
            jax.ShapeDtypeStruct((G, 1), jnp.float32),
            jax.ShapeDtypeStruct((G, 1), jnp.float32),
            jax.ShapeDtypeStruct((1, 1), jnp.float32),
        ),
        grid=(1,),
        in_specs=[pl.BlockSpec((G, H), lambda i: (0, 0))] * 4,
        out_specs=(
            pl.BlockSpec((G, 1), lambda i: (0, 0)),
            pl.BlockSpec((G, 1), lambda i: (0, 0)),
            pl.BlockSpec((1, 1), lambda i: (0, 0)),
        ),
        compiler_params=_cparams(("arbitrary",)),
    )(ap, bp, an, bn)
    return pos.reshape(G), neg.reshape(G), loss.reshape(())


# ----------------------------------------------------------------------------
# Parameter preparation: exact f32 LoRA merge, Q/KV fusion, bf16 MXU weights
# ----------------------------------------------------------------------------
def prepare_inference_params(params):
    # TODO(synk): int8 (v5e/v6e) / fp8 (v7x) weight quantization not applied;
    # bf16 weights with f32 accumulation are used on all generations.
    prep = {
        "tok_emb": params["tok_emb"],
        "pos_emb": params["pos_emb"],
        "emb_ln_g": params["emb_ln_g"].reshape(1, -1),
        "emb_ln_b": params["emb_ln_b"].reshape(1, -1),
        "layers": [],
    }
    for layer in params["layers"]:
        # exact frozen-weight merge, done in f32 BEFORE any bf16 cast
        wq = layer["wq"] + LORA_SCALE * (layer["aq"] @ layer["bq_lora"])
        wv = layer["wv"] + LORA_SCALE * (layer["av"] @ layer["bv_lora"])
        w_kv = jnp.concatenate([layer["wk"], wv], axis=1).astype(jnp.bfloat16)
        b_kv = jnp.concatenate([layer["bk"], layer["bv"]]).reshape(1, -1)
        prep["layers"].append({
            "w_q": wq.astype(jnp.bfloat16), "b_q": layer["bq"].reshape(1, -1),
            "w_kv": w_kv, "b_kv": b_kv,
            "wo": layer["wo"].astype(jnp.bfloat16), "bo": layer["bo"].reshape(1, -1),
            "ln1_g": layer["ln1_g"].reshape(1, -1),
            "ln1_b": layer["ln1_b"].reshape(1, -1),
            "w1": layer["w1"].astype(jnp.bfloat16), "b1": layer["b1"].reshape(1, -1),
            "w2": layer["w2"].astype(jnp.bfloat16), "b2": layer["b2"].reshape(1, -1),
            "ln2_g": layer["ln2_g"].reshape(1, -1),
            "ln2_b": layer["ln2_b"].reshape(1, -1),
        })
    return prep


# ----------------------------------------------------------------------------
# Forward pass (glue in plain JAX, hot paths in Pallas kernels)
# ----------------------------------------------------------------------------
def bert_lora_classifier_forward(prep, input_ids, attention_mask, num_heads,
                                 token_max_length):
    input_ids = input_ids.reshape(-1, token_max_length)
    attention_mask = attention_mask.reshape(-1, token_max_length).astype(jnp.float32)
    B, T = input_ids.shape
    H = prep["tok_emb"].shape[1]
    nh, hd = num_heads, H // num_heads
    M = B * T
    layers = prep["layers"]
    n_layers = len(layers)

    # embeddings (gather + pos add = glue)
    x_emb = (prep["tok_emb"][input_ids] + prep["pos_emb"][:T][None, :, :])
    x_emb = x_emb.reshape(M, H)

    # attention-mask bias: computed once, reused across layers
    attn_bias = ((1.0 - attention_mask) * -1e9).reshape(B, 1, T)

    # embedding LayerNorm fused with layer-0 Q / KV projections
    x, q, kv = embed_ln_qkv(x_emb, prep["emb_ln_g"], prep["emb_ln_b"],
                            layers[0]["w_q"], layers[0]["b_q"],
                            layers[0]["w_kv"], layers[0]["b_kv"])

    for li, layer in enumerate(layers):
        q_bt = q.reshape(B, T, H)            # free reshapes (no transpose)
        kv_bt = kv.reshape(B, T, 2 * H)
        ctx = attention(q_bt, kv_bt, attn_bias, nh, hd)   # (B, T, H) bf16
        ctx2 = ctx.reshape(M, H)
        if li + 1 < n_layers:
            x, q, kv = encoder_block(ctx2, x, layer, next_layer=layers[li + 1])
        else:
            x = encoder_block(ctx2, x, layer)

    token_embeddings = x.reshape(B, T, H)    # outputs[0] (bf16 residual carry)
    # dropout=0.0 and unused in the torch forward -> no-op at inference
    emb = masked_mean_pool(token_embeddings, attention_mask)     # (B, H) f32

    # emb[0::2][::2] == emb[0::4]; emb[1::2][::2] == emb[1::4]
    # emb[0::2][1::2] == emb[2::4]; emb[1::2][1::2] == emb[3::4]
    ap, bp = emb[0::4], emb[1::4]
    an, bn = emb[2::4], emb[3::4]
    pos_output, neg_out, loss_labeled = score_and_loss(ap, bp, an, bn)
    return pos_output, neg_out, loss_labeled


# ----------------------------------------------------------------------------
# Deterministic synthetic parameter initialization
# ----------------------------------------------------------------------------
def init_params(key, vocab_size, hidden, num_layers, ffn_dim, max_pos, r):
    state = {"key": key}

    def rnd(shape, scale=0.02):
        state["key"], sub = jax.random.split(state["key"])
        return (scale * jax.random.normal(sub, shape)).astype(jnp.float32)

    params = {
        "tok_emb": rnd((vocab_size, hidden)),
        "pos_emb": rnd((max_pos, hidden)),
        "emb_ln_g": jnp.ones((hidden,), jnp.float32),
        "emb_ln_b": jnp.zeros((hidden,), jnp.float32),
        "layers": [],
    }
    for _ in range(num_layers):
        # NOTE: peft initializes lora_B to zero; small random values are used so
        # the LoRA merge path is actually exercised (synthetic init).
        layer = {
            "wq": rnd((hidden, hidden)), "bq": jnp.zeros((hidden,), jnp.float32),
            "aq": rnd((hidden, r)), "bq_lora": rnd((r, hidden)),
            "wk": rnd((hidden, hidden)), "bk": jnp.zeros((hidden,), jnp.float32),
            "wv": rnd((hidden, hidden)), "bv": jnp.zeros((hidden,), jnp.float32),
            "av": rnd((hidden, r)), "bv_lora": rnd((r, hidden)),
            "wo": rnd((hidden, hidden)), "bo": jnp.zeros((hidden,), jnp.float32),
            "ln1_g": jnp.ones((hidden,), jnp.float32),
            "ln1_b": jnp.zeros((hidden,), jnp.float32),
            "w1": rnd((hidden, ffn_dim)), "b1": jnp.zeros((ffn_dim,), jnp.float32),
            "w2": rnd((ffn_dim, hidden)), "b2": jnp.zeros((hidden,), jnp.float32),
            "ln2_g": jnp.ones((hidden,), jnp.float32),
            "ln2_b": jnp.zeros((hidden,), jnp.float32),
        }
        params["layers"].append(layer)
    return params


if __name__ == "__main__":
    VOCAB, HIDDEN, LAYERS, HEADS, FFN, MAXPOS = 100, 128, 2, 2, 256, 64
    B, T = 8, 8   # batch must be a multiple of 4 for the pos/neg pair slicing

    key = jax.random.PRNGKey(0)
    pkey, ikey = jax.random.split(key)
    params = init_params(pkey, VOCAB, HIDDEN, LAYERS, FFN, MAXPOS, LORA_R)
    prep = prepare_inference_params(params)   # LoRA merge + Q/KV fuse (load time)

    input_ids = jax.random.randint(ikey, (B, T), 0, VOCAB, dtype=jnp.int32)
    lengths = jnp.array([8, 6, 5, 7, 8, 4, 3, 8], dtype=jnp.int32)
    attention_mask = (jnp.arange(T)[None, :] < lengths[:, None]).astype(jnp.int32)

    fwd = jax.jit(functools.partial(bert_lora_classifier_forward,
                                    num_heads=HEADS, token_max_length=T))
    pos_output, neg_out, loss_labeled = fwd(prep, input_ids, attention_mask)
    jax.block_until_ready((pos_output, neg_out, loss_labeled))
    print("KERNEL_OK")
</pallas_src>

<mosaic_0001>
module attributes {stable_mosaic.version = 11 : i64} {
  func.func @_embed_ln_qkv_kernel(%arg0: i32, %arg1: memref<32x128xf32, #tpu.memory_space<vmem>>, %arg2: memref<1x128xf32, #tpu.memory_space<vmem>>, %arg3: memref<1x128xf32, #tpu.memory_space<vmem>>, %arg4: memref<128x128xbf16, #tpu.memory_space<vmem>>, %arg5: memref<1x128xf32, #tpu.memory_space<vmem>>, %arg6: memref<128x256xbf16, #tpu.memory_space<vmem>>, %arg7: memref<1x256xf32, #tpu.memory_space<vmem>>, %arg8: memref<32x128xbf16, #tpu.memory_space<vmem>>, %arg9: memref<32x128xbf16, #tpu.memory_space<vmem>>, %arg10: memref<32x256xbf16, #tpu.memory_space<vmem>>) attributes {dimension_semantics = [#tpu.dimension_semantics<parallel>], iteration_bounds = array<i64: 2>, scalar_prefetch = 0 : i64, scratch_operands = 0 : i64, tpu.core_type = #tpu.core_type<tc>, window_params = [{transform_indices = @transform_0, window_bounds = array<i64: 32, 128>}, {pipeline_mode = #tpu.pipeline_mode<synchronous>, transform_indices = @transform_1, window_bounds = array<i64: 1, 128>}, {pipeline_mode = #tpu.pipeline_mode<synchronous>, transform_indices = @transform_2, window_bounds = array<i64: 1, 128>}, {pipeline_mode = #tpu.pipeline_mode<synchronous>, transform_indices = @transform_3, window_bounds = array<i64: 128, 128>}, {pipeline_mode = #tpu.pipeline_mode<synchronous>, transform_indices = @transform_4, window_bounds = array<i64: 1, 128>}, {pipeline_mode = #tpu.pipeline_mode<synchronous>, transform_indices = @transform_5, window_bounds = array<i64: 128, 256>}, {pipeline_mode = #tpu.pipeline_mode<synchronous>, transform_indices = @transform_6, window_bounds = array<i64: 1, 256>}, {transform_indices = @transform_7, window_bounds = array<i64: 32, 128>}, {transform_indices = @transform_8, window_bounds = array<i64: 32, 128>}, {transform_indices = @transform_9, window_bounds = array<i64: 32, 256>}]} {
    %c0 = arith.constant 0 : index
    %c0_0 = arith.constant 0 : index
    %0 = vector.load %arg1[%c0, %c0_0] : memref<32x128xf32, #tpu.memory_space<vmem>>, vector<32x128xf32>
    %c0_1 = arith.constant 0 : index
    %c0_2 = arith.constant 0 : index
    %1 = vector.load %arg2[%c0_1, %c0_2] : memref<1x128xf32, #tpu.memory_space<vmem>>, vector<1x128xf32>
    %c0_3 = arith.constant 0 : index
    %c0_4 = arith.constant 0 : index
    %2 = vector.load %arg3[%c0_3, %c0_4] : memref<1x128xf32, #tpu.memory_space<vmem>>, vector<1x128xf32>
    %cst = arith.constant dense<0.000000e+00> : vector<32xf32>
    %3 = vector.multi_reduction <add>, %0, %cst [1] : vector<32x128xf32> to vector<32xf32>
    %4 = vector.shape_cast %3 : vector<32xf32> to vector<32x1xf32>
    %cst_5 = arith.constant 1.280000e+02 : f32
    %5 = vector.broadcast %cst_5 : f32 to vector<32x1xf32>
    %6 = arith.divf %4, %5 : vector<32x1xf32>
    %7 = vector.broadcast %6 : vector<32x1xf32> to vector<32x128xf32>
    %8 = arith.subf %0, %7 : vector<32x128xf32>
    %9 = arith.mulf %8, %8 : vector<32x128xf32>
    %cst_6 = arith.constant dense<0.000000e+00> : vector<32xf32>
    %10 = vector.multi_reduction <add>, %9, %cst_6 [1] : vector<32x128xf32> to vector<32xf32>
    %11 = vector.shape_cast %10 : vector<32xf32> to vector<32x1xf32>
    %cst_7 = arith.constant 1.280000e+02 : f32
    %12 = vector.broadcast %cst_7 : f32 to vector<32x1xf32>
    %13 = arith.divf %11, %12 : vector<32x1xf32>
    %14 = vector.broadcast %6 : vector<32x1xf32> to vector<32x128xf32>
    %15 = arith.subf %0, %14 : vector<32x128xf32>
    %cst_8 = arith.constant 9.99999996E-13 : f32
    %16 = vector.broadcast %cst_8 : f32 to vector<32x1xf32>
    %17 = arith.addf %13, %16 : vector<32x1xf32>
    %18 = math.rsqrt %17 : vector<32x1xf32>
    %19 = vector.broadcast %18 : vector<32x1xf32> to vector<32x128xf32>
    %20 = arith.mulf %15, %19 : vector<32x128xf32>
    %21 = vector.broadcast %1 : vector<1x128xf32> to vector<32x128xf32>
    %22 = arith.mulf %20, %21 : vector<32x128xf32>
    %23 = vector.broadcast %2 : vector<1x128xf32> to vector<32x128xf32>
    %24 = arith.addf %22, %23 : vector<32x128xf32>
    %25 = arith.truncf %24 : vector<32x128xf32> to vector<32x128xbf16>
    %c0_9 = arith.constant 0 : index
    %c0_10 = arith.constant 0 : index
    %26 = vector.load %arg8[%c0_9, %c0_10] : memref<32x128xbf16, #tpu.memory_space<vmem>>, vector<32x128xbf16>
    tpu.vector_store %arg8[%c0_9, %c0_10], %25 {strides = array<i32>} : memref<32x128xbf16, #tpu.memory_space<vmem>>, vector<32x128xbf16>,
    %27 = arith.truncf %24 : vector<32x128xf32> to vector<32x128xbf16>
    %c0_11 = arith.constant 0 : index
    %c0_12 = arith.constant 0 : index
    %28 = vector.load %arg4[%c0_11, %c0_12] : memref<128x128xbf16, #tpu.memory_space<vmem>>, vector<128x128xbf16>
    %cst_13 = arith.constant dense<0.000000e+00> : vector<32x128xf32>
    %29 = tpu.matmul %27, %28, %cst_13 {dimension_numbers = #tpu.dot_dimension_numbers<[1], [0], [0], [1], [0, 0, 1, 1], [], []>} : vector<32x128xbf16>, vector<128x128xbf16>, vector<32x128xf32> -> vector<32x128xf32>
    %c0_14 = arith.constant 0 : index
    %c0_15 = arith.constant 0 : index
    %30 = vector.load %arg5[%c0_14, %c0_15] : memref<1x128xf32, #tpu.memory_space<vmem>>, vector<1x128xf32>
    %31 = vector.broadcast %30 : vector<1x128xf32> to vector<32x128xf32>
    %32 = arith.addf %29, %31 : vector<32x128xf32>
    %c0_16 = arith.constant 0 : index
    %c0_17 = arith.constant 0 : index
    %33 = vector.load %arg6[%c0_16, %c0_17] : memref<128x256xbf16, #tpu.memory_space<vmem>>, vector<128x256xbf16>
    %cst_18 = arith.constant dense<0.000000e+00> : vector<32x256xf32>
    %34 = tpu.matmul %27, %33, %cst_18 {dimension_numbers = #tpu.dot_dimension_numbers<[1], [0], [0], [1], [0, 0, 1, 1], [], []>} : vector<32x128xbf16>, vector<128x256xbf16>, vector<32x256xf32> -> vector<32x256xf32>
    %c0_19 = arith.constant 0 : index
    %c0_20 = arith.constant 0 : index
    %35 = vector.load %arg7[%c0_19, %c0_20] : memref<1x256xf32, #tpu.memory_space<vmem>>, vector<1x256xf32>
    %36 = vector.broadcast %35 : vector<1x256xf32> to vector<32x256xf32>
    %37 = arith.addf %34, %36 : vector<32x256xf32>
    %38 = arith.truncf %32 : vector<32x128xf32> to vector<32x128xbf16>
    %c0_21 = arith.constant 0 : index
    %c0_22 = arith.constant 0 : index
    %39 = vector.load %arg9[%c0_21, %c0_22] : memref<32x128xbf16, #tpu.memory_space<vmem>>, vector<32x128xbf16>
    tpu.vector_store %arg9[%c0_21, %c0_22], %38 {strides = array<i32>} : memref<32x128xbf16, #tpu.memory_space<vmem>>, vector<32x128xbf16>,
    %40 = arith.truncf %37 : vector<32x256xf32> to vector<32x256xbf16>
    %c0_23 = arith.constant 0 : index
    %c0_24 = arith.constant 0 : index
    %41 = vector.load %arg10[%c0_23, %c0_24] : memref<32x256xbf16, #tpu.memory_space<vmem>>, vector<32x256xbf16>
    tpu.vector_store %arg10[%c0_23, %c0_24], %40 {strides = array<i32>} : memref<32x256xbf16, #tpu.memory_space<vmem>>, vector<32x256xbf16>,
    return
  }
  func.func @transform_0(%arg0: i32) -> (i32, i32) {
    %c0_i32 = arith.constant 0 : i32
    %c0_i32_0 = arith.constant 0 : i32
    return %arg0, %c0_i32 : i32, i32
  }
  func.func @transform_1(%arg0: i32) -> (i32, i32) {
    %c0_i32 = arith.constant 0 : i32
    %c0_i32_0 = arith.constant 0 : i32
    %c0_i32_1 = arith.constant 0 : i32
    return %c0_i32, %c0_i32_0 : i32, i32
  }
  func.func @transform_2(%arg0: i32) -> (i32, i32) {
    %c0_i32 = arith.constant 0 : i32
    %c0_i32_0 = arith.constant 0 : i32
    %c0_i32_1 = arith.constant 0 : i32
    return %c0_i32, %c0_i32_0 : i32, i32
  }
  func.func @transform_3(%arg0: i32) -> (i32, i32) {
    %c0_i32 = arith.constant 0 : i32
    %c0_i32_0 = arith.constant 0 : i32
    %c0_i32_1 = arith.constant 0 : i32
    return %c0_i32, %c0_i32_0 : i32, i32
  }
  func.func @transform_4(%arg0: i32) -> (i32, i32) {
    %c0_i32 = arith.constant 0 : i32
    %c0_i32_0 = arith.constant 0 : i32
    %c0_i32_1 = arith.constant 0 : i32
    return %c0_i32, %c0_i32_0 : i32, i32
  }
  func.func @transform_5(%arg0: i32) -> (i32, i32) {
    %c0_i32 = arith.constant 0 : i32
    %c0_i32_0 = arith.constant 0 : i32
    %c0_i32_1 = arith.constant 0 : i32
    return %c0_i32, %c0_i32_0 : i32, i32
  }
  func.func @transform_6(%arg0: i32) -> (i32, i32) {
    %c0_i32 = arith.constant 0 : i32
    %c0_i32_0 = arith.constant 0 : i32
    %c0_i32_1 = arith.constant 0 : i32
    return %c0_i32, %c0_i32_0 : i32, i32
  }
  func.func @transform_7(%arg0: i32) -> (i32, i32) {
    %c0_i32 = arith.constant 0 : i32
    %c0_i32_0 = arith.constant 0 : i32
    return %arg0, %c0_i32 : i32, i32
  }
  func.func @transform_8(%arg0: i32) -> (i32, i32) {
    %c0_i32 = arith.constant 0 : i32
    %c0_i32_0 = arith.constant 0 : i32
    return %arg0, %c0_i32 : i32, i32
  }
  func.func @transform_9(%arg0: i32) -> (i32, i32) {
    %c0_i32 = arith.constant 0 : i32
    %c0_i32_0 = arith.constant 0 : i32
    return %arg0, %c0_i32 : i32, i32
  }
}

module attributes {stable_mosaic.version = 11 : i64} {
  func.func @_attention_kernel(%arg0: i32, %arg1: i32, %arg2: memref<1x8x128xbf16, #tpu.memory_space<vmem>>, %arg3: memref<1x8x256xbf16, #tpu.memory_space<vmem>>, %arg4: memref<1x1x8xf32, #tpu.memory_space<vmem>>, %arg5: memref<1x8x128xbf16, #tpu.memory_space<vmem>>) attributes {dimension_semantics = [#tpu.dimension_semantics<parallel>, #tpu.dimension_semantics<parallel>], iteration_bounds = array<i64: 8, 1>, scalar_prefetch = 0 : i64, scratch_operands = 0 : i64, tpu.core_type = #tpu.core_type<tc>, window_params = [{transform_indices = @transform_0, window_bounds = array<i64: 1, 8, 128>}, {transform_indices = @transform_1, window_bounds = array<i64: 1, 8, 256>}, {transform_indices = @transform_2, window_bounds = array<i64: 1, 1, 8>}, {transform_indices = @transform_3, window_bounds = array<i64: 1, 8, 128>}]} {
    %c0 = arith.constant 0 : index
    %c0_0 = arith.constant 0 : index
    %c0_1 = arith.constant 0 : index
    %0 = vector.load %arg2[%c0, %c0_0, %c0_1] : memref<1x8x128xbf16, #tpu.memory_space<vmem>>, vector<1x8x128xbf16>
    %1 = vector.shape_cast %0 : vector<1x8x128xbf16> to vector<8x128xbf16>
    %c0_2 = arith.constant 0 : index
    %c0_3 = arith.constant 0 : index
    %c0_4 = arith.constant 0 : index
    %2 = vector.load %arg3[%c0_2, %c0_3, %c0_4] : memref<1x8x256xbf16, #tpu.memory_space<vmem>>, vector<1x8x256xbf16>
    %3 = vector.shape_cast %2 : vector<1x8x256xbf16> to vector<8x256xbf16>
    %4 = vector.extract_strided_slice %3 {offsets = [0, 0], sizes = [8, 128], strides = [1, 1]} : vector<8x256xbf16> to vector<8x128xbf16>
    %5 = vector.extract_strided_slice %3 {offsets = [0, 128], sizes = [8, 128], strides = [1, 1]} : vector<8x256xbf16> to vector<8x128xbf16>
    %6 = vector.shape_cast %1 : vector<8x128xbf16> to vector<8x2x64xbf16>
    %7 = tpu.transpose %6, [1, 0, 2] : vector<8x2x64xbf16> -> vector<2x8x64xbf16>
    %8 = vector.shape_cast %4 : vector<8x128xbf16> to vector<8x2x64xbf16>
    %9 = tpu.transpose %8, [1, 0, 2] : vector<8x2x64xbf16> -> vector<2x8x64xbf16>
    %10 = vector.shape_cast %5 : vector<8x128xbf16> to vector<8x2x64xbf16>
    %11 = tpu.transpose %10, [1, 0, 2] : vector<8x2x64xbf16> -> vector<2x8x64xbf16>
    %c0_5 = arith.constant 0 : index
    %c0_6 = arith.constant 0 : index
    %c0_7 = arith.constant 0 : index
    %12 = vector.load %arg4[%c0_5, %c0_6, %c0_7] : memref<1x1x8xf32, #tpu.memory_space<vmem>>, vector<1x1x8xf32>
    "tpu.trace_start"() <{level = 10 : i32, message = "hqd,hkd->hqk"}> : () -> ()
    %cst = arith.constant dense<0.000000e+00> : vector<2x8x8xf32>
    %13 = tpu.matmul %7, %9, %cst {dimension_numbers = #tpu.dot_dimension_numbers<[2], [2], [1], [1], [0, 0, 0, 1, 1, 1], [0], [0]>} : vector<2x8x64xbf16>, vector<2x8x64xbf16>, vector<2x8x8xf32> -> vector<2x8x8xf32>
    "tpu.trace_stop"() : () -> ()
    %cst_8 = arith.constant 1.250000e-01 : f32
    %14 = vector.broadcast %cst_8 : f32 to vector<2x8x8xf32>
    %15 = arith.mulf %13, %14 : vector<2x8x8xf32>
    %16 = vector.broadcast %12 : vector<1x1x8xf32> to vector<2x8x8xf32>
    %17 = arith.addf %15, %16 : vector<2x8x8xf32>
    %cst_9 = arith.constant dense<0xFF800000> : vector<2x8xf32>
    %18 = vector.multi_reduction <maximumf>, %17, %cst_9 [2] : vector<2x8x8xf32> to vector<2x8xf32>
    %19 = vector.shape_cast %18 : vector<2x8xf32> to vector<2x8x1xf32>
    %20 = vector.broadcast %19 : vector<2x8x1xf32> to vector<2x8x8xf32>
    %21 = arith.subf %17, %20 : vector<2x8x8xf32>
    %22 = math.exp %21 : vector<2x8x8xf32>
    %cst_10 = arith.constant dense<0.000000e+00> : vector<2x8xf32>
    %23 = vector.multi_reduction <add>, %22, %cst_10 [2] : vector<2x8x8xf32> to vector<2x8xf32>
    %24 = vector.shape_cast %23 : vector<2x8xf32> to vector<2x8x1xf32>
    %25 = arith.truncf %22 : vector<2x8x8xf32> to vector<2x8x8xbf16>
    "tpu.trace_start"() <{level = 10 : i32, message = "hqk,hkd->hqd"}> : () -> ()
    %cst_11 = arith.constant dense<0.000000e+00> : vector<2x8x64xf32>
    %26 = tpu.matmul %25, %11, %cst_11 {dimension_numbers = #tpu.dot_dimension_numbers<[2], [1], [1], [2], [0, 0, 0, 1, 1, 2], [0], [0]>} : vector<2x8x8xbf16>, vector<2x8x64xbf16>, vector<2x8x64xf32> -> vector<2x8x64xf32>
    "tpu.trace_stop"() : () -> ()
    %27 = vector.broadcast %24 : vector<2x8x1xf32> to vector<2x8x64xf32>
    %28 = arith.divf %26, %27 : vector<2x8x64xf32>
    %29 = tpu.transpose %28, [1, 0, 2] : vector<2x8x64xf32> -> vector<8x2x64xf32>
    %30 = vector.shape_cast %29 : vector<8x2x64xf32> to vector<8x128xf32>
    %31 = arith.truncf %30 : vector<8x128xf32> to vector<8x128xbf16>
    %c0_12 = arith.constant 0 : index
    %c0_13 = arith.constant 0 : index
    %c0_14 = arith.constant 0 : index
    %32 = vector.load %arg5[%c0_12, %c0_13, %c0_14] : memref<1x8x128xbf16, #tpu.memory_space<vmem>>, vector<1x8x128xbf16>
    %33 = vector.shape_cast %32 : vector<1x8x128xbf16> to vector<8x128xbf16>
    %34 = vector.shape_cast %31 : vector<8x128xbf16> to vector<1x8x128xbf16>
    tpu.vector_store %arg5[%c0_12, %c0_13, %c0_14], %34 {strides = array<i32>} : memref<1x8x128xbf16, #tpu.memory_space<vmem>>, vector<1x8x128xbf16>,
    return
  }
  func.func @transform_0(%arg0: i32, %arg1: i32) -> (i32, i32, i32) {
    %c0_i32 = arith.constant 0 : i32
    %c0_i32_0 = arith.constant 0 : i32
    return %arg0, %arg1, %c0_i32 : i32, i32, i32
  }
  func.func @transform_1(%arg0: i32, %arg1: i32) -> (i32, i32, i32) {
    %c0_i32 = arith.constant 0 : i32
    %c0_i32_0 = arith.constant 0 : i32
    %c0_i32_1 = arith.constant 0 : i32
    return %arg0, %c0_i32, %c0_i32_0 : i32, i32, i32
  }
  func.func @transform_2(%arg0: i32, %arg1: i32) -> (i32, i32, i32) {
    %c0_i32 = arith.constant 0 : i32
    %c0_i32_0 = arith.constant 0 : i32
    %c0_i32_1 = arith.constant 0 : i32
    return %arg0, %c0_i32, %c0_i32_0 : i32, i32, i32
  }
  func.func @transform_3(%arg0: i32, %arg1: i32) -> (i32, i32, i32) {
    %c0_i32 = arith.constant 0 : i32
    %c0_i32_0 = arith.constant 0 : i32
    return %arg0, %arg1, %c0_i32 : i32, i32, i32
  }
}

module attributes {stable_mosaic.version = 11 : i64} {
  func.func @_block_kernel(%arg0: i32, %arg1: i32, %arg2: memref<32x128xbf16, #tpu.memory_space<vmem>>, %arg3: memref<32x128xbf16, #tpu.memory_space<vmem>>, %arg4: memref<128x128xbf16, #tpu.memory_space<vmem>>, %arg5: memref<1x128xf32, #tpu.memory_space<vmem>>, %arg6: memref<1x128xf32, #tpu.memory_space<vmem>>, %arg7: memref<1x128xf32, #tpu.memory_space<vmem>>, %arg8: memref<128x256xbf16, #tpu.memory_space<vmem>>, %arg9: memref<1x256xf32, #tpu.memory_space<vmem>>, %arg10: memref<256x128xbf16, #tpu.memory_space<vmem>>, %arg11: memref<1x128xf32, #tpu.memory_space<vmem>>, %arg12: memref<1x128xf32, #tpu.memory_space<vmem>>, %arg13: memref<1x128xf32, #tpu.memory_space<vmem>>, %arg14: memref<32x128xbf16, #tpu.memory_space<vmem>>, %arg15: memref<32x128xf32, #tpu.memory_space<vmem>>, %arg16: memref<32x128xf32, #tpu.memory_space<vmem>>) attributes {dimension_semantics = [#tpu.dimension_semantics<parallel>, #tpu.dimension_semantics<arbitrary>], iteration_bounds = array<i64: 2, 1>, scalar_prefetch = 0 : i64, scratch_operands = 2 : i64, tpu.core_type = #tpu.core_type<tc>, window_params = [{transform_indices = @transform_0, window_bounds = array<i64: 32, 128>}, {transform_indices = @transform_1, window_bounds = array<i64: 32, 128>}, {pipeline_mode = #tpu.pipeline_mode<synchronous>, transform_indices = @transform_2, window_bounds = array<i64: 128, 128>}, {pipeline_mode = #tpu.pipeline_mode<synchronous>, transform_indices = @transform_3, window_bounds = array<i64: 1, 128>}, {pipeline_mode = #tpu.pipeline_mode<synchronous>, transform_indices = @transform_4, window_bounds = array<i64: 1, 128>}, {pipeline_mode = #tpu.pipeline_mode<synchronous>, transform_indices = @transform_5, window_bounds = array<i64: 1, 128>}, {transform_indices = @transform_6, window_bounds = array<i64: 128, 256>}, {transform_indices = @transform_7, window_bounds = array<i64: 1, 256>}, {transform_indices = @transform_8, window_bounds = array<i64: 256, 128>}, {pipeline_mode = #tpu.pipeline_mode<synchronous>, transform_indices = @transform_9, window_bounds = array<i64: 1, 128>}, {pipeline_mode = #tpu.pipeline_mode<synchronous>, transform_indices = @transform_10, window_bounds = array<i64: 1, 128>}, {pipeline_mode = #tpu.pipeline_mode<synchronous>, transform_indices = @transform_11, window_bounds = array<i64: 1, 128>}, {transform_indices = @transform_12, window_bounds = array<i64: 32, 128>}]} {
    %c0_i32 = arith.constant 0 : i32
    %0 = arith.cmpi eq, %arg1, %c0_i32 : i32
    %1 = arith.extui %0 : i1 to i32
    %c0_i32_0 = arith.constant 0 : i32
    %2 = arith.cmpi ne, %1, %c0_i32_0 : i32
    scf.if %2 {
      %c0_19 = arith.constant 0 : index
      %c0_20 = arith.constant 0 : index
      %32 = vector.load %arg2[%c0_19, %c0_20] : memref<32x128xbf16, #tpu.memory_space<vmem>>, vector<32x128xbf16>
      %c0_21 = arith.constant 0 : index
      %c0_22 = arith.constant 0 : index
      %33 = vector.load %arg4[%c0_21, %c0_22] : memref<128x128xbf16, #tpu.memory_space<vmem>>, vector<128x128xbf16>
      %cst_23 = arith.constant dense<0.000000e+00> : vector<32x128xf32>
      %34 = tpu.matmul %32, %33, %cst_23 {dimension_numbers = #tpu.dot_dimension_numbers<[1], [0], [0], [1], [0, 0, 1, 1], [], []>} : vector<32x128xbf16>, vector<128x128xbf16>, vector<32x128xf32> -> vector<32x128xf32>
      %c0_24 = arith.constant 0 : index
      %c0_25 = arith.constant 0 : index
      %35 = vector.load %arg5[%c0_24, %c0_25] : memref<1x128xf32, #tpu.memory_space<vmem>>, vector<1x128xf32>
      %36 = vector.broadcast %35 : vector<1x128xf32> to vector<32x128xf32>
      %37 = arith.addf %34, %36 : vector<32x128xf32>
      %c0_26 = arith.constant 0 : index
      %c0_27 = arith.constant 0 : index
      %38 = vector.load %arg3[%c0_26, %c0_27] : memref<32x128xbf16, #tpu.memory_space<vmem>>, vector<32x128xbf16>
      %39 = arith.extf %38 : vector<32x128xbf16> to vector<32x128xf32>
      %40 = arith.addf %39, %37 : vector<32x128xf32>
      %c0_28 = arith.constant 0 : index
      %c0_29 = arith.constant 0 : index
      %41 = vector.load %arg6[%c0_28, %c0_29] : memref<1x128xf32, #tpu.memory_space<vmem>>, vector<1x128xf32>
      %c0_30 = arith.constant 0 : index
      %c0_31 = arith.constant 0 : index
      %42 = vector.load %arg7[%c0_30, %c0_31] : memref<1x128xf32, #tpu.memory_space<vmem>>, vector<1x128xf32>
      %cst_32 = arith.constant dense<0.000000e+00> : vector<32xf32>
      %43 = vector.multi_reduction <add>, %40, %cst_32 [1] : vector<32x128xf32> to vector<32xf32>
      %44 = vector.shape_cast %43 : vector<32xf32> to vector<32x1xf32>
      %cst_33 = arith.constant 1.280000e+02 : f32
      %45 = vector.broadcast %cst_33 : f32 to vector<32x1xf32>
      %46 = arith.divf %44, %45 : vector<32x1xf32>
      %47 = vector.broadcast %46 : vector<32x1xf32> to vector<32x128xf32>
      %48 = arith.subf %40, %47 : vector<32x128xf32>
      %49 = arith.mulf %48, %48 : vector<32x128xf32>
      %cst_34 = arith.constant dense<0.000000e+00> : vector<32xf32>
      %50 = vector.multi_reduction <add>, %49, %cst_34 [1] : vector<32x128xf32> to vector<32xf32>
      %51 = vector.shape_cast %50 : vector<32xf32> to vector<32x1xf32>
      %cst_35 = arith.constant 1.280000e+02 : f32
      %52 = vector.broadcast %cst_35 : f32 to vector<32x1xf32>
      %53 = arith.divf %51, %52 : vector<32x1xf32>
      %54 = vector.broadcast %46 : vector<32x1xf32> to vector<32x128xf32>
      %55 = arith.subf %40, %54 : vector<32x128xf32>
      %cst_36 = arith.constant 9.99999996E-13 : f32
      %56 = vector.broadcast %cst_36 : f32 to vector<32x1xf32>
      %57 = arith.addf %53, %56 : vector<32x1xf32>
      %58 = math.rsqrt %57 : vector<32x1xf32>
      %59 = vector.broadcast %58 : vector<32x1xf32> to vector<32x128xf32>
      %60 = arith.mulf %55, %59 : vector<32x128xf32>
      %61 = vector.broadcast %41 : vector<1x128xf32> to vector<32x128xf32>
      %62 = arith.mulf %60, %61 : vector<32x128xf32>
      %63 = vector.broadcast %42 : vector<1x128xf32> to vector<32x128xf32>
      %64 = arith.addf %62, %63 : vector<32x128xf32>
      %c0_37 = arith.constant 0 : index
      %c0_38 = arith.constant 0 : index
      %65 = vector.load %arg15[%c0_37, %c0_38] : memref<32x128xf32, #tpu.memory_space<vmem>>, vector<32x128xf32>
      tpu.vector_store %arg15[%c0_37, %c0_38], %64 {strides = array<i32>} : memref<32x128xf32, #tpu.memory_space<vmem>>, vector<32x128xf32>,
      %cst_39 = arith.constant 0.000000e+00 : f32
      %66 = vector.broadcast %cst_39 : f32 to vector<32x128xf32>
      %c0_40 = arith.constant 0 : index
      %c0_41 = arith.constant 0 : index
      %67 = vector.load %arg16[%c0_40, %c0_41] : memref<32x128xf32, #tpu.memory_space<vmem>>, vector<32x128xf32>
      tpu.vector_store %arg16[%c0_40, %c0_41], %66 {strides = array<i32>} : memref<32x128xf32, #tpu.memory_space<vmem>>, vector<32x128xf32>,
    } else {
    }
    %c0 = arith.constant 0 : index
    %c0_1 = arith.constant 0 : index
    %3 = vector.load %arg15[%c0, %c0_1] : memref<32x128xf32, #tpu.memory_space<vmem>>, vector<32x128xf32>
    %4 = arith.truncf %3 : vector<32x128xf32> to vector<32x128xbf16>
    %c0_2 = arith.constant 0 : index
    %c0_3 = arith.constant 0 : index
    %5 = vector.load %arg8[%c0_2, %c0_3] : memref<128x256xbf16, #tpu.memory_space<vmem>>, vector<128x256xbf16>
    %cst = arith.constant dense<0.000000e+00> : vector<32x256xf32>
    %6 = tpu.matmul %4, %5, %cst {dimension_numbers = #tpu.dot_dimension_numbers<[1], [0], [0], [1], [0, 0, 1, 1], [], []>} : vector<32x128xbf16>, vector<128x256xbf16>, vector<32x256xf32> -> vector<32x256xf32>
    %c0_4 = arith.constant 0 : index
    %c0_5 = arith.constant 0 : index
    %7 = vector.load %arg9[%c0_4, %c0_5] : memref<1x256xf32, #tpu.memory_space<vmem>>, vector<1x256xf32>
    %8 = vector.broadcast %7 : vector<1x256xf32> to vector<32x256xf32>
    %9 = arith.addf %6, %8 : vector<32x256xf32>
    %10 = arith.mulf %9, %9 : vector<32x256xf32>
    %11 = arith.mulf %9, %10 : vector<32x256xf32>
    %cst_6 = arith.constant 4.471500e-02 : f32
    %12 = vector.broadcast %cst_6 : f32 to vector<32x256xf32>
    %13 = arith.mulf %12, %11 : vector<32x256xf32>
    %14 = arith.addf %9, %13 : vector<32x256xf32>
    %cst_7 = arith.constant 0.797884583 : f32
    %15 = vector.broadcast %cst_7 : f32 to vector<32x256xf32>
    %16 = arith.mulf %15, %14 : vector<32x256xf32>
    %17 = math.tanh %16 : vector<32x256xf32>
    %cst_8 = arith.constant 1.000000e+00 : f32
    %18 = vector.broadcast %cst_8 : f32 to vector<32x256xf32>
    %19 = arith.addf %18, %17 : vector<32x256xf32>
    %cst_9 = arith.constant 5.000000e-01 : f32
    %20 = vector.broadcast %cst_9 : f32 to vector<32x256xf32>
    %21 = arith.mulf %20, %19 : vector<32x256xf32>
    %22 = arith.mulf %9, %21 : vector<32x256xf32>
    %c0_10 = arith.constant 0 : index
    %c0_11 = arith.constant 0 : index
    %23 = vector.load %arg16[%c0_10, %c0_11] : memref<32x128xf32, #tpu.memory_space<vmem>>, vector<32x128xf32>
    %24 = arith.truncf %22 : vector<32x256xf32> to vector<32x256xbf16>
    %c0_12 = arith.constant 0 : index
    %c0_13 = arith.constant 0 : index
    %25 = vector.load %arg10[%c0_12, %c0_13] : memref<256x128xbf16, #tpu.memory_space<vmem>>, vector<256x128xbf16>
    %cst_14 = arith.constant dense<0.000000e+00> : vector<32x128xf32>
    %26 = tpu.matmul %24, %25, %cst_14 {dimension_numbers = #tpu.dot_dimension_numbers<[1], [0], [0], [1], [0, 0, 1, 1], [], []>} : vector<32x256xbf16>, vector<256x128xbf16>, vector<32x128xf32> -> vector<32x128xf32>
    %27 = arith.addf %23, %26 : vector<32x128xf32>
    %c0_15 = arith.constant 0 : index
    %c0_16 = arith.constant 0 : index
    %28 = vector.load %arg16[%c0_15, %c0_16] : memref<32x128xf32, #tpu.memory_space<vmem>>, vector<32x128xf32>
    tpu.vector_store %arg16[%c0_15, %c0_16], %27 {strides = array<i32>} : memref<32x128xf32, #tpu.memory_space<vmem>>, vector<32x128xf32>,
    %c0_i32_17 = arith.constant 0 : i32
    %29 = arith.cmpi eq, %arg1, %c0_i32_17 : i32
    %30 = arith.extui %29 : i1 to i32
    %c0_i32_18 = arith.constant 0 : i32
    %31 = arith.cmpi ne, %30, %c0_i32_18 : i32
    scf.if %31 {
      %c0_19 = arith.constant 0 : index
      %c0_20 = arith.constant 0 : index
      %32 = vector.load %arg15[%c0_19, %c0_20] : memref<32x128xf32, #tpu.memory_space<vmem>>, vector<32x128xf32>
      %c0_21 = arith.constant 0 : index
      %c0_22 = arith.constant 0 : index
      %33 = vector.load %arg16[%c0_21, %c0_22] : memref<32x128xf32, #tpu.memory_space<vmem>>, vector<32x128xf32>
      %34 = arith.addf %32, %33 : vector<32x128xf32>
      %c0_23 = arith.constant 0 : index
      %c0_24 = arith.constant 0 : index
      %35 = vector.load %arg11[%c0_23, %c0_24] : memref<1x128xf32, #tpu.memory_space<vmem>>, vector<1x128xf32>
      %36 = vector.broadcast %35 : vector<1x128xf32> to vector<32x128xf32>
      %37 = arith.addf %34, %36 : vector<32x128xf32>
      %c0_25 = arith.constant 0 : index
      %c0_26 = arith.constant 0 : index
      %38 = vector.load %arg12[%c0_25, %c0_26] : memref<1x128xf32, #tpu.memory_space<vmem>>, vector<1x128xf32>
      %c0_27 = arith.constant 0 : index
      %c0_28 = arith.constant 0 : index
      %39 = vector.load %arg13[%c0_27, %c0_28] : memref<1x128xf32, #tpu.memory_space<vmem>>, vector<1x128xf32>
      %cst_29 = arith.constant dense<0.000000e+00> : vector<32xf32>
      %40 = vector.multi_reduction <add>, %37, %cst_29 [1] : vector<32x128xf32> to vector<32xf32>
      %41 = vector.shape_cast %40 : vector<32xf32> to vector<32x1xf32>
      %cst_30 = arith.constant 1.280000e+02 : f32
      %42 = vector.broadcast %cst_30 : f32 to vector<32x1xf32>
      %43 = arith.divf %41, %42 : vector<32x1xf32>
      %44 = vector.broadcast %43 : vector<32x1xf32> to vector<32x128xf32>
      %45 = arith.subf %37, %44 : vector<32x128xf32>
      %46 = arith.mulf %45, %45 : vector<32x128xf32>
      %cst_31 = arith.constant dense<0.000000e+00> : vector<32xf32>
      %47 = vector.multi_reduction <add>, %46, %cst_31 [1] : vector<32x128xf32> to vector<32xf32>
      %48 = vector.shape_cast %47 : vector<32xf32> to vector<32x1xf32>
      %cst_32 = arith.constant 1.280000e+02 : f32
      %49 = vector.broadcast %cst_32 : f32 to vector<32x1xf32>
      %50 = arith.divf %48, %49 : vector<32x1xf32>
      %51 = vector.broadcast %43 : vector<32x1xf32> to vector<32x128xf32>
      %52 = arith.subf %37, %51 : vector<32x128xf32>
      %cst_33 = arith.constant 9.99999996E-13 : f32
      %53 = vector.broadcast %cst_33 : f32 to vector<32x1xf32>
      %54 = arith.addf %50, %53 : vector<32x1xf32>
      %55 = math.rsqrt %54 : vector<32x1xf32>
      %56 = vector.broadcast %55 : vector<32x1xf32> to vector<32x128xf32>
      %57 = arith.mulf %52, %56 : vector<32x128xf32>
      %58 = vector.broadcast %38 : vector<1x128xf32> to vector<32x128xf32>
      %59 = arith.mulf %57, %58 : vector<32x128xf32>
      %60 = vector.broadcast %39 : vector<1x128xf32> to vector<32x128xf32>
      %61 = arith.addf %59, %60 : vector<32x128xf32>
      %62 = arith.truncf %61 : vector<32x128xf32> to vector<32x128xbf16>
      %c0_34 = arith.constant 0 : index
      %c0_35 = arith.constant 0 : index
      %63 = vector.load %arg14[%c0_34, %c0_35] : memref<32x128xbf16, #tpu.memory_space<vmem>>, vector<32x128xbf16>
      tpu.vector_store %arg14[%c0_34, %c0_35], %62 {strides = array<i32>} : memref<32x128xbf16, #tpu.memory_space<vmem>>, vector<32x128xbf16>,
    } else {
    }
    return
  }
  func.func @transform_0(%arg0: i32, %arg1: i32) -> (i32, i32) {
    %c0_i32 = arith.constant 0 : i32
    %c0_i32_0 = arith.constant 0 : i32
    return %arg0, %c0_i32 : i32, i32
  }
  func.func @transform_1(%arg0: i32, %arg1: i32) -> (i32, i32) {
    %c0_i32 = arith.constant 0 : i32
    %c0_i32_0 = arith.constant 0 : i32
    return %arg0, %c0_i32 : i32, i32
  }
  func.func @transform_2(%arg0: i32, %arg1: i32) -> (i32, i32) {
    %c0_i32 = arith.constant 0 : i32
    %c0_i32_0 = arith.constant 0 : i32
    %c0_i32_1 = arith.constant 0 : i32
    return %c0_i32, %c0_i32_0 : i32, i32
  }
  func.func @transform_3(%arg0: i32, %arg1: i32) -> (i32, i32) {
    %c0_i32 = arith.constant 0 : i32
    %c0_i32_0 = arith.constant 0 : i32
    %c0_i32_1 = arith.constant 0 : i32
    return %c0_i32, %c0_i32_0 : i32, i32
  }
  func.func @transform_4(%arg0: i32, %arg1: i32) -> (i32, i32) {
    %c0_i32 = arith.constant 0 : i32
    %c0_i32_0 = arith.constant 0 : i32
    %c0_i32_1 = arith.constant 0 : i32
    return %c0_i32, %c0_i32_0 : i32, i32
  }
  func.func @transform_5(%arg0: i32, %arg1: i32) -> (i32, i32) {
    %c0_i32 = arith.constant 0 : i32
    %c0_i32_0 = arith.constant 0 : i32
    %c0_i32_1 = arith.constant 0 : i32
    return %c0_i32, %c0_i32_0 : i32, i32
  }
  func.func @transform_6(%arg0: i32, %arg1: i32) -> (i32, i32) {
    %c0_i32 = arith.constant 0 : i32
    %c0_i32_0 = arith.constant 0 : i32
    return %c0_i32, %arg1 : i32, i32
  }
  func.func @transform_7(%arg0: i32, %arg1: i32) -> (i32, i32) {
    %c0_i32 = arith.constant 0 : i32
    %c0_i32_0 = arith.constant 0 : i32
    return %c0_i32, %arg1 : i32, i32
  }
  func.func @transform_8(%arg0: i32, %arg1: i32) -> (i32, i32) {
    %c0_i32 = arith.constant 0 : i32
    %c0_i32_0 = arith.constant 0 : i32
    return %arg1, %c0_i32 : i32, i32
  }
  func.func @transform_9(%arg0: i32, %arg1: i32) -> (i32, i32) {
    %c0_i32 = arith.constant 0 : i32
    %c0_i32_0 = arith.constant 0 : i32
    %c0_i32_1 = arith.constant 0 : i32
    return %c0_i32, %c0_i32_0 : i32, i32
  }
  func.func @transform_10(%arg0: i32, %arg1: i32) -> (i32, i32) {
    %c0_i32 = arith.constant 0 : i32
    %c0_i32_0 = arith.constant 0 : i32
    %c0_i32_1 = arith.constant 0 : i32
    return %c0_i32, %c0_i32_0 : i32, i32
  }
  func.func @transform_11(%arg0: i32, %arg1: i32) -> (i32, i32) {
    %c0_i32 = arith.constant 0 : i32
    %c0_i32_0 = arith.constant 0 : i32
    %c0_i32_1 = arith.constant 0 : i32
    return %c0_i32, %c0_i32_0 : i32, i32
  }
  func.func @transform_12(%arg0: i32, %arg1: i32) -> (i32, i32) {
    %c0_i32 = arith.constant 0 : i32
    %c0_i32_0 = arith.constant 0 : i32
    return %arg0, %c0_i32 : i32, i32
  }
}

module attributes {stable_mosaic.version = 11 : i64} {
  func.func @_block_kernel(%arg0: i32, %arg1: i32, %arg2: memref<32x128xbf16, #tpu.memory_space<vmem>>, %arg3: memref<32x128xbf16, #tpu.memory_space<vmem>>, %arg4: memref<128x128xbf16, #tpu.memory_space<vmem>>, %arg5: memref<1x128xf32, #tpu.memory_space<vmem>>, %arg6: memref<1x128xf32, #tpu.memory_space<vmem>>, %arg7: memref<1x128xf32, #tpu.memory_space<vmem>>, %arg8: memref<128x256xbf16, #tpu.memory_space<vmem>>, %arg9: memref<1x256xf32, #tpu.memory_space<vmem>>, %arg10: memref<256x128xbf16, #tpu.memory_space<vmem>>, %arg11: memref<1x128xf32, #tpu.memory_space<vmem>>, %arg12: memref<1x128xf32, #tpu.memory_space<vmem>>, %arg13: memref<1x128xf32, #tpu.memory_space<vmem>>, %arg14: memref<128x128xbf16, #tpu.memory_space<vmem>>, %arg15: memref<1x128xf32, #tpu.memory_space<vmem>>, %arg16: memref<128x256xbf16, #tpu.memory_space<vmem>>, %arg17: memref<1x256xf32, #tpu.memory_space<vmem>>, %arg18: memref<32x128xbf16, #tpu.memory_space<vmem>>, %arg19: memref<32x128xbf16, #tpu.memory_space<vmem>>, %arg20: memref<32x256xbf16, #tpu.memory_space<vmem>>, %arg21: memref<32x128xf32, #tpu.memory_space<vmem>>, %arg22: memref<32x128xf32, #tpu.memory_space<vmem>>) attributes {dimension_semantics = [#tpu.dimension_semantics<parallel>, #tpu.dimension_semantics<arbitrary>], iteration_bounds = array<i64: 2, 1>, scalar_prefetch = 0 : i64, scratch_operands = 2 : i64, tpu.core_type = #tpu.core_type<tc>, window_params = [{transform_indices = @transform_0, window_bounds = array<i64: 32, 128>}, {transform_indices = @transform_1, window_bounds = array<i64: 32, 128>}, {pipeline_mode = #tpu.pipeline_mode<synchronous>, transform_indices = @transform_2, window_bounds = array<i64: 128, 128>}, {pipeline_mode = #tpu.pipeline_mode<synchronous>, transform_indices = @transform_3, window_bounds = array<i64: 1, 128>}, {pipeline_mode = #tpu.pipeline_mode<synchronous>, transform_indices = @transform_4, window_bounds = array<i64: 1, 128>}, {pipeline_mode = #tpu.pipeline_mode<synchronous>, transform_indices = @transform_5, window_bounds = array<i64: 1, 128>}, {transform_indices = @transform_6, window_bounds = array<i64: 128, 256>}, {transform_indices = @transform_7, window_bounds = array<i64: 1, 256>}, {transform_indices = @transform_8, window_bounds = array<i64: 256, 128>}, {pipeline_mode = #tpu.pipeline_mode<synchronous>, transform_indices = @transform_9, window_bounds = array<i64: 1, 128>}, {pipeline_mode = #tpu.pipeline_mode<synchronous>, transform_indices = @transform_10, window_bounds = array<i64: 1, 128>}, {pipeline_mode = #tpu.pipeline_mode<synchronous>, transform_indices = @transform_11, window_bounds = array<i64: 1, 128>}, {pipeline_mode = #tpu.pipeline_mode<synchronous>, transform_indices = @transform_12, window_bounds = array<i64: 128, 128>}, {pipeline_mode = #tpu.pipeline_mode<synchronous>, transform_indices = @transform_13, window_bounds = array<i64: 1, 128>}, {pipeline_mode = #tpu.pipeline_mode<synchronous>, transform_indices = @transform_14, window_bounds = array<i64: 128, 256>}, {pipeline_mode = #tpu.pipeline_mode<synchronous>, transform_indices = @transform_15, window_bounds = array<i64: 1, 256>}, {transform_indices = @transform_16, window_bounds = array<i64: 32, 128>}, {transform_indices = @transform_17, window_bounds = array<i64: 32, 128>}, {transform_indices = @transform_18, window_bounds = array<i64: 32, 256>}]} {
    %c0_i32 = arith.constant 0 : i32
    %0 = arith.cmpi eq, %arg1, %c0_i32 : i32
    %1 = arith.extui %0 : i1 to i32
    %c0_i32_0 = arith.constant 0 : i32
    %2 = arith.cmpi ne, %1, %c0_i32_0 : i32
    scf.if %2 {
      %c0_19 = arith.constant 0 : index
      %c0_20 = arith.constant 0 : index
      %32 = vector.load %arg2[%c0_19, %c0_20] : memref<32x128xbf16, #tpu.memory_space<vmem>>, vector<32x128xbf16>
      %c0_21 = arith.constant 0 : index
      %c0_22 = arith.constant 0 : index
      %33 = vector.load %arg4[%c0_21, %c0_22] : memref<128x128xbf16, #tpu.memory_space<vmem>>, vector<128x128xbf16>
      %cst_23 = arith.constant dense<0.000000e+00> : vector<32x128xf32>
      %34 = tpu.matmul %32, %33, %cst_23 {dimension_numbers = #tpu.dot_dimension_numbers<[1], [0], [0], [1], [0, 0, 1, 1], [], []>} : vector<32x128xbf16>, vector<128x128xbf16>, vector<32x128xf32> -> vector<32x128xf32>
      %c0_24 = arith.constant 0 : index
      %c0_25 = arith.constant 0 : index
      %35 = vector.load %arg5[%c0_24, %c0_25] : memref<1x128xf32, #tpu.memory_space<vmem>>, vector<1x128xf32>
      %36 = vector.broadcast %35 : vector<1x128xf32> to vector<32x128xf32>
      %37 = arith.addf %34, %36 : vector<32x128xf32>
      %c0_26 = arith.constant 0 : index
      %c0_27 = arith.constant 0 : index
      %38 = vector.load %arg3[%c0_26, %c0_27] : memref<32x128xbf16, #tpu.memory_space<vmem>>, vector<32x128xbf16>
      %39 = arith.extf %38 : vector<32x128xbf16> to vector<32x128xf32>
      %40 = arith.addf %39, %37 : vector<32x128xf32>
      %c0_28 = arith.constant 0 : index
      %c0_29 = arith.constant 0 : index
      %41 = vector.load %arg6[%c0_28, %c0_29] : memref<1x128xf32, #tpu.memory_space<vmem>>, vector<1x128xf32>
      %c0_30 = arith.constant 0 : index
      %c0_31 = arith.constant 0 : index
      %42 = vector.load %arg7[%c0_30, %c0_31] : memref<1x128xf32, #tpu.memory_space<vmem>>, vector<1x128xf32>
      %cst_32 = arith.constant dense<0.000000e+00> : vector<32xf32>
      %43 = vector.multi_reduction <add>, %40, %cst_32 [1] : vector<32x128xf32> to vector<32xf32>
      %44 = vector.shape_cast %43 : vector<32xf32> to vector<32x1xf32>
      %cst_33 = arith.constant 1.280000e+02 : f32
      %45 = vector.broadcast %cst_33 : f32 to vector<32x1xf32>
      %46 = arith.divf %44, %45 : vector<32x1xf32>
      %47 = vector.broadcast %46 : vector<32x1xf32> to vector<32x128xf32>
      %48 = arith.subf %40, %47 : vector<32x128xf32>
      %49 = arith.mulf %48, %48 : vector<32x128xf32>
      %cst_34 = arith.constant dense<0.000000e+00> : vector<32xf32>
      %50 = vector.multi_reduction <add>, %49, %cst_34 [1] : vector<32x128xf32> to vector<32xf32>
      %51 = vector.shape_cast %50 : vector<32xf32> to vector<32x1xf32>
      %cst_35 = arith.constant 1.280000e+02 : f32
      %52 = vector.broadcast %cst_35 : f32 to vector<32x1xf32>
      %53 = arith.divf %51, %52 : vector<32x1xf32>
      %54 = vector.broadcast %46 : vector<32x1xf32> to vector<32x128xf32>
      %55 = arith.subf %40, %54 : vector<32x128xf32>
      %cst_36 = arith.constant 9.99999996E-13 : f32
      %56 = vector.broadcast %cst_36 : f32 to vector<32x1xf32>
      %57 = arith.addf %53, %56 : vector<32x1xf32>
      %58 = math.rsqrt %57 : vector<32x1xf32>
      %59 = vector.broadcast %58 : vector<32x1xf32> to vector<32x128xf32>
      %60 = arith.mulf %55, %59 : vector<32x128xf32>
      %61 = vector.broadcast %41 : vector<1x128xf32> to vector<32x128xf32>
      %62 = arith.mulf %60, %61 : vector<32x128xf32>
      %63 = vector.broadcast %42 : vector<1x128xf32> to vector<32x128xf32>
      %64 = arith.addf %62, %63 : vector<32x128xf32>
      %c0_37 = arith.constant 0 : index
      %c0_38 = arith.constant 0 : index
      %65 = vector.load %arg21[%c0_37, %c0_38] : memref<32x128xf32, #tpu.memory_space<vmem>>, vector<32x128xf32>
      tpu.vector_store %arg21[%c0_37, %c0_38], %64 {strides = array<i32>} : memref<32x128xf32, #tpu.memory_space<vmem>>, vector<32x128xf32>,
      %cst_39 = arith.constant 0.000000e+00 : f32
      %66 = vector.broadcast %cst_39 : f32 to vector<32x128xf32>
      %c0_40 = arith.constant 0 : index
      %c0_41 = arith.constant 0 : index
      %67 = vector.load %arg22[%c0_40, %c0_41] : memref<32x128xf32, #tpu.memory_space<vmem>>, vector<32x128xf32>
      tpu.vector_store %arg22[%c0_40, %c0_41], %66 {strides = array<i32>} : memref<32x128xf32, #tpu.memory_space<vmem>>, vector<32x128xf32>,
    } else {
    }
    %c0 = arith.constant 0 : index
    %c0_1 = arith.constant 0 : index
    %3 = vector.load %arg21[%c0, %c0_1] : memref<32x128xf32, #tpu.memory_space<vmem>>, vector<32x128xf32>
    %4 = arith.truncf %3 : vector<32x128xf32> to vector<32x128xbf16>
    %c0_2 = arith.constant 0 : index
    %c0_3 = arith.constant 0 : index
    %5 = vector.load %arg8[%c0_2, %c0_3] : memref<128x256xbf16, #tpu.memory_space<vmem>>, vector<128x256xbf16>
    %cst = arith.constant dense<0.000000e+00> : vector<32x256xf32>
    %6 = tpu.matmul %4, %5, %cst {dimension_numbers = #tpu.dot_dimension_numbers<[1], [0], [0], [1], [0, 0, 1, 1], [], []>} : vector<32x128xbf16>, vector<128x256xbf16>, vector<32x256xf32> -> vector<32x256xf32>
    %c0_4 = arith.constant 0 : index
    %c0_5 = arith.constant 0 : index
    %7 = vector.load %arg9[%c0_4, %c0_5] : memref<1x256xf32, #tpu.memory_space<vmem>>, vector<1x256xf32>
    %8 = vector.broadcast %7 : vector<1x256xf32> to vector<32x256xf32>
    %9 = arith.addf %6, %8 : vector<32x256xf32>
    %10 = arith.mulf %9, %9 : vector<32x256xf32>
    %11 = arith.mulf %9, %10 : vector<32x256xf32>
    %cst_6 = arith.constant 4.471500e-02 : f32
    %12 = vector.broadcast %cst_6 : f32 to vector<32x256xf32>
    %13 = arith.mulf %12, %11 : vector<32x256xf32>
    %14 = arith.addf %9, %13 : vector<32x256xf32>
    %cst_7 = arith.constant 0.797884583 : f32
    %15 = vector.broadcast %cst_7 : f32 to vector<32x256xf32>
    %16 = arith.mulf %15, %14 : vector<32x256xf32>
    %17 = math.tanh %16 : vector<32x256xf32>
    %cst_8 = arith.constant 1.000000e+00 : f32
    %18 = vector.broadcast %cst_8 : f32 to vector<32x256xf32>
    %19 = arith.addf %18, %17 : vector<32x256xf32>
    %cst_9 = arith.constant 5.000000e-01 : f32
    %20 = vector.broadcast %cst_9 : f32 to vector<32x256xf32>
    %21 = arith.mulf %20, %19 : vector<32x256xf32>
    %22 = arith.mulf %9, %21 : vector<32x256xf32>
    %c0_10 = arith.constant 0 : index
    %c0_11 = arith.constant 0 : index
    %23 = vector.load %arg22[%c0_10, %c0_11] : memref<32x128xf32, #tpu.memory_space<vmem>>, vector<32x128xf32>
    %24 = arith.truncf %22 : vector<32x256xf32> to vector<32x256xbf16>
    %c0_12 = arith.constant 0 : index
    %c0_13 = arith.constant 0 : index
    %25 = vector.load %arg10[%c0_12, %c0_13] : memref<256x128xbf16, #tpu.memory_space<vmem>>, vector<256x128xbf16>
    %cst_14 = arith.constant dense<0.000000e+00> : vector<32x128xf32>
    %26 = tpu.matmul %24, %25, %cst_14 {dimension_numbers = #tpu.dot_dimension_numbers<[1], [0], [0], [1], [0, 0, 1, 1], [], []>} : vector<32x256xbf16>, vector<256x128xbf16>, vector<32x128xf32> -> vector<32x128xf32>
    %27 = arith.addf %23, %26 : vector<32x128xf32>
    %c0_15 = arith.constant 0 : index
    %c0_16 = arith.constant 0 : index
    %28 = vector.load %arg22[%c0_15, %c0_16] : memref<32x128xf32, #tpu.memory_space<vmem>>, vector<32x128xf32>
    tpu.vector_store %arg22[%c0_15, %c0_16], %27 {strides = array<i32>} : memref<32x128xf32, #tpu.memory_space<vmem>>, vector<32x128xf32>,
    %c0_i32_17 = arith.constant 0 : i32
    %29 = arith.cmpi eq, %arg1, %c0_i32_17 : i32
    %30 = arith.extui %29 : i1 to i32
    %c0_i32_18 = arith.constant 0 : i32
    %31 = arith.cmpi ne, %30, %c0_i32_18 : i32
    scf.if %31 {
      %c0_19 = arith.constant 0 : index
      %c0_20 = arith.constant 0 : index
      %32 = vector.load %arg21[%c0_19, %c0_20] : memref<32x128xf32, #tpu.memory_space<vmem>>, vector<32x128xf32>
      %c0_21 = arith.constant 0 : index
      %c0_22 = arith.constant 0 : index
      %33 = vector.load %arg22[%c0_21, %c0_22] : memref<32x128xf32, #tpu.memory_space<vmem>>, vector<32x128xf32>
      %34 = arith.addf %32, %33 : vector<32x128xf32>
      %c0_23 = arith.constant 0 : index
      %c0_24 = arith.constant 0 : index
      %35 = vector.load %arg11[%c0_23, %c0_24] : memref<1x128xf32, #tpu.memory_space<vmem>>, vector<1x128xf32>
      %36 = vector.broadcast %35 : vector<1x128xf32> to vector<32x128xf32>
      %37 = arith.addf %34, %36 : vector<32x128xf32>
      %c0_25 = arith.constant 0 : index
      %c0_26 = arith.constant 0 : index
      %38 = vector.load %arg12[%c0_25, %c0_26] : memref<1x128xf32, #tpu.memory_space<vmem>>, vector<1x128xf32>
      %c0_27 = arith.constant 0 : index
      %c0_28 = arith.constant 0 : index
      %39 = vector.load %arg13[%c0_27, %c0_28] : memref<1x128xf32, #tpu.memory_space<vmem>>, vector<1x128xf32>
      %cst_29 = arith.constant dense<0.000000e+00> : vector<32xf32>
      %40 = vector.multi_reduction <add>, %37, %cst_29 [1] : vector<32x128xf32> to vector<32xf32>
      %41 = vector.shape_cast %40 : vector<32xf32> to vector<32x1xf32>
      %cst_30 = arith.constant 1.280000e+02 : f32
      %42 = vector.broadcast %cst_30 : f32 to vector<32x1xf32>
      %43 = arith.divf %41, %42 : vector<32x1xf32>
      %44 = vector.broadcast %43 : vector<32x1xf32> to vector<32x128xf32>
      %45 = arith.subf %37, %44 : vector<32x128xf32>
      %46 = arith.mulf %45, %45 : vector<32x128xf32>
      %cst_31 = arith.constant dense<0.000000e+00> : vector<32xf32>
      %47 = vector.multi_reduction <add>, %46, %cst_31 [1] : vector<32x128xf32> to vector<32xf32>
      %48 = vector.shape_cast %47 : vector<32xf32> to vector<32x1xf32>
      %cst_32 = arith.constant 1.280000e+02 : f32
      %49 = vector.broadcast %cst_32 : f32 to vector<32x1xf32>
      %50 = arith.divf %48, %49 : vector<32x1xf32>
      %51 = vector.broadcast %43 : vector<32x1xf32> to vector<32x128xf32>
      %52 = arith.subf %37, %51 : vector<32x128xf32>
      %cst_33 = arith.constant 9.99999996E-13 : f32
      %53 = vector.broadcast %cst_33 : f32 to vector<32x1xf32>
      %54 = arith.addf %50, %53 : vector<32x1xf32>
      %55 = math.rsqrt %54 : vector<32x1xf32>
      %56 = vector.broadcast %55 : vector<32x1xf32> to vector<32x128xf32>
      %57 = arith.mulf %52, %56 : vector<32x128xf32>
      %58 = vector.broadcast %38 : vector<1x128xf32> to vector<32x128xf32>
      %59 = arith.mulf %57, %58 : vector<32x128xf32>
      %60 = vector.broadcast %39 : vector<1x128xf32> to vector<32x128xf32>
      %61 = arith.addf %59, %60 : vector<32x128xf32>
      %62 = arith.truncf %61 : vector<32x128xf32> to vector<32x128xbf16>
      %c0_34 = arith.constant 0 : index
      %c0_35 = arith.constant 0 : index
      %63 = vector.load %arg18[%c0_34, %c0_35] : memref<32x128xbf16, #tpu.memory_space<vmem>>, vector<32x128xbf16>
      tpu.vector_store %arg18[%c0_34, %c0_35], %62 {strides = array<i32>} : memref<32x128xbf16, #tpu.memory_space<vmem>>, vector<32x128xbf16>,
      %64 = arith.truncf %61 : vector<32x128xf32> to vector<32x128xbf16>
      %c0_36 = arith.constant 0 : index
      %c0_37 = arith.constant 0 : index
      %65 = vector.load %arg14[%c0_36, %c0_37] : memref<128x128xbf16, #tpu.memory_space<vmem>>, vector<128x128xbf16>
      %cst_38 = arith.constant dense<0.000000e+00> : vector<32x128xf32>
      %66 = tpu.matmul %64, %65, %cst_38 {dimension_numbers = #tpu.dot_dimension_numbers<[1], [0], [0], [1], [0, 0, 1, 1], [], []>} : vector<32x128xbf16>, vector<128x128xbf16>, vector<32x128xf32> -> vector<32x128xf32>
      %c0_39 = arith.constant 0 : index
      %c0_40 = arith.constant 0 : index
      %67 = vector.load %arg15[%c0_39, %c0_40] : memref<1x128xf32, #tpu.memory_space<vmem>>, vector<1x128xf32>
      %68 = vector.broadcast %67 : vector<1x128xf32> to vector<32x128xf32>
      %69 = arith.addf %66, %68 : vector<32x128xf32>
      %70 = arith.truncf %69 : vector<32x128xf32> to vector<32x128xbf16>
      %c0_41 = arith.constant 0 : index
      %c0_42 = arith.constant 0 : index
      %71 = vector.load %arg19[%c0_41, %c0_42] : memref<32x128xbf16, #tpu.memory_space<vmem>>, vector<32x128xbf16>
      tpu.vector_store %arg19[%c0_41, %c0_42], %70 {strides = array<i32>} : memref<32x128xbf16, #tpu.memory_space<vmem>>, vector<32x128xbf16>,
      %c0_43 = arith.constant 0 : index
      %c0_44 = arith.constant 0 : index
      %72 = vector.load %arg16[%c0_43, %c0_44] : memref<128x256xbf16, #tpu.memory_space<vmem>>, vector<128x256xbf16>
      %cst_45 = arith.constant dense<0.000000e+00> : vector<32x256xf32>
      %73 = tpu.matmul %64, %72, %cst_45 {dimension_numbers = #tpu.dot_dimension_numbers<[1], [0], [0], [1], [0, 0, 1, 1], [], []>} : vector<32x128xbf16>, vector<128x256xbf16>, vector<32x256xf32> -> vector<32x256xf32>
      %c0_46 = arith.constant 0 : index
      %c0_47 = arith.constant 0 : index
      %74 = vector.load %arg17[%c0_46, %c0_47] : memref<1x256xf32, #tpu.memory_space<vmem>>, vector<1x256xf32>
      %75 = vector.broadcast %74 : vector<1x256xf32> to vector<32x256xf32>
      %76 = arith.addf %73, %75 : vector<32x256xf32>
      %77 = arith.truncf %76 : vector<32x256xf32> to vector<32x256xbf16>
      %c0_48 = arith.constant 0 : index
      %c0_49 = arith.constant 0 : index
      %78 = vector.load %arg20[%c0_48, %c0_49] : memref<32x256xbf16, #tpu.memory_space<vmem>>, vector<32x256xbf16>
      tpu.vector_store %arg20[%c0_48, %c0_49], %77 {strides = array<i32>} : memref<32x256xbf16, #tpu.memory_space<vmem>>, vector<32x256xbf16>,
    } else {
    }
    return
  }
  func.func @transform_0(%arg0: i32, %arg1: i32) -> (i32, i32) {
    %c0_i32 = arith.constant 0 : i32
    %c0_i32_0 = arith.constant 0 : i32
    return %arg0, %c0_i32 : i32, i32
  }
  func.func @transform_1(%arg0: i32, %arg1: i32) -> (i32, i32) {
    %c0_i32 = arith.constant 0 : i32
    %c0_i32_0 = arith.constant 0 : i32
    return %arg0, %c0_i32 : i32, i32
  }
  func.func @transform_2(%arg0: i32, %arg1: i32) -> (i32, i32) {
    %c0_i32 = arith.constant 0 : i32
    %c0_i32_0 = arith.constant 0 : i32
    %c0_i32_1 = arith.constant 0 : i32
    return %c0_i32, %c0_i32_0 : i32, i32
  }
  func.func @transform_3(%arg0: i32, %arg1: i32) -> (i32, i32) {
    %c0_i32 = arith.constant 0 : i32
    %c0_i32_0 = arith.constant 0 : i32
    %c0_i32_1 = arith.constant 0 : i32
    return %c0_i32, %c0_i32_0 : i32, i32
  }
  func.func @transform_4(%arg0: i32, %arg1: i32) -> (i32, i32) {
    %c0_i32 = arith.constant 0 : i32
    %c0_i32_0 = arith.constant 0 : i32
    %c0_i32_1 = arith.constant 0 : i32
    return %c0_i32, %c0_i32_0 : i32, i32
  }
  func.func @transform_5(%arg0: i32, %arg1: i32) -> (i32, i32) {
    %c0_i32 = arith.constant 0 : i32
    %c0_i32_0 = arith.constant 0 : i32
    %c0_i32_1 = arith.constant 0 : i32
    return %c0_i32, %c0_i32_0 : i32, i32
  }
  func.func @transform_6(%arg0: i32, %arg1: i32) -> (i32, i32) {
    %c0_i32 = arith.constant 0 : i32
    %c0_i32_0 = arith.constant 0 : i32
    return %c0_i32, %arg1 : i32, i32
  }
  func.func @transform_7(%arg0: i32, %arg1: i32) -> (i32, i32) {
    %c0_i32 = arith.constant 0 : i32
    %c0_i32_0 = arith.constant 0 : i32
    return %c0_i32, %arg1 : i32, i32
  }
  func.func @transform_8(%arg0: i32, %arg1: i32) -> (i32, i32) {
    %c0_i32 = arith.constant 0 : i32
    %c0_i32_0 = arith.constant 0 : i32
    return %arg1, %c0_i32 : i32, i32
  }
  func.func @transform_9(%arg0: i32, %arg1: i32) -> (i32, i32) {
    %c0_i32 = arith.constant 0 : i32
    %c0_i32_0 = arith.constant 0 : i32
    %c0_i32_1 = arith.constant 0 : i32
    return %c0_i32, %c0_i32_0 : i32, i32
  }
  func.func @transform_10(%arg0: i32, %arg1: i32) -> (i32, i32) {
    %c0_i32 = arith.constant 0 : i32
    %c0_i32_0 = arith.constant 0 : i32
    %c0_i32_1 = arith.constant 0 : i32
    return %c0_i32, %c0_i32_0 : i32, i32
  }
  func.func @transform_11(%arg0: i32, %arg1: i32) -> (i32, i32) {
    %c0_i32 = arith.constant 0 : i32
    %c0_i32_0 = arith.constant 0 : i32
    %c0_i32_1 = arith.constant 0 : i32
    return %c0_i32, %c0_i32_0 : i32, i32
  }
  func.func @transform_12(%arg0: i32, %arg1: i32) -> (i32, i32) {
    %c0_i32 = arith.constant 0 : i32
    %c0_i32_0 = arith.constant 0 : i32
    %c0_i32_1 = arith.constant 0 : i32
    return %c0_i32, %c0_i32_0 : i32, i32
  }
  func.func @transform_13(%arg0: i32, %arg1: i32) -> (i32, i32) {
    %c0_i32 = arith.constant 0 : i32
    %c0_i32_0 = arith.constant 0 : i32
    %c0_i32_1 = arith.constant 0 : i32
    return %c0_i32, %c0_i32_0 : i32, i32
  }
  func.func @transform_14(%arg0: i32, %arg1: i32) -> (i32, i32) {
    %c0_i32 = arith.constant 0 : i32
    %c0_i32_0 = arith.constant 0 : i32
    %c0_i32_1 = arith.constant 0 : i32
    return %c0_i32, %c0_i32_0 : i32, i32
  }
  func.func @transform_15(%arg0: i32, %arg1: i32) -> (i32, i32) {
    %c0_i32 = arith.constant 0 : i32
    %c0_i32_0 = arith.constant 0 : i32
    %c0_i32_1 = arith.constant 0 : i32
    return %c0_i32, %c0_i32_0 : i32, i32
  }
  func.func @transform_16(%arg0: i32, %arg1: i32) -> (i32, i32) {
    %c0_i32 = arith.constant 0 : i32
    %c0_i32_0 = arith.constant 0 : i32
    return %arg0, %c0_i32 : i32, i32
  }
  func.func @transform_17(%arg0: i32, %arg1: i32) -> (i32, i32) {
    %c0_i32 = arith.constant 0 : i32
    %c0_i32_0 = arith.constant 0 : i32
    return %arg0, %c0_i32 : i32, i32
  }
  func.func @transform_18(%arg0: i32, %arg1: i32) -> (i32, i32) {
    %c0_i32 = arith.constant 0 : i32
    %c0_i32_0 = arith.constant 0 : i32
    return %arg0, %c0_i32 : i32, i32
  }
}

module attributes {stable_mosaic.version = 11 : i64} {
  func.func @_pool_kernel(%arg0: i32, %arg1: memref<8x8x128xbf16, #tpu.memory_space<vmem>>, %arg2: memref<8x8xf32, #tpu.memory_space<vmem>>, %arg3: memref<8x128xf32, #tpu.memory_space<vmem>>) attributes {dimension_semantics = [#tpu.dimension_semantics<parallel>], iteration_bounds = array<i64: 1>, scalar_prefetch = 0 : i64, scratch_operands = 0 : i64, tpu.core_type = #tpu.core_type<tc>, window_params = [{transform_indices = @transform_0, window_bounds = array<i64: 8, 8, 128>}, {transform_indices = @transform_1, window_bounds = array<i64: 8, 8>}, {transform_indices = @transform_2, window_bounds = array<i64: 8, 128>}]} {
    %c0 = arith.constant 0 : index
    %c0_0 = arith.constant 0 : index
    %c0_1 = arith.constant 0 : index
    %0 = vector.load %arg1[%c0, %c0_0, %c0_1] : memref<8x8x128xbf16, #tpu.memory_space<vmem>>, vector<8x8x128xbf16>
    %1 = arith.extf %0 : vector<8x8x128xbf16> to vector<8x8x128xf32>
    %c0_2 = arith.constant 0 : index
    %c0_3 = arith.constant 0 : index
    %2 = vector.load %arg2[%c0_2, %c0_3] : memref<8x8xf32, #tpu.memory_space<vmem>>, vector<8x8xf32>
    %3 = vector.shape_cast %2 : vector<8x8xf32> to vector<8x8x1xf32>
    %4 = vector.broadcast %3 : vector<8x8x1xf32> to vector<8x8x128xf32>
    %5 = arith.mulf %1, %4 : vector<8x8x128xf32>
    %cst = arith.constant dense<0.000000e+00> : vector<8x128xf32>
    %6 = vector.multi_reduction <add>, %5, %cst [1] : vector<8x8x128xf32> to vector<8x128xf32>
    %cst_4 = arith.constant dense<0.000000e+00> : vector<8xf32>
    %7 = vector.multi_reduction <add>, %2, %cst_4 [1] : vector<8x8xf32> to vector<8xf32>
    %8 = vector.shape_cast %7 : vector<8xf32> to vector<8x1xf32>
    %cst_5 = arith.constant 9.99999971E-10 : f32
    %9 = vector.broadcast %cst_5 : f32 to vector<8x1xf32>
    %10 = arith.maximumf %8, %9 : vector<8x1xf32>
    %11 = vector.broadcast %10 : vector<8x1xf32> to vector<8x128xf32>
    %12 = arith.divf %6, %11 : vector<8x128xf32>
    %c0_6 = arith.constant 0 : index
    %c0_7 = arith.constant 0 : index
    %13 = vector.load %arg3[%c0_6, %c0_7] : memref<8x128xf32, #tpu.memory_space<vmem>>, vector<8x128xf32>
    tpu.vector_store %arg3[%c0_6, %c0_7], %12 {strides = array<i32>} : memref<8x128xf32, #tpu.memory_space<vmem>>, vector<8x128xf32>,
    return
  }
  func.func @transform_0(%arg0: i32) -> (i32, i32, i32) {
    %c0_i32 = arith.constant 0 : i32
    %c0_i32_0 = arith.constant 0 : i32
    %c0_i32_1 = arith.constant 0 : i32
    return %arg0, %c0_i32, %c0_i32_0 : i32, i32, i32
  }
  func.func @transform_1(%arg0: i32) -> (i32, i32) {
    %c0_i32 = arith.constant 0 : i32
    %c0_i32_0 = arith.constant 0 : i32
    return %arg0, %c0_i32 : i32, i32
  }
  func.func @transform_2(%arg0: i32) -> (i32, i32) {
    %c0_i32 = arith.constant 0 : i32
    %c0_i32_0 = arith.constant 0 : i32
    return %arg0, %c0_i32 : i32, i32
  }
}

module attributes {stable_mosaic.version = 11 : i64} {
  func.func @_score_loss_kernel(%arg0: i32, %arg1: memref<2x128xf32, #tpu.memory_space<vmem>>, %arg2: memref<2x128xf32, #tpu.memory_space<vmem>>, %arg3: memref<2x128xf32, #tpu.memory_space<vmem>>, %arg4: memref<2x128xf32, #tpu.memory_space<vmem>>, %arg5: memref<2x1xf32, #tpu.memory_space<vmem>>, %arg6: memref<2x1xf32, #tpu.memory_space<vmem>>, %arg7: memref<1x1xf32, #tpu.memory_space<vmem>>) attributes {dimension_semantics = [#tpu.dimension_semantics<arbitrary>], iteration_bounds = array<i64: 1>, scalar_prefetch = 0 : i64, scratch_operands = 0 : i64, tpu.core_type = #tpu.core_type<tc>, window_params = [{pipeline_mode = #tpu.pipeline_mode<synchronous>, transform_indices = @transform_0, window_bounds = array<i64: 2, 128>}, {pipeline_mode = #tpu.pipeline_mode<synchronous>, transform_indices = @transform_1, window_bounds = array<i64: 2, 128>}, {pipeline_mode = #tpu.pipeline_mode<synchronous>, transform_indices = @transform_2, window_bounds = array<i64: 2, 128>}, {pipeline_mode = #tpu.pipeline_mode<synchronous>, transform_indices = @transform_3, window_bounds = array<i64: 2, 128>}, {pipeline_mode = #tpu.pipeline_mode<synchronous>, transform_indices = @transform_4, window_bounds = array<i64: 2, 1>}, {pipeline_mode = #tpu.pipeline_mode<synchronous>, transform_indices = @transform_5, window_bounds = array<i64: 2, 1>}, {pipeline_mode = #tpu.pipeline_mode<synchronous>, transform_indices = @transform_6, window_bounds = array<i64: 1, 1>}]} {
    %c0 = arith.constant 0 : index
    %c0_0 = arith.constant 0 : index
    %0 = vector.load %arg1[%c0, %c0_0] : memref<2x128xf32, #tpu.memory_space<vmem>>, vector<2x128xf32>
    %c0_1 = arith.constant 0 : index
    %c0_2 = arith.constant 0 : index
    %1 = vector.load %arg2[%c0_1, %c0_2] : memref<2x128xf32, #tpu.memory_space<vmem>>, vector<2x128xf32>
    %2 = arith.mulf %0, %1 : vector<2x128xf32>
    %cst = arith.constant dense<0.000000e+00> : vector<2xf32>
    %3 = vector.multi_reduction <add>, %2, %cst [1] : vector<2x128xf32> to vector<2xf32>
    %4 = vector.shape_cast %3 : vector<2xf32> to vector<2x1xf32>
    %5 = arith.mulf %0, %0 : vector<2x128xf32>
    %cst_3 = arith.constant dense<0.000000e+00> : vector<2xf32>
    %6 = vector.multi_reduction <add>, %5, %cst_3 [1] : vector<2x128xf32> to vector<2xf32>
    %7 = vector.shape_cast %6 : vector<2xf32> to vector<2x1xf32>
    %8 = math.sqrt %7 : vector<2x1xf32>
    %9 = arith.mulf %1, %1 : vector<2x128xf32>
    %cst_4 = arith.constant dense<0.000000e+00> : vector<2xf32>
    %10 = vector.multi_reduction <add>, %9, %cst_4 [1] : vector<2x128xf32> to vector<2xf32>
    %11 = vector.shape_cast %10 : vector<2xf32> to vector<2x1xf32>
    %12 = math.sqrt %11 : vector<2x1xf32>
    %13 = arith.mulf %8, %12 : vector<2x1xf32>
    %cst_5 = arith.constant 9.99999993E-9 : f32
    %14 = vector.broadcast %cst_5 : f32 to vector<2x1xf32>
    %15 = arith.addf %13, %14 : vector<2x1xf32>
    %16 = arith.divf %4, %15 : vector<2x1xf32>
    %17 = arith.negf %16 : vector<2x1xf32>
    %18 = math.exp %17 : vector<2x1xf32>
    %cst_6 = arith.constant 1.000000e+00 : f32
    %19 = vector.broadcast %cst_6 : f32 to vector<2x1xf32>
    %20 = arith.addf %19, %18 : vector<2x1xf32>
    %21 = arith.divf %19, %20 : vector<2x1xf32>
    %c0_7 = arith.constant 0 : index
    %c0_8 = arith.constant 0 : index
    %22 = vector.load %arg3[%c0_7, %c0_8] : memref<2x128xf32, #tpu.memory_space<vmem>>, vector<2x128xf32>
    %c0_9 = arith.constant 0 : index
    %c0_10 = arith.constant 0 : index
    %23 = vector.load %arg4[%c0_9, %c0_10] : memref<2x128xf32, #tpu.memory_space<vmem>>, vector<2x128xf32>
    %24 = arith.mulf %22, %23 : vector<2x128xf32>
    %cst_11 = arith.constant dense<0.000000e+00> : vector<2xf32>
    %25 = vector.multi_reduction <add>, %24, %cst_11 [1] : vector<2x128xf32> to vector<2xf32>
    %26 = vector.shape_cast %25 : vector<2xf32> to vector<2x1xf32>
    %27 = arith.mulf %22, %22 : vector<2x128xf32>
    %cst_12 = arith.constant dense<0.000000e+00> : vector<2xf32>
    %28 = vector.multi_reduction <add>, %27, %cst_12 [1] : vector<2x128xf32> to vector<2xf32>
    %29 = vector.shape_cast %28 : vector<2xf32> to vector<2x1xf32>
    %30 = math.sqrt %29 : vector<2x1xf32>
    %31 = arith.mulf %23, %23 : vector<2x128xf32>
    %cst_13 = arith.constant dense<0.000000e+00> : vector<2xf32>
    %32 = vector.multi_reduction <add>, %31, %cst_13 [1] : vector<2x128xf32> to vector<2xf32>
    %33 = vector.shape_cast %32 : vector<2xf32> to vector<2x1xf32>
    %34 = math.sqrt %33 : vector<2x1xf32>
    %35 = arith.mulf %30, %34 : vector<2x1xf32>
    %cst_14 = arith.constant 9.99999993E-9 : f32
    %36 = vector.broadcast %cst_14 : f32 to vector<2x1xf32>
    %37 = arith.addf %35, %36 : vector<2x1xf32>
    %38 = arith.divf %26, %37 : vector<2x1xf32>
    %39 = arith.negf %38 : vector<2x1xf32>
    %40 = math.exp %39 : vector<2x1xf32>
    %cst_15 = arith.constant 1.000000e+00 : f32
    %41 = vector.broadcast %cst_15 : f32 to vector<2x1xf32>
    %42 = arith.addf %41, %40 : vector<2x1xf32>
    %43 = arith.divf %41, %42 : vector<2x1xf32>
    %c0_16 = arith.constant 0 : index
    %c0_17 = arith.constant 0 : index
    %44 = vector.load %arg5[%c0_16, %c0_17] : memref<2x1xf32, #tpu.memory_space<vmem>>, vector<2x1xf32>
    tpu.vector_store %arg5[%c0_16, %c0_17], %21 {strides = array<i32>} : memref<2x1xf32, #tpu.memory_space<vmem>>, vector<2x1xf32>,
    %c0_18 = arith.constant 0 : index
    %c0_19 = arith.constant 0 : index
    %45 = vector.load %arg6[%c0_18, %c0_19] : memref<2x1xf32, #tpu.memory_space<vmem>>, vector<2x1xf32>
    tpu.vector_store %arg6[%c0_18, %c0_19], %43 {strides = array<i32>} : memref<2x1xf32, #tpu.memory_space<vmem>>, vector<2x1xf32>,
    %cst_20 = arith.constant 1.000000e-15 : f32
    %46 = vector.broadcast %cst_20 : f32 to vector<2x1xf32>
    %47 = arith.addf %21, %46 : vector<2x1xf32>
    %48 = math.log %47 : vector<2x1xf32>
    %49 = vector.shape_cast %48 : vector<2x1xf32> to vector<1x2x1xf32>
    %cst_21 = arith.constant dense<0.000000e+00> : vector<1xf32>
    %50 = vector.multi_reduction <add>, %49, %cst_21 [1, 2] : vector<1x2x1xf32> to vector<1xf32>
    %51 = vector.shape_cast %50 : vector<1xf32> to vector<1x1x1xf32>
    %52 = vector.extract %51[0, 0, 0] : f32 from vector<1x1x1xf32>
    %53 = vector.broadcast %52 : f32 to vector<1x1xf32>
    %cst_22 = arith.constant 2.000000e+00 : f32
    %54 = vector.broadcast %cst_22 : f32 to vector<1x1xf32>
    %55 = arith.divf %53, %54 : vector<1x1xf32>
    %cst_23 = arith.constant 0.000000e+00 : f32
    %56 = vector.broadcast %cst_23 : f32 to vector<1x1xf32>
    %57 = arith.subf %56, %55 : vector<1x1xf32>
    %cst_24 = arith.constant 1.000000e+00 : f32
    %58 = vector.broadcast %cst_24 : f32 to vector<2x1xf32>
    %59 = arith.subf %58, %43 : vector<2x1xf32>
    %cst_25 = arith.constant 1.000000e-15 : f32
    %60 = vector.broadcast %cst_25 : f32 to vector<2x1xf32>
    %61 = arith.addf %59, %60 : vector<2x1xf32>
    %62 = math.log %61 : vector<2x1xf32>
    %63 = vector.shape_cast %62 : vector<2x1xf32> to vector<1x2x1xf32>
    %cst_26 = arith.constant dense<0.000000e+00> : vector<1xf32>
    %64 = vector.multi_reduction <add>, %63, %cst_26 [1, 2] : vector<1x2x1xf32> to vector<1xf32>
    %65 = vector.shape_cast %64 : vector<1xf32> to vector<1x1x1xf32>
    %66 = vector.extract %65[0, 0, 0] : f32 from vector<1x1x1xf32>
    %67 = vector.broadcast %66 : f32 to vector<1x1xf32>
    %cst_27 = arith.constant 2.000000e+00 : f32
    %68 = vector.broadcast %cst_27 : f32 to vector<1x1xf32>
    %69 = arith.divf %67, %68 : vector<1x1xf32>
    %cst_28 = arith.constant 0.000000e+00 : f32
    %70 = vector.broadcast %cst_28 : f32 to vector<1x1xf32>
    %71 = arith.subf %70, %69 : vector<1x1xf32>
    %72 = arith.addf %57, %71 : vector<1x1xf32>
    %c0_29 = arith.constant 0 : index
    %c0_30 = arith.constant 0 : index
    %73 = vector.load %arg7[%c0_29, %c0_30] : memref<1x1xf32, #tpu.memory_space<vmem>>, vector<1x1xf32>
    tpu.vector_store %arg7[%c0_29, %c0_30], %72 {strides = array<i32>} : memref<1x1xf32, #tpu.memory_space<vmem>>, vector<1x1xf32>,
    return
  }
  func.func @transform_0(%arg0: i32) -> (i32, i32) {
    %c0_i32 = arith.constant 0 : i32
    %c0_i32_0 = arith.constant 0 : i32
    %c0_i32_1 = arith.constant 0 : i32
    return %c0_i32, %c0_i32_0 : i32, i32
  }
  func.func @transform_1(%arg0: i32) -> (i32, i32) {
    %c0_i32 = arith.constant 0 : i32
    %c0_i32_0 = arith.constant 0 : i32
    %c0_i32_1 = arith.constant 0 : i32
    return %c0_i32, %c0_i32_0 : i32, i32
  }
  func.func @transform_2(%arg0: i32) -> (i32, i32) {
    %c0_i32 = arith.constant 0 : i32
    %c0_i32_0 = arith.constant 0 : i32
    %c0_i32_1 = arith.constant 0 : i32
    return %c0_i32, %c0_i32_0 : i32, i32
  }
  func.func @transform_3(%arg0: i32) -> (i32, i32) {
    %c0_i32 = arith.constant 0 : i32
    %c0_i32_0 = arith.constant 0 : i32
    %c0_i32_1 = arith.constant 0 : i32
    return %c0_i32, %c0_i32_0 : i32, i32
  }
  func.func @transform_4(%arg0: i32) -> (i32, i32) {
    %c0_i32 = arith.constant 0 : i32
    %c0_i32_0 = arith.constant 0 : i32
    %c0_i32_1 = arith.constant 0 : i32
    return %c0_i32, %c0_i32_0 : i32, i32
  }
  func.func @transform_5(%arg0: i32) -> (i32, i32) {
    %c0_i32 = arith.constant 0 : i32
    %c0_i32_0 = arith.constant 0 : i32
    %c0_i32_1 = arith.constant 0 : i32
    return %c0_i32, %c0_i32_0 : i32, i32
  }
  func.func @transform_6(%arg0: i32) -> (i32, i32) {
    %c0_i32 = arith.constant 0 : i32
    %c0_i32_0 = arith.constant 0 : i32
    %c0_i32_1 = arith.constant 0 : i32
    return %c0_i32, %c0_i32_0 : i32, i32
  }
}

</mosaic_0001>

<llo_original>
// kernel: bert_lora_classifier_forward.7
$region0: #{bert_lora_classifier_forward.7}
  #allocation0 [shape = 'u32[]', space=smem, size = 0x4, offset = 0x4, fixed_abs, tag = 'smem constant byte address 0x4 - core index']
  #allocation1 [shape = 'u32[72,128]{1,0:T(1,128)}', space=vmem, size = 0x9000, scoped, tag = 'internal scratch']
  %s0 = inlined_call_operand.vmem [shape: f32[64,128], index: 0, kind: input, shape index: {}]
  %s1 = inlined_call_operand.vmem [shape: f32[1,128], index: 1, kind: input, shape index: {}]
  %s2 = inlined_call_operand.vmem [shape: f32[1,128], index: 2, kind: input, shape index: {}]
  %s3 = inlined_call_operand.vmem [shape: bf16[128,128], index: 3, kind: input, shape index: {}]
  %s4 = inlined_call_operand.vmem [shape: f32[1,128], index: 4, kind: input, shape index: {}]
  %s5 = inlined_call_operand.vmem [shape: bf16[128,256], index: 5, kind: input, shape index: {}]
  %s6 = inlined_call_operand.vmem [shape: f32[1,256], index: 6, kind: input, shape index: {}]
  %s7 = inlined_call_operand.vmem [shape: bf16[64,128], index: 7, kind: output, shape index: {0}]
  %s8 = inlined_call_operand.vmem [shape: bf16[64,128], index: 8, kind: output, shape index: {1}]
  %s9 = inlined_call_operand.vmem [shape: bf16[64,256], index: 9, kind: output, shape index: {2}]
  %10 = xla_tuple %s7, %s8, %s9
  %s11 = sld [smem:[#allocation0]]
  $region77: #{bert_lora_classifier_forward.7} parent=0
    _
  %s13 = ssub.s32 1, %s11
  %s14 = scalar_select 0, %s13, %s11
  loop: start=0, step=1, limit=4
  $region2: #{bert_lora_classifier_forward.7} parent=0 // loop_pre_header
    _
  $region3: #{bert_lora_classifier_forward.7} parent=0 // loop_header
    %s16 = sphi 0, %s20
    %p17 = scmp.ge.s32.totalorder %s16, 4
    %s26 = sphi 0, %s28
    %s29 = sphi 0, %s26
    %s30 = sphi 0, %s29
    %s46 = sphi 0, %s30
    %s50 = sphi 0, %s50
    %s52 = sphi 0, %s50
    %s53 = sphi 0, %s52
    %s67 = sphi 0, %s53
    %s71 = sphi 0, %s71
    %s73 = sphi 0, %s71
    %s74 = sphi 0, %s73
    %s88 = sphi 0, %s74
    %s92 = sphi 0, %s92
    %s94 = sphi 0, %s92
    %s95 = sphi 0, %s94
    %s109 = sphi 0, %s95
    %s113 = sphi 0, %s113
    %s115 = sphi 0, %s113
    %s116 = sphi 0, %s115
    %s130 = sphi 0, %s116
    %s134 = sphi 0, %s134
    %s136 = sphi 0, %s134
    %s137 = sphi 0, %s136
    %s151 = sphi 0, %s137
    %s155 = sphi 0, %s155
    %s157 = sphi 0, %s155
    %s158 = sphi 0, %s157
    %s172 = sphi 0, %s158
    %s178 = sphi 0, %s180
    %s181 = sphi 0, %s178
    %s182 = sphi 0, %s181
    %s198 = sphi 0, %s182
    %s204 = sphi 0, %s206
    %s207 = sphi 0, %s204
    %s208 = sphi 0, %s207
    %s224 = sphi 0, %s208
    %s230 = sphi 0, %s232
    %s233 = sphi 0, %s230
    %s234 = sphi 0, %s233
    %s250 = sphi 0, %s234
  $region4: #{bert_lora_classifier_forward.7} parent=0 // loop_header_branch
    %19 = sbr.rel (%p17) target = $region8
  $region5: #{bert_lora_classifier_forward.7} parent=0 // loop_body
    %s21 = ssub.s32 %s16, 1
    %s22 = ssub.s32 %s16, 2
    %s23 = sadd.s32 %s16, 1
    %s24 = ssub.s32 %s16, %s23
    %p25 = scmp.eq.s32.totalorder %s24, 0
    %s27 = sadd.s32 %s26, 1
    %s28 = scalar_select %p25, %s26, %s27
    %p31 = pneg %p25
    %p32 = scmp.eq.s32.totalorder %s16, 1
    %p33 = por %p31, %p32
    %p34 = scmp.ne.s32.totalorder %s26, %s29
    %p35 = scmp.eq.s32.totalorder %s16, 0
    %p36 = por %p34, %p35
    %p37 = scmp.ne.s32.totalorder %s26, %s29
    %p38 = scmp.eq.s32.totalorder %s21, 1
    %p39 = por %p37, %p38
    %p40 = scmp.ne.s32.totalorder %s29, %s30
    %p41 = scmp.eq.s32.totalorder %s21, 0
    %p42 = por %p40, %p41
    %p43 = scmp.ne.s32.totalorder %s29, %s30
    %p44 = scmp.eq.s32.totalorder %s22, 1
    %p45 = por %p43, %p44
    %p47 = scmp.ne.s32.totalorder %s30, %s46
    %p48 = scmp.eq.s32.totalorder %s22, 0
    %p49 = por %p47, %p48
    %s51 = sadd.s32 %s50, 1
    %p54 = scmp.eq.s32.totalorder %s16, 1
    %p55 = scmp.ne.s32.totalorder %s50, %s52
    %p56 = scmp.eq.s32.totalorder %s16, 0
    %p57 = por %p55, %p56
    %p58 = scmp.ne.s32.totalorder %s50, %s52
    %p59 = scmp.eq.s32.totalorder %s21, 1
    %p60 = por %p58, %p59
    %p61 = scmp.ne.s32.totalorder %s52, %s53
    %p62 = scmp.eq.s32.totalorder %s21, 0
    %p63 = por %p61, %p62
    %p64 = scmp.ne.s32.totalorder %s52, %s53
    %p65 = scmp.eq.s32.totalorder %s22, 1
    %p66 = por %p64, %p65
    %p68 = scmp.ne.s32.totalorder %s53, %s67
    %p69 = scmp.eq.s32.totalorder %s22, 0
    %p70 = por %p68, %p69
    %s72 = sadd.s32 %s71, 1
    %p75 = scmp.eq.s32.totalorder %s16, 1
    %p76 = scmp.ne.s32.totalorder %s71, %s73
    %p77 = scmp.eq.s32.totalorder %s16, 0
    %p78 = por %p76, %p77
    %p79 = scmp.ne.s32.totalorder %s71, %s73
    %p80 = scmp.eq.s32.totalorder %s21, 1
    %p81 = por %p79, %p80
    %p82 = scmp.ne.s32.totalorder %s73, %s74
    %p83 = scmp.eq.s32.totalorder %s21, 0
    %p84 = por %p82, %p83
    %p85 = scmp.ne.s32.totalorder %s73, %s74
    %p86 = scmp.eq.s32.totalorder %s22, 1
    %p87 = por %p85, %p86
    %p89 = scmp.ne.s32.totalorder %s74, %s88
    %p90 = scmp.eq.s32.totalorder %s22, 0
    %p91 = por %p89, %p90
    %s93 = sadd.s32 %s92, 1
    %p96 = scmp.eq.s32.totalorder %s16, 1
    %p97 = scmp.ne.s32.totalorder %s92, %s94
    %p98 = scmp.eq.s32.totalorder %s16, 0
    %p99 = por %p97, %p98
    %p100 = scmp.ne.s32.totalorder %s92, %s94
    %p101 = scmp.eq.s32.totalorder %s21, 1
    %p102 = por %p100, %p101
    %p103 = scmp.ne.s32.totalorder %s94, %s95
    %p104 = scmp.eq.s32.totalorder %s21, 0
    %p105 = por %p103, %p104
    %p106 = scmp.ne.s32.totalorder %s94, %s95
    %p107 = scmp.eq.s32.totalorder %s22, 1
    %p108 = por %p106, %p107
    %p110 = scmp.ne.s32.totalorder %s95, %s109
    %p111 = scmp.eq.s32.totalorder %s22, 0
    %p112 = por %p110, %p111
    %s114 = sadd.s32 %s113, 1
    %p117 = scmp.eq.s32.totalorder %s16, 1
    %p118 = scmp.ne.s32.totalorder %s113, %s115
    %p119 = scmp.eq.s32.totalorder %s16, 0
    %p120 = por %p118, %p119
    %p121 = scmp.ne.s32.totalorder %s113, %s115
    %p122 = scmp.eq.s32.totalorder %s21, 1
    %p123 = por %p121, %p122
    %p124 = scmp.ne.s32.totalorder %s115, %s116
    %p125 = scmp.eq.s32.totalorder %s21, 0
    %p126 = por %p124, %p125
    %p127 = scmp.ne.s32.totalorder %s115, %s116
    %p128 = scmp.eq.s32.totalorder %s22, 1
    %p129 = por %p127, %p128
    %p131 = scmp.ne.s32.totalorder %s116, %s130
    %p132 = scmp.eq.s32.totalorder %s22, 0
    %p133 = por %p131, %p132
    %s135 = sadd.s32 %s134, 1
    %p138 = scmp.eq.s32.totalorder %s16, 1
    %p139 = scmp.ne.s32.totalorder %s134, %s136
    %p140 = scmp.eq.s32.totalorder %s16, 0
    %p141 = por %p139, %p140
    %p142 = scmp.ne.s32.totalorder %s134, %s136
    %p143 = scmp.eq.s32.totalorder %s21, 1
    %p144 = por %p142, %p143
    %p145 = scmp.ne.s32.totalorder %s136, %s137
    %p146 = scmp.eq.s32.totalorder %s21, 0
    %p147 = por %p145, %p146
    %p148 = scmp.ne.s32.totalorder %s136, %s137
    %p149 = scmp.eq.s32.totalorder %s22, 1
    %p150 = por %p148, %p149
    %p152 = scmp.ne.s32.totalorder %s137, %s151
    %p153 = scmp.eq.s32.totalorder %s22, 0
    %p154 = por %p152, %p153
    %s156 = sadd.s32 %s155, 1
    %p159 = scmp.eq.s32.totalorder %s16, 1
    %p160 = scmp.ne.s32.totalorder %s155, %s157
    %p161 = scmp.eq.s32.totalorder %s16, 0
    %p162 = por %p160, %p161
    %p163 = scmp.ne.s32.totalorder %s155, %s157
    %p164 = scmp.eq.s32.totalorder %s21, 1
    %p165 = por %p163, %p164
    %p166 = scmp.ne.s32.totalorder %s157, %s158
    %p167 = scmp.eq.s32.totalorder %s21, 0
    %p168 = por %p166, %p167
    %p169 = scmp.ne.s32.totalorder %s157, %s158
    %p170 = scmp.eq.s32.totalorder %s22, 1
    %p171 = por %p169, %p170
    %p173 = scmp.ne.s32.totalorder %s158, %s172
    %p174 = scmp.eq.s32.totalorder %s22, 0
    %p175 = por %p173, %p174
    %s176 = ssub.s32 %s16, %s23
    %p177 = scmp.eq.s32.totalorder %s176, 0
    %s179 = sadd.s32 %s178, 1
    %s180 = scalar_select %p177, %s178, %s179
    %p183 = pneg %p177
    %p184 = scmp.eq.s32.totalorder %s16, 1
    %p185 = por %p183, %p184
    %p186 = scmp.ne.s32.totalorder %s178, %s181
    %p187 = scmp.eq.s32.totalorder %s16, 0
    %p188 = por %p186, %p187
    %p189 = scmp.ne.s32.totalorder %s178, %s181
    %p190 = scmp.eq.s32.totalorder %s21, 1
    %p191 = por %p189, %p190
    %p192 = scmp.ne.s32.totalorder %s181, %s182
    %p193 = scmp.eq.s32.totalorder %s21, 0
    %p194 = por %p192, %p193
    %p195 = scmp.ne.s32.totalorder %s181, %s182
    %p196 = scmp.eq.s32.totalorder %s22, 1
    %p197 = por %p195, %p196
    %p199 = scmp.ne.s32.totalorder %s182, %s198
    %p200 = scmp.eq.s32.totalorder %s22, 0
    %p201 = por %p199, %p200
    %s202 = ssub.s32 %s16, %s23
    %p203 = scmp.eq.s32.totalorder %s202, 0
    %s205 = sadd.s32 %s204, 1
    %s206 = scalar_select %p203, %s204, %s205
    %p209 = pneg %p203
    %p210 = scmp.eq.s32.totalorder %s16, 1
    %p211 = por %p209, %p210
    %p212 = scmp.ne.s32.totalorder %s204, %s207
    %p213 = scmp.eq.s32.totalorder %s16, 0
    %p214 = por %p212, %p213
    %p215 = scmp.ne.s32.totalorder %s204, %s207
    %p216 = scmp.eq.s32.totalorder %s21, 1
    %p217 = por %p215, %p216
    %p218 = scmp.ne.s32.totalorder %s207, %s208
    %p219 = scmp.eq.s32.totalorder %s21, 0
    %p220 = por %p218, %p219
    %p221 = scmp.ne.s32.totalorder %s207, %s208
    %p222 = scmp.eq.s32.totalorder %s22, 1
    %p223 = por %p221, %p222
    %p225 = scmp.ne.s32.totalorder %s208, %s224
    %p226 = scmp.eq.s32.totalorder %s22, 0
    %p227 = por %p225, %p226
    %s228 = ssub.s32 %s16, %s23
    %p229 = scmp.eq.s32.totalorder %s228, 0
    %s231 = sadd.s32 %s230, 1
    %s232 = scalar_select %p229, %s230, %s231
    %p235 = pneg %p229
    %p236 = scmp.eq.s32.totalorder %s16, 1
    %p237 = por %p235, %p236
    %p238 = scmp.ne.s32.totalorder %s230, %s233
    %p239 = scmp.eq.s32.totalorder %s16, 0
    %p240 = por %p238, %p239
    %p241 = scmp.ne.s32.totalorder %s230, %s233
    %p242 = scmp.eq.s32.totalorder %s21, 1
    %p243 = por %p241, %p242
    %p244 = scmp.ne.s32.totalorder %s233, %s234
    %p245 = scmp.eq.s32.totalorder %s21, 0
    %p246 = por %p244, %p245
    %p247 = scmp.ne.s32.totalorder %s233, %s234
    %p248 = scmp.eq.s32.totalorder %s22, 1
    %p249 = por %p247, %p248
    %p251 = scmp.ne.s32.totalorder %s234, %s250
    %p252 = scmp.eq.s32.totalorder %s22, 0
    %p253 = por %p251, %p252
    %p254 = scmp.le.s32.totalorder 1, %s16
    %p255 = scmp.lt.s32.totalorder %s16, 3
    %p256 = pnand %p254, %p255
    %p257 = pneg %p256
    // Predicated region
    $region9: #{bert_lora_classifier_forward.7} parent=5 // pred_check
      _
    $region10: #{bert_lora_classifier_forward.7} parent=5 // pred_check_branch
      %259 = sbr.rel (%p256) target = $region12
    $region11: #{bert_lora_classifier_forward.7} parent=5 // pred_region
      %s260 = ssub.s32 %s16, 1
      // Predicated region
      $region13: #{bert_lora_classifier_forward.7} parent=11 // pred_check
        %p261 = pneg %p63
      $region14: #{bert_lora_classifier_forward.7} parent=11 // pred_check_branch
        %263 = sbr.rel (%p261) target = $region16
      $region15: #{bert_lora_classifier_forward.7} parent=11 // pred_region
        _
      $region16: #{bert_lora_classifier_forward.7} parent=11 // pred_fallthru
        _
      // Predicated region
      $region17: #{bert_lora_classifier_forward.7} parent=11 // pred_check
        %p264 = pneg %p84
      $region18: #{bert_lora_classifier_forward.7} parent=11 // pred_check_branch
        %266 = sbr.rel (%p264) target = $region20
      $region19: #{bert_lora_classifier_forward.7} parent=11 // pred_region
        _
      $region20: #{bert_lora_classifier_forward.7} parent=11 // pred_fallthru
        _
      // Predicated region
      $region21: #{bert_lora_classifier_forward.7} parent=11 // pred_check
        %p267 = pneg %p105
      $region22: #{bert_lora_classifier_forward.7} parent=11 // pred_check_branch
        %269 = sbr.rel (%p267) target = $region24
      $region23: #{bert_lora_classifier_forward.7} parent=11 // pred_region
        _
      $region24: #{bert_lora_classifier_forward.7} parent=11 // pred_fallthru
        _
      // Predicated region
      $region25: #{bert_lora_classifier_forward.7} parent=11 // pred_check
        %p270 = pneg %p126
      $region26: #{bert_lora_classifier_forward.7} parent=11 // pred_check_branch
        %272 = sbr.rel (%p270) target = $region28
      $region27: #{bert_lora_classifier_forward.7} parent=11 // pred_region
        _
      $region28: #{bert_lora_classifier_forward.7} parent=11 // pred_fallthru
        _
      // Predicated region
      $region29: #{bert_lora_classifier_forward.7} parent=11 // pred_check
        %p273 = pneg %p147
      $region30: #{bert_lora_classifier_forward.7} parent=11 // pred_check_branch
        %275 = sbr.rel (%p273) target = $region32
      $region31: #{bert_lora_classifier_forward.7} parent=11 // pred_region
        _
      $region32: #{bert_lora_classifier_forward.7} parent=11 // pred_fallthru
        _
      // Predicated region
      $region33: #{bert_lora_classifier_forward.7} parent=11 // pred_check
        %p276 = pneg %p168
      $region34: #{bert_lora_classifier_forward.7} parent=11 // pred_check_branch
        %278 = sbr.rel (%p276) target = $region36
      $region35: #{bert_lora_classifier_forward.7} parent=11 // pred_region
        _
      $region36: #{bert_lora_classifier_forward.7} parent=11 // pred_fallthru
        _
    $region12: #{bert_lora_classifier_forward.7} parent=5 // pred_fallthru
      _
    %p279 = scmp.lt.s32.totalorder %s16, 2
    // Predicated region
    $region37: #{bert_lora_classifier_forward.7} parent=5 // pred_check
      %p280 = pneg %p279
    $region38: #{bert_lora_classifier_forward.7} parent=5 // pred_check_branch
      %282 = sbr.rel (%p280) target = $region40
    $region39: #{bert_lora_classifier_forward.7} parent=5 // pred_region
      // Predicated region
      $region41: #{bert_lora_classifier_forward.7} parent=39 // pred_check
        %p283 = pneg %p36
      $region42: #{bert_lora_classifier_forward.7} parent=39 // pred_check_branch
        %285 = sbr.rel (%p283) target = $region44
      $region43: #{bert_lora_classifier_forward.7} parent=39 // pred_region
        %s286 = smul.u32 4, %s16
        %p287 = scmp.lt.s32.totalorder %s286, 7
        %s288 = scalar_select %p287, %s286, 7
        %s289 = smul.addr %s288, 8
        %s290 = scalar_lea.vmem %s0, %s289
        %s291 = smul.u32 4, %s16
      $region44: #{bert_lora_classifier_forward.7} parent=39 // pred_fallthru
        _
    $region40: #{bert_lora_classifier_forward.7} parent=5 // pred_fallthru
      _
    %p292 = scmp.le.s32.totalorder 1, %s16
    %p293 = scmp.lt.s32.totalorder %s16, 3
    %p294 = pnand %p292, %p293
    %p295 = pneg %p294
    // Predicated region
    $region45: #{bert_lora_classifier_forward.7} parent=5 // pred_check
      _
    $region46: #{bert_lora_classifier_forward.7} parent=5 // pred_check_branch
      %297 = sbr.rel (%p294) target = $region48
    $region47: #{bert_lora_classifier_forward.7} parent=5 // pred_region
      %s298 = ssub.s32 %s16, 1
      %s299 = smul.u32 4, %s21
      %p300 = scmp.lt.s32.totalorder %s299, 7
      %s301 = scalar_select %p300, %s299, 7
      %s302 = smul.addr %s301, 8
      %s303 = scalar_lea.vmem %s0, %s302
      %p304 = pneg %p42
      %p305 = pneg %p39
      %p306 = pneg %p63
      %p307 = pneg %p60
      %p308 = pneg %p84
      %p309 = pneg %p81
      %p310 = pneg %p105
      %p311 = pneg %p102
      %p312 = pneg %p126
      %p313 = pneg %p123
      %p314 = pneg %p147
      %p315 = pneg %p144
      %p316 = pneg %p168
      %p317 = pneg %p165
      %p318 = pneg %p194
      %p319 = pneg %p191
      %s320 = smul.u32 4, %s21
      %p321 = scmp.lt.s32.totalorder %s320, 7
      %s322 = scalar_select %p321, %s320, 7
      %s323 = smul.addr %s322, 4
      %s324 = scalar_lea.vmem %s7, %s323
      %p325 = pneg %p220
      %p326 = pneg %p217
      %s327 = smul.u32 4, %s21
      %p328 = scmp.lt.s32.totalorder %s327, 7
      %s329 = scalar_select %p328, %s327, 7
      %s330 = smul.addr %s329, 4
      %s331 = scalar_lea.vmem %s8, %s330
      %p332 = pneg %p246
      %p333 = pneg %p243
      %s334 = smul.u32 4, %s21
      %p335 = scmp.lt.s32.totalorder %s334, 7
      %s336 = scalar_select %p335, %s334, 7
      %s337 = smul.addr %s336, 2
      %s338 = smul.addr %s337, 4
      %s339 = scalar_lea.vmem %s9, %s338
      %s340 = smul.u32 4, %s21
      %p341 = scmp.lt.s32.totalorder %s340, 7
      %s342 = scalar_select %p341, %s340, 7
      %s343 = smul.addr %s342, 8
      %s344 = scalar_lea.vmem %s0, %s343
      %s345 = smul.u32 4, %s21
      %s346 = smul.u32 4, %s21
      %p347 = scmp.lt.s32.totalorder %s346, 7
      %s348 = scalar_select %p347, %s346, 7
      %s349 = smul.addr %s348, 4
      %s350 = scalar_lea.vmem %s7, %s349
      %s351 = smul.u32 4, %s21
      %s352 = smul.u32 4, %s21
      %p353 = scmp.lt.s32.totalorder %s352, 7
      %s354 = scalar_select %p353, %s352, 7
      %s355 = smul.addr %s354, 4
      %s356 = scalar_lea.vmem %s8, %s355
      %s357 = smul.u32 4, %s21
      %s358 = smul.u32 4, %s21
      %p359 = scmp.lt.s32.totalorder %s358, 7
      %s360 = scalar_select %p359, %s358, 7
      %s361 = smul.addr %s360, 2
      %s362 = smul.addr %s361, 4
      %s363 = scalar_lea.vmem %s9, %s362
      %s364 = smul.u32 4, %s21
      %v365 = vld [vmem:[%s344] sm:$0xff]
      %v366 = vld [vmem:[%s344 + $0x8] sm:$0xff]
      %v367 = vld [vmem:[%s344 + $0x10] sm:$0xff]
      %v368 = vld [vmem:[%s344 + $0x18] sm:$0xff]
      %v369 = vld [vmem:[%s1] sm:$0x1]
      %v370 = vld [vmem:[%s2] sm:$0x1]
      %371 = vadd.xlane.f32.xlu0 %v365
      %v372 = vpop.xlane.xlu0 %371
      %373 = vadd.xlane.f32.xlu0 %v366
      %v374 = vpop.xlane.xlu0 %373
      %375 = vadd.xlane.f32.xlu0 %v367
      %v376 = vpop.xlane.xlu0 %375
      %377 = vadd.xlane.f32.xlu0 %v368
      %v378 = vpop.xlane.xlu0 %377
      %v379 = vrcp.pop 128.0
      %v380 = vmul.f32 128.0, %v379
      %v381 = vsub.f32 1.0, %v380
      %v382 = vmul.f32 %v379, %v381
      %v383 = vadd.f32 %v379, %v382
      %vm384 = vweird.f32 %v379
      %v385 = vsel %vm384, %v379, %v383
      %v386 = vmul.f32 %v372, %v385
      %v387 = vmul.f32 %v374, %v385
      %v388 = vmul.f32 %v376, %v385
      %v389 = vmul.f32 %v378, %v385
      %v390 = vsub.f32 %v365, %v386
      %v391 = vsub.f32 %v366, %v387
      %v392 = vsub.f32 %v367, %v388
      %v393 = vsub.f32 %v368, %v389
      %v394 = vmul.f32 %v390, %v390
      %v395 = vmul.f32 %v391, %v391
      %v396 = vmul.f32 %v392, %v392
      %v397 = vmul.f32 %v393, %v393
      %398 = vadd.xlane.f32.xlu0 %v394
      %v399 = vpop.xlane.xlu0 %398
      %400 = vadd.xlane.f32.xlu0 %v395
      %v401 = vpop.xlane.xlu0 %400
      %402 = vadd.xlane.f32.xlu0 %v396
      %v403 = vpop.xlane.xlu0 %402
      %404 = vadd.xlane.f32.xlu0 %v397
      %v405 = vpop.xlane.xlu0 %404
      %v406 = vmul.f32 %v399, %v385
      %v407 = vmul.f32 %v401, %v385
      %v408 = vmul.f32 %v403, %v385
      %v409 = vmul.f32 %v405, %v385
      %v410 = vadd.f32 %v406, 1e-12
      %v411 = vadd.f32 %v407, 1e-12
      %v412 = vadd.f32 %v408, 1e-12
      %v413 = vadd.f32 %v409, 1e-12
      %v414 = vrsqrt.pop %v410
      %v415 = vmul.f32 %v414, %v410
      %v416 = vmul.f32 %v415, %v414
      %v417 = vmul.f32 0.5, %v416
      %v418 = vsub.f32 1.5, %v417
      %v419 = vmul.f32 %v414, %v418
      %vm420 = vweird.f32 %v410
      %vm421 = vweird.f32 %v414
      %vm422 = vmor %vm420, %vm421
      %v423 = vsel %vm422, %v414, %v419
      %v424 = vrsqrt.pop %v411
      %v425 = vmul.f32 %v424, %v411
      %v426 = vmul.f32 %v425, %v424
      %v427 = vmul.f32 0.5, %v426
      %v428 = vsub.f32 1.5, %v427
      %v429 = vmul.f32 %v424, %v428
      %vm430 = vweird.f32 %v411
      %vm431 = vweird.f32 %v424
      %vm432 = vmor %vm430, %vm431
      %v433 = vsel %vm432, %v424, %v429
      %v434 = vrsqrt.pop %v412
      %v435 = vmul.f32 %v434, %v412
      %v436 = vmul.f32 %v435, %v434
      %v437 = vmul.f32 0.5, %v436
      %v438 = vsub.f32 1.5, %v437
      %v439 = vmul.f32 %v434, %v438
      %vm440 = vweird.f32 %v412
      %vm441 = vweird.f32 %v434
      %vm442 = vmor %vm440, %vm441
      %v443 = vsel %vm442, %v434, %v439
      %v444 = vrsqrt.pop %v413
      %v445 = vmul.f32 %v444, %v413
      %v446 = vmul.f32 %v445, %v444
      %v447 = vmul.f32 0.5, %v446
      %v448 = vsub.f32 1.5, %v447
      %v449 = vmul.f32 %v444, %v448
      %vm450 = vweird.f32 %v413
      %vm451 = vweird.f32 %v444
      %vm452 = vmor %vm450, %vm451
      %v453 = vsel %vm452, %v444, %v449
      %v454 = vmul.f32 %v390, %v423
      %v455 = vmul.f32 %v391, %v433
      %v456 = vmul.f32 %v392, %v443
      %v457 = vmul.f32 %v393, %v453
      %v459 = vperm.slane %v369, 0
      %v461 = vmul.f32 %v454, %v459
      %v462 = vmul.f32 %v455, %v459
      %v463 = vmul.f32 %v456, %v459
      %v464 = vmul.f32 %v457, %v459
      %v466 = vperm.slane %v370, 0
      %v468 = vadd.f32 %v461, %v466
      %v469 = vadd.f32 %v462, %v466
      %v470 = vadd.f32 %v463, %v466
      %v471 = vadd.f32 %v464, %v466
      %v472 = vpack.c.bf16 %v468, %v468
      %v473 = vpack.c.bf16 %v469, %v469
      %v474 = vpack.c.bf16 %v470, %v470
      %v475 = vpack.c.bf16 %v471, %v471
      %476 = vst [vmem:[%s350] sm:$0xf] %v472
      %477 = vst [vmem:[%s350 + $0x4] sm:$0xf] %v473
      %478 = vst [vmem:[%s350 + $0x8] sm:$0xf] %v474
      %479 = vst [vmem:[%s350 + $0xc] sm:$0xf] %v475
      %v480 = vld [vmem:[%s3] sm:$0xf]
      %v481 = vld [vmem:[%s3 + $0x4] sm:$0xf]
      %v482 = vld [vmem:[%s3 + $0x8] sm:$0xf]
      %v483 = vld [vmem:[%s3 + $0xc] sm:$0xf]
      %v484 = vld [vmem:[%s3 + $0x10] sm:$0xf]
      %v485 = vld [vmem:[%s3 + $0x14] sm:$0xf]
      %v486 = vld [vmem:[%s3 + $0x18] sm:$0xf]
      %v487 = vld [vmem:[%s3 + $0x1c] sm:$0xf]
      %v488 = vld [vmem:[%s3 + $0x20] sm:$0xf]
      %v489 = vld [vmem:[%s3 + $0x24] sm:$0xf]
      %v490 = vld [vmem:[%s3 + $0x28] sm:$0xf]
      %v491 = vld [vmem:[%s3 + $0x2c] sm:$0xf]
      %v492 = vld [vmem:[%s3 + $0x30] sm:$0xf]
      %v493 = vld [vmem:[%s3 + $0x34] sm:$0xf]
      %v494 = vld [vmem:[%s3 + $0x38] sm:$0xf]
      %v495 = vld [vmem:[%s3 + $0x3c] sm:$0xf]
      %v496 = vld [vmem:[%s4] sm:$0x1]
      %v498 = vperm.slane %v496, 0
      %v504 = vunpack.c.l.b16 %v472
      %v505 = vunpack.c.l.b16 %v473
      %v506 = vunpack.c.l.b16 %v474
      %v507 = vunpack.c.l.b16 %v475
      %v508 = vpack.c.b16 %v505, %v504
      %v509 = vpack.c.b16 %v507, %v506
      %v528 = vunpack.c.l.b16 %v480
      %v529 = vunpack.c.l.b16 %v481
      %v530 = vunpack.c.l.b16 %v482
      %v531 = vunpack.c.l.b16 %v483
      %v532 = vunpack.c.l.b16 %v484
      %v533 = vunpack.c.l.b16 %v485
      %v534 = vunpack.c.l.b16 %v486
      %v535 = vunpack.c.l.b16 %v487
      %v536 = vunpack.c.l.b16 %v488
      %v537 = vunpack.c.l.b16 %v489
      %v538 = vunpack.c.l.b16 %v490
      %v539 = vunpack.c.l.b16 %v491
      %v540 = vunpack.c.l.b16 %v492
      %v541 = vunpack.c.l.b16 %v493
      %v542 = vunpack.c.l.b16 %v494
      %v543 = vunpack.c.l.b16 %v495
      %v544 = vpack.c.b16 %v529, %v528
      %v545 = vpack.c.b16 %v531, %v530
      %v546 = vpack.c.b16 %v533, %v532
      %v547 = vpack.c.b16 %v535, %v534
      %v548 = vpack.c.b16 %v537, %v536
      %v549 = vpack.c.b16 %v539, %v538
      %v550 = vpack.c.b16 %v541, %v540
      %v551 = vpack.c.b16 %v543, %v542
      %560 = vmatpush.bf16.msra.mxu0 %v551
      %561 = vmatpush.bf16.msra.mxu0 %v550
      %562 = vmatpush.bf16.msra.mxu0 %v549
      %563 = vmatpush.bf16.msra.mxu0 %v548
      %564 = vmatpush.bf16.msra.mxu0 %v547
      %565 = vmatpush.bf16.msra.mxu0 %v546
      %566 = vmatpush.bf16.msra.mxu0 %v545
      %567 = vmatpush.bf16.msra.mxu0 %v544
      %568 = vmatmul.bf16.gmra.mxu0 %v508
      %v569 = vpop.f32.mrf.mxu0
      %v570 = vadd.f32 %v498, %v569
      %v571 = vpop.f32.mrf.mxu0
      %v572 = vadd.f32 %v498, %v571
      %573 = vmatmul.bf16.gmra.mxu0 %v509
      %v574 = vpop.f32.mrf.mxu0
      %v575 = vadd.f32 %v498, %v574
      %v576 = vpop.f32.mrf.mxu0
      %v577 = vadd.f32 %v498, %v576
      %578 = vdwg.mxu0
      %v579 = vld [vmem:[%s5] sm:$0xff]
      %v580 = vld [vmem:[%s5 + $0x8] sm:$0xff]
      %v581 = vld [vmem:[%s5 + $0x10] sm:$0xff]
      %v582 = vld [vmem:[%s5 + $0x18] sm:$0xff]
      %v583 = vld [vmem:[%s5 + $0x20] sm:$0xff]
      %v584 = vld [vmem:[%s5 + $0x28] sm:$0xff]
      %v585 = vld [vmem:[%s5 + $0x30] sm:$0xff]
      %v586 = vld [vmem:[%s5 + $0x38] sm:$0xff]
      %v587 = vld [vmem:[%s5 + $0x40] sm:$0xff]
      %v588 = vld [vmem:[%s5 + $0x48] sm:$0xff]
      %v589 = vld [vmem:[%s5 + $0x50] sm:$0xff]
      %v590 = vld [vmem:[%s5 + $0x58] sm:$0xff]
      %v591 = vld [vmem:[%s5 + $0x60] sm:$0xff]
      %v592 = vld [vmem:[%s5 + $0x68] sm:$0xff]
      %v593 = vld [vmem:[%s5 + $0x70] sm:$0xff]
      %v594 = vld [vmem:[%s5 + $0x78] sm:$0xff]
      %v595 = vld [vmem:[%s6] sm:$0x3]
      %v597 = vperm.slane %v595, 0
      %v598 = vperm.slane %v595, 1
      %v617 = vunpack.c.l.b16 %v579
      %v618 = vunpack.c.h.b16 %v579
      %v619 = vunpack.c.l.b16 %v580
      %v620 = vunpack.c.h.b16 %v580
      %v621 = vunpack.c.l.b16 %v581
      %v622 = vunpack.c.h.b16 %v581
      %v623 = vunpack.c.l.b16 %v582
      %v624 = vunpack.c.h.b16 %v582
      %v625 = vunpack.c.l.b16 %v583
      %v626 = vunpack.c.h.b16 %v583
      %v627 = vunpack.c.l.b16 %v584
      %v628 = vunpack.c.h.b16 %v584
      %v629 = vunpack.c.l.b16 %v585
      %v630 = vunpack.c.h.b16 %v585
      %v631 = vunpack.c.l.b16 %v586
      %v632 = vunpack.c.h.b16 %v586
      %v633 = vunpack.c.l.b16 %v587
      %v634 = vunpack.c.h.b16 %v587
      %v635 = vunpack.c.l.b16 %v588
      %v636 = vunpack.c.h.b16 %v588
      %v637 = vunpack.c.l.b16 %v589
      %v638 = vunpack.c.h.b16 %v589
      %v639 = vunpack.c.l.b16 %v590
      %v640 = vunpack.c.h.b16 %v590
      %v641 = vunpack.c.l.b16 %v591
      %v642 = vunpack.c.h.b16 %v591
      %v643 = vunpack.c.l.b16 %v592
      %v644 = vunpack.c.h.b16 %v592
      %v645 = vunpack.c.l.b16 %v593
      %v646 = vunpack.c.h.b16 %v593
      %v647 = vunpack.c.l.b16 %v594
      %v648 = vunpack.c.h.b16 %v594
      %v649 = vpack.c.b16 %v619, %v617
      %v650 = vpack.c.b16 %v620, %v618
      %v651 = vpack.c.b16 %v623, %v621
      %v652 = vpack.c.b16 %v624, %v622
      %v653 = vpack.c.b16 %v627, %v625
      %v654 = vpack.c.b16 %v628, %v626
      %v655 = vpack.c.b16 %v631, %v629
      %v656 = vpack.c.b16 %v632, %v630
      %v657 = vpack.c.b16 %v635, %v633
      %v658 = vpack.c.b16 %v636, %v634
      %v659 = vpack.c.b16 %v639, %v637
      %v660 = vpack.c.b16 %v640, %v638
      %v661 = vpack.c.b16 %v643, %v641
      %v662 = vpack.c.b16 %v644, %v642
      %v663 = vpack.c.b16 %v647, %v645
      %v664 = vpack.c.b16 %v648, %v646
      %681 = vmatpush.bf16.msra.mxu0 %v663
      %682 = vmatpush.bf16.msra.mxu0 %v661
      %683 = vmatpush.bf16.msra.mxu0 %v659
      %684 = vmatpush.bf16.msra.mxu0 %v657
      %685 = vmatpush.bf16.msra.mxu0 %v655
      %686 = vmatpush.bf16.msra.mxu0 %v653
      %687 = vmatpush.bf16.msra.mxu0 %v651
      %688 = vmatpush.bf16.msra.mxu0 %v649
      %689 = vmatmul.bf16.gmra.mxu0 %v508
      %v690 = vpop.f32.mrf.mxu0
      %v691 = vadd.f32 %v597, %v690
      %v692 = vpop.f32.mrf.mxu0
      %v693 = vadd.f32 %v597, %v692
      %694 = vmatmul.bf16.gmra.mxu0 %v509
      %v695 = vpop.f32.mrf.mxu0
      %v696 = vadd.f32 %v597, %v695
      %v697 = vpop.f32.mrf.mxu0
      %v698 = vadd.f32 %v597, %v697
      %699 = vdwg.mxu0
      %700 = vmatpush.bf16.msra.mxu0 %v664
      %701 = vmatpush.bf16.msra.mxu0 %v662
      %702 = vmatpush.bf16.msra.mxu0 %v660
      %703 = vmatpush.bf16.msra.mxu0 %v658
      %704 = vmatpush.bf16.msra.mxu0 %v656
      %705 = vmatpush.bf16.msra.mxu0 %v654
      %706 = vmatpush.bf16.msra.mxu0 %v652
      %707 = vmatpush.bf16.msra.mxu0 %v650
      %708 = vmatmul.bf16.gmra.mxu0 %v508
      %v709 = vpop.f32.mrf.mxu0
      %v710 = vadd.f32 %v598, %v709
      %v711 = vpop.f32.mrf.mxu0
      %v712 = vadd.f32 %v598, %v711
      %713 = vmatmul.bf16.gmra.mxu0 %v509
      %v714 = vpop.f32.mrf.mxu0
      %v715 = vadd.f32 %v598, %v714
      %v716 = vpop.f32.mrf.mxu0
      %v717 = vadd.f32 %v598, %v716
      %718 = vdwg.mxu0
      %v719 = vpack.c.bf16 %v570, %v570
      %v720 = vpack.c.bf16 %v572, %v572
      %v721 = vpack.c.bf16 %v575, %v575
      %v722 = vpack.c.bf16 %v577, %v577
      %723 = vst [vmem:[%s356] sm:$0xf] %v719
      %724 = vst [vmem:[%s356 + $0x4] sm:$0xf] %v720
      %725 = vst [vmem:[%s356 + $0x8] sm:$0xf] %v721
      %726 = vst [vmem:[%s356 + $0xc] sm:$0xf] %v722
      %v727 = vpack.c.bf16 %v710, %v691
      %v728 = vpack.c.bf16 %v712, %v693
      %v729 = vpack.c.bf16 %v715, %v696
      %v730 = vpack.c.bf16 %v717, %v698
      %731 = vst [vmem:[%s363] sm:$0xff] %v727
      %732 = vst [vmem:[%s363 + $0x8] sm:$0xff] %v728
      %733 = vst [vmem:[%s363 + $0x10] sm:$0xff] %v729
      %734 = vst [vmem:[%s363 + $0x18] sm:$0xff] %v730
      %s735 = smul.u32 4, %s21
      %p736 = scmp.lt.s32.totalorder %s735, 7
      %s737 = scalar_select %p736, %s735, 7
      %s738 = smul.addr %s737, 4
      %s739 = scalar_lea.vmem %s7, %s738
      %s740 = smul.u32 4, %s21
      %p741 = scmp.lt.s32.totalorder %s740, 7
      %s742 = scalar_select %p741, %s740, 7
      %s743 = smul.addr %s742, 4
      %s744 = scalar_lea.vmem %s8, %s743
      %s745 = smul.u32 4, %s21
      %p746 = scmp.lt.s32.totalorder %s745, 7
      %s747 = scalar_select %p746, %s745, 7
      %s748 = smul.addr %s747, 2
      %s749 = smul.addr %s748, 4
      %s750 = scalar_lea.vmem %s9, %s749
      // Predicated region
      $region49: #{bert_lora_classifier_forward.7} parent=47 // pred_check
        %p751 = pneg %p191
      $region50: #{bert_lora_classifier_forward.7} parent=47 // pred_check_branch
        %753 = sbr.rel (%p751) target = $region52
      $region51: #{bert_lora_classifier_forward.7} parent=47 // pred_region
        %s754 = smul.u32 4, %s21
      $region52: #{bert_lora_classifier_forward.7} parent=47 // pred_fallthru
        _
      // Predicated region
      $region53: #{bert_lora_classifier_forward.7} parent=47 // pred_check
        %p755 = pneg %p217
      $region54: #{bert_lora_classifier_forward.7} parent=47 // pred_check_branch
        %757 = sbr.rel (%p755) target = $region56
      $region55: #{bert_lora_classifier_forward.7} parent=47 // pred_region
        %s758 = smul.u32 4, %s21
      $region56: #{bert_lora_classifier_forward.7} parent=47 // pred_fallthru
        _
      // Predicated region
      $region57: #{bert_lora_classifier_forward.7} parent=47 // pred_check
        %p759 = pneg %p243
      $region58: #{bert_lora_classifier_forward.7} parent=47 // pred_check_branch
        %761 = sbr.rel (%p759) target = $region60
      $region59: #{bert_lora_classifier_forward.7} parent=47 // pred_region
        %s762 = smul.u32 4, %s21
      $region60: #{bert_lora_classifier_forward.7} parent=47 // pred_fallthru
        _
    $region48: #{bert_lora_classifier_forward.7} parent=5 // pred_fallthru
      _
    %p763 = scmp.le.s32.totalorder 2, %s16
    // Predicated region
    $region61: #{bert_lora_classifier_forward.7} parent=5 // pred_check
      %p764 = pneg %p763
    $region62: #{bert_lora_classifier_forward.7} parent=5 // pred_check_branch
      %766 = sbr.rel (%p764) target = $region64
    $region63: #{bert_lora_classifier_forward.7} parent=5 // pred_region
      %s767 = ssub.s32 %s16, 2
      // Predicated region
      $region65: #{bert_lora_classifier_forward.7} parent=63 // pred_check
        %p768 = pneg %p197
      $region66: #{bert_lora_classifier_forward.7} parent=63 // pred_check_branch
        %770 = sbr.rel (%p768) target = $region68
      $region67: #{bert_lora_classifier_forward.7} parent=63 // pred_region
        %s771 = smul.u32 4, %s22
        %p772 = scmp.lt.s32.totalorder %s771, 7
        %s773 = scalar_select %p772, %s771, 7
        %s774 = smul.addr %s773, 4
        %s775 = scalar_lea.vmem %s7, %s774
      $region68: #{bert_lora_classifier_forward.7} parent=63 // pred_fallthru
        _
      // Predicated region
      $region69: #{bert_lora_classifier_forward.7} parent=63 // pred_check
        %p776 = pneg %p223
      $region70: #{bert_lora_classifier_forward.7} parent=63 // pred_check_branch
        %778 = sbr.rel (%p776) target = $region72
      $region71: #{bert_lora_classifier_forward.7} parent=63 // pred_region
        %s779 = smul.u32 4, %s22
        %p780 = scmp.lt.s32.totalorder %s779, 7
        %s781 = scalar_select %p780, %s779, 7
        %s782 = smul.addr %s781, 4
        %s783 = scalar_lea.vmem %s8, %s782
      $region72: #{bert_lora_classifier_forward.7} parent=63 // pred_fallthru
        _
      // Predicated region
      $region73: #{bert_lora_classifier_forward.7} parent=63 // pred_check
        %p784 = pneg %p249
      $region74: #{bert_lora_classifier_forward.7} parent=63 // pred_check_branch
        %786 = sbr.rel (%p784) target = $region76
      $region75: #{bert_lora_classifier_forward.7} parent=63 // pred_region
        %s787 = smul.u32 4, %s22
        %p788 = scmp.lt.s32.totalorder %s787, 7
        %s789 = scalar_select %p788, %s787, 7
        %s790 = smul.addr %s789, 2
        %s791 = smul.addr %s790, 4
        %s792 = scalar_lea.vmem %s9, %s791
      $region76: #{bert_lora_classifier_forward.7} parent=63 // pred_fallthru
        _
    $region64: #{bert_lora_classifier_forward.7} parent=5 // pred_fallthru
      _
  $region6: #{bert_lora_classifier_forward.7} parent=0 // loop_footer
    %s20 = sadd.s32 1, %s16
  $region7: #{bert_lora_classifier_forward.7} parent=0 // loop_footer_branch
    %15 = sbr.rel target = $region3
  $region8: #{bert_lora_classifier_forward.7} parent=0 // loop_exit
    _

// kernel: bert_lora_classifier_forward.8
$region0: #{bert_lora_classifier_forward.8}
  #allocation0 [shape = 'u32[]', space=smem, size = 0x4, offset = 0x4, fixed_abs, tag = 'smem constant byte address 0x4 - core index']
  #allocation1 [shape = 'u32[72,128]{1,0:T(1,128)}', space=vmem, size = 0x9000, scoped, tag = 'internal scratch']
  %s0 = inlined_call_operand.vmem [shape: bf16[8,8,128], index: 0, kind: input, shape index: {}]
  %s1 = inlined_call_operand.vmem [shape: bf16[8,8,256], index: 1, kind: input, shape index: {}]
  %s2 = inlined_call_operand.vmem [shape: f32[8,1,8], index: 2, kind: input, shape index: {}]
  %s3 = inlined_call_operand.vmem [shape: bf16[8,8,128], index: 3, kind: output, shape index: {}]
  %s4 = sld [smem:[#allocation0]]
  $region45: #{bert_lora_classifier_forward.8} parent=0
    _
  %s6 = ssub.s32 1, %s4
  %s7 = scalar_select 0, %s6, %s4
  loop: start=0, step=1, limit=10
  $region2: #{bert_lora_classifier_forward.8} parent=0 // loop_pre_header
    _
  $region3: #{bert_lora_classifier_forward.8} parent=0 // loop_header
    %s9 = sphi 0, %s13
    %p10 = scmp.ge.s32.totalorder %s9, 10
    %s16 = sphi 0, %s28
    %s17 = sphi 0, %s24
    %s18 = sphi 0, %s16
    %s19 = sphi 0, %s17
    %s20 = sphi 0, %s18
    %s21 = sphi 0, %s19
    %s33 = sphi 0, %s35
    %s36 = sphi 0, %s33
    %s37 = sphi 0, %s36
    %s53 = sphi 0, %s37
    %s59 = sphi 0, %s61
    %s62 = sphi 0, %s59
    %s63 = sphi 0, %s62
    %s79 = sphi 0, %s63
    %s85 = sphi 0, %s87
    %s88 = sphi 0, %s85
    %s89 = sphi 0, %s88
    %s105 = sphi 0, %s89
    %s113 = sphi 0, %s115
    %s116 = sphi 0, %s113
    %s117 = sphi 0, %s116
    %s133 = sphi 0, %s117
  $region4: #{bert_lora_classifier_forward.8} parent=0 // loop_header_branch
    %12 = sbr.rel (%p10) target = $region8
  $region5: #{bert_lora_classifier_forward.8} parent=0 // loop_body
    %s14 = ssub.s32 %s9, 1
    %s15 = ssub.s32 %s9, 2
    %s22 = sadd.s32 1, %s17
    %p23 = scmp.ge.s32.totalorder %s22, 1
    %s24 = scalar_select %p23, 0, %s22
    %s25 = sadd.s32 1, %s16
    %s26 = scalar_select %p23, %s25, %s16
    %p27 = scmp.ge.s32.totalorder %s26, 8
    %s28 = scalar_select %p27, 0, %s26
    %s29 = ssub.s32 %s16, %s28
    %s30 = ssub.s32 %s17, %s24
    %s31 = sor.u32 %s29, %s30
    %p32 = scmp.eq.s32.totalorder %s31, 0
    %s34 = sadd.s32 %s33, 1
    %s35 = scalar_select %p32, %s33, %s34
    %p38 = pneg %p32
    %p39 = scmp.eq.s32.totalorder %s9, 7
    %p40 = por %p38, %p39
    %p41 = scmp.ne.s32.totalorder %s33, %s36
    %p42 = scmp.eq.s32.totalorder %s9, 0
    %p43 = por %p41, %p42
    %p44 = scmp.ne.s32.totalorder %s33, %s36
    %p45 = scmp.eq.s32.totalorder %s14, 7
    %p46 = por %p44, %p45
    %p47 = scmp.ne.s32.totalorder %s36, %s37
    %p48 = scmp.eq.s32.totalorder %s14, 0
    %p49 = por %p47, %p48
    %p50 = scmp.ne.s32.totalorder %s36, %s37
    %p51 = scmp.eq.s32.totalorder %s15, 7
    %p52 = por %p50, %p51
    %p54 = scmp.ne.s32.totalorder %s37, %s53
    %p55 = scmp.eq.s32.totalorder %s15, 0
    %p56 = por %p54, %p55
    %s57 = ssub.s32 %s16, %s28
    %p58 = scmp.eq.s32.totalorder %s57, 0
    %s60 = sadd.s32 %s59, 1
    %s61 = scalar_select %p58, %s59, %s60
    %p64 = pneg %p58
    %p65 = scmp.eq.s32.totalorder %s9, 7
    %p66 = por %p64, %p65
    %p67 = scmp.ne.s32.totalorder %s59, %s62
    %p68 = scmp.eq.s32.totalorder %s9, 0
    %p69 = por %p67, %p68
    %p70 = scmp.ne.s32.totalorder %s59, %s62
    %p71 = scmp.eq.s32.totalorder %s14, 7
    %p72 = por %p70, %p71
    %p73 = scmp.ne.s32.totalorder %s62, %s63
    %p74 = scmp.eq.s32.totalorder %s14, 0
    %p75 = por %p73, %p74
    %p76 = scmp.ne.s32.totalorder %s62, %s63
    %p77 = scmp.eq.s32.totalorder %s15, 7
    %p78 = por %p76, %p77
    %p80 = scmp.ne.s32.totalorder %s63, %s79
    %p81 = scmp.eq.s32.totalorder %s15, 0
    %p82 = por %p80, %p81
    %s83 = ssub.s32 %s16, %s28
    %p84 = scmp.eq.s32.totalorder %s83, 0
    %s86 = sadd.s32 %s85, 1
    %s87 = scalar_select %p84, %s85, %s86
    %p90 = pneg %p84
    %p91 = scmp.eq.s32.totalorder %s9, 7
    %p92 = por %p90, %p91
    %p93 = scmp.ne.s32.totalorder %s85, %s88
    %p94 = scmp.eq.s32.totalorder %s9, 0
    %p95 = por %p93, %p94
    %p96 = scmp.ne.s32.totalorder %s85, %s88
    %p97 = scmp.eq.s32.totalorder %s14, 7
    %p98 = por %p96, %p97
    %p99 = scmp.ne.s32.totalorder %s88, %s89
    %p100 = scmp.eq.s32.totalorder %s14, 0
    %p101 = por %p99, %p100
    %p102 = scmp.ne.s32.totalorder %s88, %s89
    %p103 = scmp.eq.s32.totalorder %s15, 7
    %p104 = por %p102, %p103
    %p106 = scmp.ne.s32.totalorder %s89, %s105
    %p107 = scmp.eq.s32.totalorder %s15, 0
    %p108 = por %p106, %p107
    %s109 = ssub.s32 %s16, %s28
    %s110 = ssub.s32 %s17, %s24
    %s111 = sor.u32 %s109, %s110
    %p112 = scmp.eq.s32.totalorder %s111, 0
    %s114 = sadd.s32 %s113, 1
    %s115 = scalar_select %p112, %s113, %s114
    %p118 = pneg %p112
    %p119 = scmp.eq.s32.totalorder %s9, 7
    %p120 = por %p118, %p119
    %p121 = scmp.ne.s32.totalorder %s113, %s116
    %p122 = scmp.eq.s32.totalorder %s9, 0
    %p123 = por %p121, %p122
    %p124 = scmp.ne.s32.totalorder %s113, %s116
    %p125 = scmp.eq.s32.totalorder %s14, 7
    %p126 = por %p124, %p125
    %p127 = scmp.ne.s32.totalorder %s116, %s117
    %p128 = scmp.eq.s32.totalorder %s14, 0
    %p129 = por %p127, %p128
    %p130 = scmp.ne.s32.totalorder %s116, %s117
    %p131 = scmp.eq.s32.totalorder %s15, 7
    %p132 = por %p130, %p131
    %p134 = scmp.ne.s32.totalorder %s117, %s133
    %p135 = scmp.eq.s32.totalorder %s15, 0
    %p136 = por %p134, %p135
    %p137 = scmp.le.s32.totalorder 1, %s9
    %p138 = scmp.lt.s32.totalorder %s9, 9
    %p139 = pnand %p137, %p138
    %p140 = pneg %p139
    // Predicated region
    $region9: #{bert_lora_classifier_forward.8} parent=5 // pred_check
      _
    $region10: #{bert_lora_classifier_forward.8} parent=5 // pred_check_branch
      %142 = sbr.rel (%p139) target = $region12
    $region11: #{bert_lora_classifier_forward.8} parent=5 // pred_region
      %s143 = ssub.s32 %s9, 1
    $region12: #{bert_lora_classifier_forward.8} parent=5 // pred_fallthru
      _
    %p144 = scmp.lt.s32.totalorder %s9, 8
    // Predicated region
    $region13: #{bert_lora_classifier_forward.8} parent=5 // pred_check
      %p145 = pneg %p144
    $region14: #{bert_lora_classifier_forward.8} parent=5 // pred_check_branch
      %147 = sbr.rel (%p145) target = $region16
    $region15: #{bert_lora_classifier_forward.8} parent=5 // pred_region
      // Predicated region
      $region17: #{bert_lora_classifier_forward.8} parent=15 // pred_check
        %p148 = pneg %p43
      $region18: #{bert_lora_classifier_forward.8} parent=15 // pred_check_branch
        %150 = sbr.rel (%p148) target = $region20
      $region19: #{bert_lora_classifier_forward.8} parent=15 // pred_region
        %p151 = scmp.lt.s32.totalorder %s16, 7
        %s152 = scalar_select %p151, %s16, 7
        %p153 = scmp.lt.s32.totalorder %s17, 0
        %s154 = scalar_select %p153, %s17, 0
        %s155 = sadd.s32 %s154, %s152
        %s156 = smul.addr %s155, 4
        %s157 = scalar_lea.vmem %s0, %s156
      $region20: #{bert_lora_classifier_forward.8} parent=15 // pred_fallthru
        _
      // Predicated region
      $region21: #{bert_lora_classifier_forward.8} parent=15 // pred_check
        %p158 = pneg %p69
      $region22: #{bert_lora_classifier_forward.8} parent=15 // pred_check_branch
        %160 = sbr.rel (%p158) target = $region24
      $region23: #{bert_lora_classifier_forward.8} parent=15 // pred_region
        %p161 = scmp.lt.s32.totalorder %s16, 7
        %s162 = scalar_select %p161, %s16, 7
        %s163 = smul.addr %s162, 2
        %s164 = smul.addr %s163, 4
        %s165 = scalar_lea.vmem %s1, %s164
      $region24: #{bert_lora_classifier_forward.8} parent=15 // pred_fallthru
        _
      // Predicated region
      $region25: #{bert_lora_classifier_forward.8} parent=15 // pred_check
        %p166 = pneg %p95
      $region26: #{bert_lora_classifier_forward.8} parent=15 // pred_check_branch
        %168 = sbr.rel (%p166) target = $region28
      $region27: #{bert_lora_classifier_forward.8} parent=15 // pred_region
        %p169 = scmp.lt.s32.totalorder %s16, 7
        %s170 = scalar_select %p169, %s16, 7
        %s171 = scalar_lea.vmem %s2, %s170
      $region28: #{bert_lora_classifier_forward.8} parent=15 // pred_fallthru
        _
    $region16: #{bert_lora_classifier_forward.8} parent=5 // pred_fallthru
      _
    %p172 = scmp.le.s32.totalorder 1, %s9
    %p173 = scmp.lt.s32.totalorder %s9, 9
    %p174 = pnand %p172, %p173
    %p175 = pneg %p174
    // Predicated region
    $region29: #{bert_lora_classifier_forward.8} parent=5 // pred_check
      _
    $region30: #{bert_lora_classifier_forward.8} parent=5 // pred_check_branch
      %177 = sbr.rel (%p174) target = $region32
    $region31: #{bert_lora_classifier_forward.8} parent=5 // pred_region
      %s178 = ssub.s32 %s9, 1
      %p179 = scmp.lt.s32.totalorder %s18, 7
      %s180 = scalar_select %p179, %s18, 7
      %p181 = scmp.lt.s32.totalorder %s19, 0
      %s182 = scalar_select %p181, %s19, 0
      %s183 = sadd.s32 %s182, %s180
      %s184 = smul.addr %s183, 4
      %s185 = scalar_lea.vmem %s0, %s184
      %p186 = pneg %p49
      %p187 = pneg %p46
      %p188 = scmp.lt.s32.totalorder %s18, 7
      %s189 = scalar_select %p188, %s18, 7
      %s190 = smul.addr %s189, 2
      %s191 = smul.addr %s190, 4
      %s192 = scalar_lea.vmem %s1, %s191
      %p193 = pneg %p75
      %p194 = pneg %p72
      %p195 = scmp.lt.s32.totalorder %s18, 7
      %s196 = scalar_select %p195, %s18, 7
      %s197 = scalar_lea.vmem %s2, %s196
      %p198 = pneg %p101
      %p199 = pneg %p98
      %p200 = pneg %p129
      %p201 = pneg %p126
      %p202 = scmp.lt.s32.totalorder %s18, 7
      %s203 = scalar_select %p202, %s18, 7
      %p204 = scmp.lt.s32.totalorder %s19, 0
      %s205 = scalar_select %p204, %s19, 0
      %s206 = sadd.s32 %s205, %s203
      %s207 = smul.addr %s206, 4
      %s208 = scalar_lea.vmem %s3, %s207
      %p209 = scmp.lt.s32.totalorder %s18, 7
      %s210 = scalar_select %p209, %s18, 7
      %p211 = scmp.lt.s32.totalorder %s19, 0
      %s212 = scalar_select %p211, %s19, 0
      %s213 = sadd.s32 %s212, %s210
      %s214 = smul.addr %s213, 4
      %s215 = scalar_lea.vmem %s0, %s214
      %p216 = scmp.lt.s32.totalorder %s18, 7
      %s217 = scalar_select %p216, %s18, 7
      %s218 = smul.addr %s217, 2
      %s219 = smul.addr %s218, 4
      %s220 = scalar_lea.vmem %s1, %s219
      %p221 = scmp.lt.s32.totalorder %s18, 7
      %s222 = scalar_select %p221, %s18, 7
      %s223 = scalar_lea.vmem %s2, %s222
      %p224 = scmp.lt.s32.totalorder %s18, 7
      %s225 = scalar_select %p224, %s18, 7
      %p226 = scmp.lt.s32.totalorder %s19, 0
      %s227 = scalar_select %p226, %s19, 0
      %s228 = sadd.s32 %s227, %s225
      %s229 = smul.addr %s228, 4
      %s230 = scalar_lea.vmem %s3, %s229
      %v232 = vld [vmem:[%s215] sm:$0xf]
      %v233 = vld [vmem:[%s220] sm:$0xff]
      %235 = vrot.lane.b32.xlu0 %v232, 64
      %v236 = vpop.permute.xlu0 %235
      %v239 = vpack.i.b16 %v236, %v232
      %v240 = vshrl.u32 %v232, 16
      %v241 = vshrl.u32 %v236, 16
      %v242 = vpack.i.b16 %v241, %v240
      %v245 = vunpack.c.l.s4 1983009808
      %v246 = vunpack.c.0.s8 %v245
      %v247 = vperm.slane %v239, %v246
      %v248 = vrot.slane %v247, 4
      %vm249 = vcmask 1047556
      %v250 = vsel %vm249, 0, %v248
      %v252 = vunpack.c.l.s4 1934713408
      %v253 = vunpack.c.0.s8 %v252
      %v254 = vperm.slane %v247, %v253
      %v256 = vunpack.c.l.s4 1934713408
      %v257 = vunpack.c.0.s8 %v256
      %v258 = vperm.slane %v250, %v257
      %v259 = vrot.slane %v254, 4
      %v260 = vsel %vm249, 0, %v259
      %v261 = vrot.slane %v258, 4
      %v262 = vsel %vm249, 0, %v261
      %v265 = vunpack.c.l.s4 1983009808
      %v266 = vunpack.c.0.s8 %v265
      %v267 = vperm.slane %v242, %v266
      %v268 = vrot.slane %v267, 4
      %v269 = vsel %vm249, 0, %v268
      %v271 = vunpack.c.l.s4 1934713408
      %v272 = vunpack.c.0.s8 %v271
      %v273 = vperm.slane %v267, %v272
      %v275 = vunpack.c.l.s4 1934713408
      %v276 = vunpack.c.0.s8 %v275
      %v277 = vperm.slane %v269, %v276
      %v278 = vrot.slane %v273, 4
      %v279 = vsel %vm249, 0, %v278
      %v280 = vrot.slane %v277, 4
      %v281 = vsel %vm249, 0, %v280
      %v282 = vsel %vm249, %v261, %v254
      %v284 = vunpack.c.l.s4 1983009808
      %v285 = vunpack.c.0.s8 %v284
      %v286 = vperm.slane %v282, %v285
      %v287 = vrot.slane %v262, 4
      %v288 = vsel %vm249, %v287, %v260
      %v290 = vunpack.c.l.s4 1983009808
      %v291 = vunpack.c.0.s8 %v290
      %v292 = vperm.slane %v288, %v291
      %v293 = vrot.slane %v292, 4
      %v294 = vsel %vm249, %v293, %v286
      %v296 = vunpack.c.l.s4 1934713408
      %v297 = vunpack.c.0.s8 %v296
      %v298 = vperm.slane %v294, %v297
      %v299 = vsel %vm249, %v280, %v273
      %v301 = vunpack.c.l.s4 1983009808
      %v302 = vunpack.c.0.s8 %v301
      %v303 = vperm.slane %v299, %v302
      %v304 = vrot.slane %v281, 4
      %v305 = vsel %vm249, %v304, %v279
      %v307 = vunpack.c.l.s4 1983009808
      %v308 = vunpack.c.0.s8 %v307
      %v309 = vperm.slane %v305, %v308
      %v310 = vrot.slane %v309, 4
      %v311 = vsel %vm249, %v310, %v303
      %v313 = vunpack.c.l.s4 1934713408
      %v314 = vunpack.c.0.s8 %v313
      %v315 = vperm.slane %v311, %v314
      %v318 = vpack.i.b16 %v315, %v298
      %v319 = vshrl.u32 %v298, 16
      %v320 = vshrl.u32 %v315, 16
      %v321 = vpack.i.b16 %v320, %v319
      %323 = vrot.lane.b32.xlu0 %v233, 64
      %v324 = vpop.permute.xlu0 %323
      %v327 = vpack.i.b16 %v324, %v233
      %v328 = vshrl.u32 %v233, 16
      %v329 = vshrl.u32 %v324, 16
      %v330 = vpack.i.b16 %v329, %v328
      %v333 = vunpack.c.l.s4 1983009808
      %v334 = vunpack.c.0.s8 %v333
      %v335 = vperm.slane %v327, %v334
      %v336 = vrot.slane %v335, 4
      %v337 = vsel %vm249, 0, %v336
      %v339 = vunpack.c.l.s4 1934713408
      %v340 = vunpack.c.0.s8 %v339
      %v341 = vperm.slane %v335, %v340
      %v343 = vunpack.c.l.s4 1934713408
      %v344 = vunpack.c.0.s8 %v343
      %v345 = vperm.slane %v337, %v344
      %v346 = vrot.slane %v341, 4
      %v347 = vsel %vm249, 0, %v346
      %v348 = vrot.slane %v345, 4
      %v349 = vsel %vm249, 0, %v348
      %v352 = vunpack.c.l.s4 1983009808
      %v353 = vunpack.c.0.s8 %v352
      %v354 = vperm.slane %v330, %v353
      %v355 = vrot.slane %v354, 4
      %v356 = vsel %vm249, 0, %v355
      %v358 = vunpack.c.l.s4 1934713408
      %v359 = vunpack.c.0.s8 %v358
      %v360 = vperm.slane %v354, %v359
      %v362 = vunpack.c.l.s4 1934713408
      %v363 = vunpack.c.0.s8 %v362
      %v364 = vperm.slane %v356, %v363
      %v365 = vrot.slane %v360, 4
      %v366 = vsel %vm249, 0, %v365
      %v367 = vrot.slane %v364, 4
      %v368 = vsel %vm249, 0, %v367
      %v369 = vsel %vm249, %v348, %v341
      %v371 = vunpack.c.l.s4 1983009808
      %v372 = vunpack.c.0.s8 %v371
      %v373 = vperm.slane %v369, %v372
      %v374 = vrot.slane %v349, 4
      %v375 = vsel %vm249, %v374, %v347
      %v377 = vunpack.c.l.s4 1983009808
      %v378 = vunpack.c.0.s8 %v377
      %v379 = vperm.slane %v375, %v378
      %v380 = vrot.slane %v379, 4
      %v381 = vsel %vm249, %v380, %v373
      %v383 = vunpack.c.l.s4 1934713408
      %v384 = vunpack.c.0.s8 %v383
      %v385 = vperm.slane %v381, %v384
      %v386 = vsel %vm249, %v367, %v360
      %v388 = vunpack.c.l.s4 1983009808
      %v389 = vunpack.c.0.s8 %v388
      %v390 = vperm.slane %v386, %v389
      %v391 = vrot.slane %v368, 4
      %v392 = vsel %vm249, %v391, %v366
      %v394 = vunpack.c.l.s4 1983009808
      %v395 = vunpack.c.0.s8 %v394
      %v396 = vperm.slane %v392, %v395
      %v397 = vrot.slane %v396, 4
      %v398 = vsel %vm249, %v397, %v390
      %v400 = vunpack.c.l.s4 1934713408
      %v401 = vunpack.c.0.s8 %v400
      %v402 = vperm.slane %v398, %v401
      %v405 = vpack.i.b16 %v402, %v385
      %v406 = vshrl.u32 %v385, 16
      %v407 = vshrl.u32 %v402, 16
      %v408 = vpack.i.b16 %v407, %v406
      %v409 = vrot.slane %v233, 4
      %v410 = vrot.slane %v324, 4
      %v413 = vpack.i.b16 %v410, %v409
      %v414 = vshrl.u32 %v409, 16
      %v415 = vshrl.u32 %v410, 16
      %v416 = vpack.i.b16 %v415, %v414
      %v419 = vunpack.c.l.s4 1983009808
      %v420 = vunpack.c.0.s8 %v419
      %v421 = vperm.slane %v413, %v420
      %v422 = vrot.slane %v421, 4
      %v423 = vsel %vm249, 0, %v422
      %v425 = vunpack.c.l.s4 1934713408
      %v426 = vunpack.c.0.s8 %v425
      %v427 = vperm.slane %v421, %v426
      %v429 = vunpack.c.l.s4 1934713408
      %v430 = vunpack.c.0.s8 %v429
      %v431 = vperm.slane %v423, %v430
      %v432 = vrot.slane %v427, 4
      %v433 = vsel %vm249, 0, %v432
      %v434 = vrot.slane %v431, 4
      %v435 = vsel %vm249, 0, %v434
      %v438 = vunpack.c.l.s4 1983009808
      %v439 = vunpack.c.0.s8 %v438
      %v440 = vperm.slane %v416, %v439
      %v441 = vrot.slane %v440, 4
      %v442 = vsel %vm249, 0, %v441
      %v444 = vunpack.c.l.s4 1934713408
      %v445 = vunpack.c.0.s8 %v444
      %v446 = vperm.slane %v440, %v445
      %v448 = vunpack.c.l.s4 1934713408
      %v449 = vunpack.c.0.s8 %v448
      %v450 = vperm.slane %v442, %v449
      %v451 = vrot.slane %v446, 4
      %v452 = vsel %vm249, 0, %v451
      %v453 = vrot.slane %v450, 4
      %v454 = vsel %vm249, 0, %v453
      %v455 = vsel %vm249, %v434, %v427
      %v457 = vunpack.c.l.s4 1983009808
      %v458 = vunpack.c.0.s8 %v457
      %v459 = vperm.slane %v455, %v458
      %v460 = vrot.slane %v435, 4
      %v461 = vsel %vm249, %v460, %v433
      %v463 = vunpack.c.l.s4 1983009808
      %v464 = vunpack.c.0.s8 %v463
      %v465 = vperm.slane %v461, %v464
      %v466 = vrot.slane %v465, 4
      %v467 = vsel %vm249, %v466, %v459
      %v469 = vunpack.c.l.s4 1934713408
      %v470 = vunpack.c.0.s8 %v469
      %v471 = vperm.slane %v467, %v470
      %v472 = vsel %vm249, %v453, %v446
      %v474 = vunpack.c.l.s4 1983009808
      %v475 = vunpack.c.0.s8 %v474
      %v476 = vperm.slane %v472, %v475
      %v477 = vrot.slane %v454, 4
      %v478 = vsel %vm249, %v477, %v452
      %v480 = vunpack.c.l.s4 1983009808
      %v481 = vunpack.c.0.s8 %v480
      %v482 = vperm.slane %v478, %v481
      %v483 = vrot.slane %v482, 4
      %v484 = vsel %vm249, %v483, %v476
      %v486 = vunpack.c.l.s4 1934713408
      %v487 = vunpack.c.0.s8 %v486
      %v488 = vperm.slane %v484, %v487
      %v491 = vpack.i.b16 %v488, %v471
      %v492 = vshrl.u32 %v471, 16
      %v493 = vshrl.u32 %v488, 16
      %v494 = vpack.i.b16 %v493, %v492
      %v495 = vld [vmem:[%s223] sm:$0x1]
      %vm496 = vcmask 523264
      %v498 = vsel %vm496, %v318, 0
      %v501 = vsel %vm496, %v405, 0
      %503 = vmatpush.bf16.xpose.msra.mxu0 0
      %504 = vmatpush.bf16.xpose.msra.mxu0 0
      %505 = vmatpush.bf16.xpose.msra.mxu0 0
      %506 = vmatpush.bf16.xpose.msra.mxu0 0
      %507 = vmatpush.bf16.xpose.msra.mxu0 0
      %508 = vmatpush.bf16.xpose.msra.mxu0 0
      %509 = vmatpush.bf16.xpose.msra.mxu0 0
      %510 = vmatpush.bf16.xpose.msra.mxu0 %v501
      %511 = vmatmul.bf16.gmra.mxu0 %v498
      %v512 = vpop.f32.mrf.mxu0
      %v513 = vadd.f32 0.0, %v512
      %v514 = vpop.f32.mrf.mxu0
      %515 = vdwg.mxu0
      %v517 = vsel %vm496, %v321, 0
      %v520 = vsel %vm496, %v408, 0
      %522 = vmatpush.bf16.xpose.msra.mxu0 0
      %523 = vmatpush.bf16.xpose.msra.mxu0 0
      %524 = vmatpush.bf16.xpose.msra.mxu0 0
      %525 = vmatpush.bf16.xpose.msra.mxu0 0
      %526 = vmatpush.bf16.xpose.msra.mxu0 0
      %527 = vmatpush.bf16.xpose.msra.mxu0 0
      %528 = vmatpush.bf16.xpose.msra.mxu0 0
      %529 = vmatpush.bf16.xpose.msra.mxu0 %v520
      %530 = vmatmul.bf16.gmra.mxu0 %v517
      %v531 = vpop.f32.mrf.mxu0
      %v532 = vadd.f32 0.0, %v531
      %v533 = vpop.f32.mrf.mxu0
      %534 = vdwg.mxu0
      %v535 = vmul.f32 %v513, 0.125
      %v536 = vmul.f32 %v532, 0.125
      %v538 = vperm.slane %v495, 0
      %v540 = vadd.f32 %v535, %v538
      %v541 = vadd.f32 %v536, %v538
      %vm542 = vcmask 64512
      %v543 = vsel %vm542, %v540, -inf
      %544 = vmax.xlane.f32.xlu0 %v543
      %v545 = vpop.xlane.xlu0 %544
      %v546 = vsel %vm542, %v541, -inf
      %547 = vmax.xlane.f32.xlu0 %v546
      %v548 = vpop.xlane.xlu0 %547
      %v549 = vsub.f32 %v540, %v545
      %v550 = vsub.f32 %v541, %v548
      %v551 = vmul.f32 %v549, 1.442695
      %v552 = vpow.pop %v551
      %v553 = vmul.f32 %v550, 1.442695
      %v554 = vpow.pop %v553
      %v555 = vsel %vm542, %v552, 0.0
      %556 = vadd.xlane.f32.xlu0 %v555
      %v557 = vpop.xlane.xlu0 %556
      %v558 = vsel %vm542, %v554, 0.0
      %559 = vadd.xlane.f32.xlu0 %v558
      %v560 = vpop.xlane.xlu0 %559
      %v561 = vpack.c.bf16 %v552, %v552
      %v562 = vpack.c.bf16 %v554, %v554
      %v564 = vsel %vm542, %v561, 0
      %vm566 = vcmask 1043456
      %v568 = vsel %vm566, %v491, 0
      %570 = vmatpush.bf16.msra.mxu0 0
      %571 = vmatpush.bf16.msra.mxu0 0
      %572 = vmatpush.bf16.msra.mxu0 0
      %573 = vmatpush.bf16.msra.mxu0 0
      %574 = vmatpush.bf16.msra.mxu0 0
      %575 = vmatpush.bf16.msra.mxu0 0
      %576 = vmatpush.bf16.msra.mxu0 0
      %577 = vmatpush.bf16.msra.mxu0 %v568
      %578 = vmatmul.bf16.gmra.mxu0 %v564
      %v579 = vpop.f32.mrf.mxu0
      %v580 = vadd.f32 0.0, %v579
      %v581 = vpop.f32.mrf.mxu0
      %582 = vdwg.mxu0
      %v584 = vsel %vm542, %v562, 0
      %v587 = vsel %vm566, %v494, 0
      %589 = vmatpush.bf16.msra.mxu0 0
      %590 = vmatpush.bf16.msra.mxu0 0
      %591 = vmatpush.bf16.msra.mxu0 0
      %592 = vmatpush.bf16.msra.mxu0 0
      %593 = vmatpush.bf16.msra.mxu0 0
      %594 = vmatpush.bf16.msra.mxu0 0
      %595 = vmatpush.bf16.msra.mxu0 0
      %596 = vmatpush.bf16.msra.mxu0 %v587
      %597 = vmatmul.bf16.gmra.mxu0 %v584
      %v598 = vpop.f32.mrf.mxu0
      %v599 = vadd.f32 0.0, %v598
      %v600 = vpop.f32.mrf.mxu0
      %601 = vdwg.mxu0
      %v602 = vrcp.pop %v557
      %v603 = vmul.f32 %v557, %v602
      %v604 = vsub.f32 1.0, %v603
      %v605 = vmul.f32 %v602, %v604
      %v606 = vadd.f32 %v602, %v605
      %vm607 = vweird.f32 %v557
      %vm608 = vweird.f32 %v602
      %vm609 = vmor %vm607, %vm608
      %v610 = vsel %vm609, %v602, %v606
      %v611 = vand.u32 2147483647, %v557
      %vm612 = vcmp.eq.f32.partialorder %v611, 8.507059e+37
      %v613 = vand.u32 %v557, 2147483648
      %v614 = vor.u32 1.1754944e-38, %v613
      %v615 = vsel %vm612, %v614, %v610
      %v616 = vmul.f32 %v580, %v615
      %v617 = vrcp.pop %v560
      %v618 = vmul.f32 %v560, %v617
      %v619 = vsub.f32 1.0, %v618
      %v620 = vmul.f32 %v617, %v619
      %v621 = vadd.f32 %v617, %v620
      %vm622 = vweird.f32 %v560
      %vm623 = vweird.f32 %v617
      %vm624 = vmor %vm622, %vm623
      %v625 = vsel %vm624, %v617, %v621
      %v626 = vand.u32 2147483647, %v560
      %vm627 = vcmp.eq.f32.partialorder %v626, 8.507059e+37
      %v628 = vand.u32 %v560, 2147483648
      %v629 = vor.u32 1.1754944e-38, %v628
      %v630 = vsel %vm627, %v629, %v625
      %v631 = vmul.f32 %v599, %v630
      %v632 = vrot.slane %v616, 4
      %vm633 = vcmask 1047556
      %v634 = vsel %vm633, 0.0, %v632
      %v636 = vunpack.c.l.s4 1983009808
      %v637 = vunpack.c.0.s8 %v636
      %v638 = vperm.slane %v616, %v637
      %v640 = vunpack.c.l.s4 1983009808
      %v641 = vunpack.c.0.s8 %v640
      %v642 = vperm.slane %v634, %v641
      %v643 = vrot.slane %v631, 4
      %v644 = vsel %vm633, 0.0, %v643
      %v646 = vunpack.c.l.s4 1983009808
      %v647 = vunpack.c.0.s8 %v646
      %v648 = vperm.slane %v631, %v647
      %v650 = vunpack.c.l.s4 1983009808
      %v651 = vunpack.c.0.s8 %v650
      %v652 = vperm.slane %v644, %v651
      %v653 = vrot.slane %v648, 4
      %v654 = vsel %vm633, %v653, %v638
      %v655 = vrot.slane %v638, 4
      %v656 = vsel %vm633, %v648, %v655
      %v658 = vunpack.c.l.s4 1934713408
      %v659 = vunpack.c.0.s8 %v658
      %v660 = vperm.slane %v654, %v659
      %v662 = vunpack.c.l.s4 1934713408
      %v663 = vunpack.c.0.s8 %v662
      %v664 = vperm.slane %v656, %v663
      %v665 = vrot.slane %v652, 4
      %v666 = vsel %vm633, %v665, %v642
      %v667 = vrot.slane %v642, 4
      %v668 = vsel %vm633, %v652, %v667
      %v670 = vunpack.c.l.s4 1934713408
      %v671 = vunpack.c.0.s8 %v670
      %v672 = vperm.slane %v666, %v671
      %v674 = vunpack.c.l.s4 1934713408
      %v675 = vunpack.c.0.s8 %v674
      %v676 = vperm.slane %v668, %v675
      %v677 = vrot.slane %v660, 4
      %v678 = vsel %vm633, 0.0, %v677
      %v679 = vrot.slane %v664, 4
      %v680 = vsel %vm633, 0.0, %v679
      %v681 = vrot.slane %v672, 4
      %v682 = vsel %vm633, 0.0, %v681
      %v683 = vrot.slane %v676, 4
      %v684 = vsel %vm633, 0.0, %v683
      %v685 = vsel %vm633, %v679, %v660
      %v687 = vunpack.c.l.s4 1983009808
      %v688 = vunpack.c.0.s8 %v687
      %v689 = vperm.slane %v685, %v688
      %v690 = vrot.slane %v680, 4
      %v691 = vsel %vm633, %v690, %v678
      %v693 = vunpack.c.l.s4 1983009808
      %v694 = vunpack.c.0.s8 %v693
      %v695 = vperm.slane %v691, %v694
      %v696 = vsel %vm633, %v683, %v672
      %v698 = vunpack.c.l.s4 1983009808
      %v699 = vunpack.c.0.s8 %v698
      %v700 = vperm.slane %v696, %v699
      %v701 = vrot.slane %v684, 4
      %v702 = vsel %vm633, %v701, %v682
      %v704 = vunpack.c.l.s4 1983009808
      %v705 = vunpack.c.0.s8 %v704
      %v706 = vperm.slane %v702, %v705
      %v707 = vrot.slane %v695, 4
      %v708 = vsel %vm633, %v707, %v689
      %v710 = vunpack.c.l.s4 1934713408
      %v711 = vunpack.c.0.s8 %v710
      %v712 = vperm.slane %v708, %v711
      %v713 = vrot.slane %v706, 4
      %v714 = vsel %vm633, %v713, %v700
      %v716 = vunpack.c.l.s4 1934713408
      %v717 = vunpack.c.0.s8 %v716
      %v718 = vperm.slane %v714, %v717
      %v719 = vrot.slane %v718, 4
      %v720 = vsel %vm633, %v719, %v712
      %v721 = vrot.slane %v712, 4
      %v722 = vsel %vm633, %v718, %v721
      %724 = vrot.lane.b32.xlu0 %v722, 64
      %v725 = vpop.permute.xlu0 %724
      %v727 = vsel %vm496, %v720, %v725
      %v728 = vpack.c.bf16 %v727, %v727
      %729 = vst [vmem:[%s230] sm:$0xf] %v728
      %p730 = scmp.lt.s32.totalorder %s18, 7
      %s731 = scalar_select %p730, %s18, 7
      %p732 = scmp.lt.s32.totalorder %s19, 0
      %s733 = scalar_select %p732, %s19, 0
      %s734 = sadd.s32 %s733, %s731
      %s735 = smul.addr %s734, 4
      %s736 = scalar_lea.vmem %s3, %s735
      // Predicated region
      $region33: #{bert_lora_classifier_forward.8} parent=31 // pred_check
        %p737 = pneg %p126
      $region34: #{bert_lora_classifier_forward.8} parent=31 // pred_check_branch
        %739 = sbr.rel (%p737) target = $region36
      $region35: #{bert_lora_classifier_forward.8} parent=31 // pred_region
        _
      $region36: #{bert_lora_classifier_forward.8} parent=31 // pred_fallthru
        _
    $region32: #{bert_lora_classifier_forward.8} parent=5 // pred_fallthru
      _
    %p740 = scmp.le.s32.totalorder 2, %s9
    // Predicated region
    $region37: #{bert_lora_classifier_forward.8} parent=5 // pred_check
      %p741 = pneg %p740
    $region38: #{bert_lora_classifier_forward.8} parent=5 // pred_check_branch
      %743 = sbr.rel (%p741) target = $region40
    $region39: #{bert_lora_classifier_forward.8} parent=5 // pred_region
      %s744 = ssub.s32 %s9, 2
      // Predicated region
      $region41: #{bert_lora_classifier_forward.8} parent=39 // pred_check
        %p745 = pneg %p132
      $region42: #{bert_lora_classifier_forward.8} parent=39 // pred_check_branch
        %747 = sbr.rel (%p745) target = $region44
      $region43: #{bert_lora_classifier_forward.8} parent=39 // pred_region
        %p748 = scmp.lt.s32.totalorder %s20, 7
        %s749 = scalar_select %p748, %s20, 7
        %p750 = scmp.lt.s32.totalorder %s21, 0
        %s751 = scalar_select %p750, %s21, 0
        %s752 = sadd.s32 %s751, %s749
        %s753 = smul.addr %s752, 4
        %s754 = scalar_lea.vmem %s3, %s753
      $region44: #{bert_lora_classifier_forward.8} parent=39 // pred_fallthru
        _
    $region40: #{bert_lora_classifier_forward.8} parent=5 // pred_fallthru
      _
  $region6: #{bert_lora_classifier_forward.8} parent=0 // loop_footer
    %s13 = sadd.s32 1, %s9
  $region7: #{bert_lora_classifier_forward.8} parent=0 // loop_footer_branch
    %8 = sbr.rel target = $region3
  $region8: #{bert_lora_classifier_forward.8} parent=0 // loop_exit
    _

// kernel: bert_lora_classifier_forward.11
$region0: #{bert_lora_classifier_forward.11}
  #allocation0 [shape = 'u32[]', space=smem, size = 0x4, offset = 0x4, fixed_abs, tag = 'smem constant byte address 0x4 - core index']
  #allocation1 [shape = 'u32[72,128]{1,0:T(1,128)}', space=vmem, size = 0x9000, scoped, tag = 'internal scratch']
  #allocation2 [shape = 'f32[32,128]{1,0:T(8,128)}', space=vmem, size = 0x4000, scoped, tag = 'scratch operand']
  #allocation3 [shape = 'f32[32,128]{1,0:T(8,128)}', space=vmem, size = 0x4000, scoped, tag = 'scratch operand']
  %s0 = inlined_call_operand.vmem [shape: bf16[64,128], index: 0, kind: input, shape index: {}]
  %s1 = inlined_call_operand.vmem [shape: bf16[64,128], index: 1, kind: input, shape index: {}]
  %s2 = inlined_call_operand.hbm [shape: bf16[128,128], index: 2, kind: input, shape index: {}]
  %s3 = inlined_call_operand.vmem [shape: f32[1,128], index: 3, kind: input, shape index: {}]
  %s4 = inlined_call_operand.vmem [shape: f32[1,128], index: 4, kind: input, shape index: {}]
  %s5 = inlined_call_operand.vmem [shape: f32[1,128], index: 5, kind: input, shape index: {}]
  %s6 = inlined_call_operand.vmem [shape: bf16[128,256], index: 6, kind: input, shape index: {}]
  %s7 = inlined_call_operand.vmem [shape: f32[1,256], index: 7, kind: input, shape index: {}]
  %s8 = inlined_call_operand.hbm [shape: bf16[256,128], index: 8, kind: input, shape index: {}]
  %s9 = inlined_call_operand.vmem [shape: f32[1,128], index: 9, kind: input, shape index: {}]
  %s10 = inlined_call_operand.vmem [shape: f32[1,128], index: 10, kind: input, shape index: {}]
  %s11 = inlined_call_operand.vmem [shape: f32[1,128], index: 11, kind: input, shape index: {}]
  %s12 = inlined_call_operand.vmem [shape: bf16[64,128], index: 12, kind: output, shape index: {}]
  %s13 = sld [smem:[#allocation0]]
  $region97: #{bert_lora_classifier_forward.11} parent=0
    _
  %s15 = ssub.s32 1, %s13
  %s16 = scalar_select 0, %s15, %s13
  $region1: #{bert_lora_classifier_forward.11} parent=0
    #allocation4 [shape = 'u8[32768]{0}', space=vmem, size = 0x8000, scoped, tag = 'input window, operand 2, single buffered']
    #allocation5 [shape = 's32[2]{0}', space=sflag, size = 0x8, scoped, tag = 'scoped memory for bert_lora_classifier_forward.11']
    #allocation6 [shape = 'u8[65536]{0}', space=vmem, size = 0x10000, scoped, tag = 'input window, operand 8, single buffered']
    #allocation7 [shape = 's32[1]{0}', space=sflag, size = 0x4, scoped, tag = 'scoped memory for bert_lora_classifier_forward.11']
    %17 = vsyncpa [#allocation5], 0
    %18 = vsyncpa [#allocation7], 0
    loop: start=0, step=1, limit=4
    $region2: #{bert_lora_classifier_forward.11} parent=1 // loop_pre_header
      _
    $region3: #{bert_lora_classifier_forward.11} parent=1 // loop_header
      %s20 = sphi 0, %s24
      %p21 = scmp.ge.s32.totalorder %s20, 4
      %s27 = sphi 0, %s39
      %s28 = sphi 0, %s35
      %s29 = sphi 0, %s27
      %s30 = sphi 0, %s28
      %s31 = sphi 0, %s29
      %s32 = sphi 0, %s30
      %s42 = sphi 0, %s44
      %s45 = sphi 0, %s42
      %s46 = sphi 0, %s45
      %s62 = sphi 0, %s46
      %s68 = sphi 0, %s70
      %s71 = sphi 0, %s68
      %s72 = sphi 0, %s71
      %s88 = sphi 0, %s72
      %s92 = sphi 0, %s92
      %s94 = sphi 0, %s92
      %s95 = sphi 0, %s94
      %s109 = sphi 0, %s95
      %s113 = sphi 0, %s113
      %s115 = sphi 0, %s113
      %s116 = sphi 0, %s115
      %s130 = sphi 0, %s116
      %s134 = sphi 0, %s134
      %s136 = sphi 0, %s134
      %s137 = sphi 0, %s136
      %s151 = sphi 0, %s137
      %s155 = sphi 0, %s155
      %s157 = sphi 0, %s155
      %s158 = sphi 0, %s157
      %s172 = sphi 0, %s158
      %s178 = sphi 0, %s180
      %s181 = sphi 0, %s178
      %s182 = sphi 0, %s181
      %s198 = sphi 0, %s182
      %s204 = sphi 0, %s206
      %s207 = sphi 0, %s204
      %s208 = sphi 0, %s207
      %s224 = sphi 0, %s208
      %s230 = sphi 0, %s232
      %s233 = sphi 0, %s230
      %s234 = sphi 0, %s233
      %s250 = sphi 0, %s234
      %s254 = sphi 0, %s254
      %s256 = sphi 0, %s254
      %s257 = sphi 0, %s256
      %s271 = sphi 0, %s257
      %s275 = sphi 0, %s275
      %s277 = sphi 0, %s275
      %s278 = sphi 0, %s277
      %s292 = sphi 0, %s278
      %s296 = sphi 0, %s296
      %s298 = sphi 0, %s296
      %s299 = sphi 0, %s298
      %s313 = sphi 0, %s299
      %s319 = sphi 0, %s321
      %s322 = sphi 0, %s319
      %s323 = sphi 0, %s322
      %s339 = sphi 0, %s323
    $region4: #{bert_lora_classifier_forward.11} parent=1 // loop_header_branch
      %23 = sbr.rel (%p21) target = $region8
    $region5: #{bert_lora_classifier_forward.11} parent=1 // loop_body
      %s25 = ssub.s32 %s20, 1
      %s26 = ssub.s32 %s20, 2
      %s33 = sadd.s32 1, %s28
      %p34 = scmp.ge.s32.totalorder %s33, 1
      %s35 = scalar_select %p34, 0, %s33
      %s36 = sadd.s32 1, %s27
      %s37 = scalar_select %p34, %s36, %s27
      %p38 = scmp.ge.s32.totalorder %s37, 2
      %s39 = scalar_select %p38, 0, %s37
      %s40 = ssub.s32 %s27, %s39
      %p41 = scmp.eq.s32.totalorder %s40, 0
      %s43 = sadd.s32 %s42, 1
      %s44 = scalar_select %p41, %s42, %s43
      %p47 = pneg %p41
      %p48 = scmp.eq.s32.totalorder %s20, 1
      %p49 = por %p47, %p48
      %p50 = scmp.ne.s32.totalorder %s42, %s45
      %p51 = scmp.eq.s32.totalorder %s20, 0
      %p52 = por %p50, %p51
      %p53 = scmp.ne.s32.totalorder %s42, %s45
      %p54 = scmp.eq.s32.totalorder %s25, 1
      %p55 = por %p53, %p54
      %p56 = scmp.ne.s32.totalorder %s45, %s46
      %p57 = scmp.eq.s32.totalorder %s25, 0
      %p58 = por %p56, %p57
      %p59 = scmp.ne.s32.totalorder %s45, %s46
      %p60 = scmp.eq.s32.totalorder %s26, 1
      %p61 = por %p59, %p60
      %p63 = scmp.ne.s32.totalorder %s46, %s62
      %p64 = scmp.eq.s32.totalorder %s26, 0
      %p65 = por %p63, %p64
      %s66 = ssub.s32 %s27, %s39
      %p67 = scmp.eq.s32.totalorder %s66, 0
      %s69 = sadd.s32 %s68, 1
      %s70 = scalar_select %p67, %s68, %s69
      %p73 = pneg %p67
      %p74 = scmp.eq.s32.totalorder %s20, 1
      %p75 = por %p73, %p74
      %p76 = scmp.ne.s32.totalorder %s68, %s71
      %p77 = scmp.eq.s32.totalorder %s20, 0
      %p78 = por %p76, %p77
      %p79 = scmp.ne.s32.totalorder %s68, %s71
      %p80 = scmp.eq.s32.totalorder %s25, 1
      %p81 = por %p79, %p80
      %p82 = scmp.ne.s32.totalorder %s71, %s72
      %p83 = scmp.eq.s32.totalorder %s25, 0
      %p84 = por %p82, %p83
      %p85 = scmp.ne.s32.totalorder %s71, %s72
      %p86 = scmp.eq.s32.totalorder %s26, 1
      %p87 = por %p85, %p86
      %p89 = scmp.ne.s32.totalorder %s72, %s88
      %p90 = scmp.eq.s32.totalorder %s26, 0
      %p91 = por %p89, %p90
      %s93 = sadd.s32 %s92, 1
      %p96 = scmp.eq.s32.totalorder %s20, 1
      %p97 = scmp.ne.s32.totalorder %s92, %s94
      %p98 = scmp.eq.s32.totalorder %s20, 0
      %p99 = por %p97, %p98
      %p100 = scmp.ne.s32.totalorder %s92, %s94
      %p101 = scmp.eq.s32.totalorder %s25, 1
      %p102 = por %p100, %p101
      %p103 = scmp.ne.s32.totalorder %s94, %s95
      %p104 = scmp.eq.s32.totalorder %s25, 0
      %p105 = por %p103, %p104
      %p106 = scmp.ne.s32.totalorder %s94, %s95
      %p107 = scmp.eq.s32.totalorder %s26, 1
      %p108 = por %p106, %p107
      %p110 = scmp.ne.s32.totalorder %s95, %s109
      %p111 = scmp.eq.s32.totalorder %s26, 0
      %p112 = por %p110, %p111
      %s114 = sadd.s32 %s113, 1
      %p117 = scmp.eq.s32.totalorder %s20, 1
      %p118 = scmp.ne.s32.totalorder %s113, %s115
      %p119 = scmp.eq.s32.totalorder %s20, 0
      %p120 = por %p118, %p119
      %p121 = scmp.ne.s32.totalorder %s113, %s115
      %p122 = scmp.eq.s32.totalorder %s25, 1
      %p123 = por %p121, %p122
      %p124 = scmp.ne.s32.totalorder %s115, %s116
      %p125 = scmp.eq.s32.totalorder %s25, 0
      %p126 = por %p124, %p125
      %p127 = scmp.ne.s32.totalorder %s115, %s116
      %p128 = scmp.eq.s32.totalorder %s26, 1
      %p129 = por %p127, %p128
      %p131 = scmp.ne.s32.totalorder %s116, %s130
      %p132 = scmp.eq.s32.totalorder %s26, 0
      %p133 = por %p131, %p132
      %s135 = sadd.s32 %s134, 1
      %p138 = scmp.eq.s32.totalorder %s20, 1
      %p139 = scmp.ne.s32.totalorder %s134, %s136
      %p140 = scmp.eq.s32.totalorder %s20, 0
      %p141 = por %p139, %p140
      %p142 = scmp.ne.s32.totalorder %s134, %s136
      %p143 = scmp.eq.s32.totalorder %s25, 1
      %p144 = por %p142, %p143
      %p145 = scmp.ne.s32.totalorder %s136, %s137
      %p146 = scmp.eq.s32.totalorder %s25, 0
      %p147 = por %p145, %p146
      %p148 = scmp.ne.s32.totalorder %s136, %s137
      %p149 = scmp.eq.s32.totalorder %s26, 1
      %p150 = por %p148, %p149
      %p152 = scmp.ne.s32.totalorder %s137, %s151
      %p153 = scmp.eq.s32.totalorder %s26, 0
      %p154 = por %p152, %p153
      %s156 = sadd.s32 %s155, 1
      %p159 = scmp.eq.s32.totalorder %s20, 1
      %p160 = scmp.ne.s32.totalorder %s155, %s157
      %p161 = scmp.eq.s32.totalorder %s20, 0
      %p162 = por %p160, %p161
      %p163 = scmp.ne.s32.totalorder %s155, %s157
      %p164 = scmp.eq.s32.totalorder %s25, 1
      %p165 = por %p163, %p164
      %p166 = scmp.ne.s32.totalorder %s157, %s158
      %p167 = scmp.eq.s32.totalorder %s25, 0
      %p168 = por %p166, %p167
      %p169 = scmp.ne.s32.totalorder %s157, %s158
      %p170 = scmp.eq.s32.totalorder %s26, 1
      %p171 = por %p169, %p170
      %p173 = scmp.ne.s32.totalorder %s158, %s172
      %p174 = scmp.eq.s32.totalorder %s26, 0
      %p175 = por %p173, %p174
      %s176 = ssub.s32 %s28, %s35
      %p177 = scmp.eq.s32.totalorder %s176, 0
      %s179 = sadd.s32 %s178, 1
      %s180 = scalar_select %p177, %s178, %s179
      %p183 = pneg %p177
      %p184 = scmp.eq.s32.totalorder %s20, 1
      %p185 = por %p183, %p184
      %p186 = scmp.ne.s32.totalorder %s178, %s181
      %p187 = scmp.eq.s32.totalorder %s20, 0
      %p188 = por %p186, %p187
      %p189 = scmp.ne.s32.totalorder %s178, %s181
      %p190 = scmp.eq.s32.totalorder %s25, 1
      %p191 = por %p189, %p190
      %p192 = scmp.ne.s32.totalorder %s181, %s182
      %p193 = scmp.eq.s32.totalorder %s25, 0
      %p194 = por %p192, %p193
      %p195 = scmp.ne.s32.totalorder %s181, %s182
      %p196 = scmp.eq.s32.totalorder %s26, 1
      %p197 = por %p195, %p196
      %p199 = scmp.ne.s32.totalorder %s182, %s198
      %p200 = scmp.eq.s32.totalorder %s26, 0
      %p201 = por %p199, %p200
      %s202 = ssub.s32 %s28, %s35
      %p203 = scmp.eq.s32.totalorder %s202, 0
      %s205 = sadd.s32 %s204, 1
      %s206 = scalar_select %p203, %s204, %s205
      %p209 = pneg %p203
      %p210 = scmp.eq.s32.totalorder %s20, 1
      %p211 = por %p209, %p210
      %p212 = scmp.ne.s32.totalorder %s204, %s207
      %p213 = scmp.eq.s32.totalorder %s20, 0
      %p214 = por %p212, %p213
      %p215 = scmp.ne.s32.totalorder %s204, %s207
      %p216 = scmp.eq.s32.totalorder %s25, 1
      %p217 = por %p215, %p216
      %p218 = scmp.ne.s32.totalorder %s207, %s208
      %p219 = scmp.eq.s32.totalorder %s25, 0
      %p220 = por %p218, %p219
      %p221 = scmp.ne.s32.totalorder %s207, %s208
      %p222 = scmp.eq.s32.totalorder %s26, 1
      %p223 = por %p221, %p222
      %p225 = scmp.ne.s32.totalorder %s208, %s224
      %p226 = scmp.eq.s32.totalorder %s26, 0
      %p227 = por %p225, %p226
      %s228 = ssub.s32 %s28, %s35
      %p229 = scmp.eq.s32.totalorder %s228, 0
      %s231 = sadd.s32 %s230, 1
      %s232 = scalar_select %p229, %s230, %s231
      %p235 = pneg %p229
      %p236 = scmp.eq.s32.totalorder %s20, 1
      %p237 = por %p235, %p236
      %p238 = scmp.ne.s32.totalorder %s230, %s233
      %p239 = scmp.eq.s32.totalorder %s20, 0
      %p240 = por %p238, %p239
      %p241 = scmp.ne.s32.totalorder %s230, %s233
      %p242 = scmp.eq.s32.totalorder %s25, 1
      %p243 = por %p241, %p242
      %p244 = scmp.ne.s32.totalorder %s233, %s234
      %p245 = scmp.eq.s32.totalorder %s25, 0
      %p246 = por %p244, %p245
      %p247 = scmp.ne.s32.totalorder %s233, %s234
      %p248 = scmp.eq.s32.totalorder %s26, 1
      %p249 = por %p247, %p248
      %p251 = scmp.ne.s32.totalorder %s234, %s250
      %p252 = scmp.eq.s32.totalorder %s26, 0
      %p253 = por %p251, %p252
      %s255 = sadd.s32 %s254, 1
      %p258 = scmp.eq.s32.totalorder %s20, 1
      %p259 = scmp.ne.s32.totalorder %s254, %s256
      %p260 = scmp.eq.s32.totalorder %s20, 0
      %p261 = por %p259, %p260
      %p262 = scmp.ne.s32.totalorder %s254, %s256
      %p263 = scmp.eq.s32.totalorder %s25, 1
      %p264 = por %p262, %p263
      %p265 = scmp.ne.s32.totalorder %s256, %s257
      %p266 = scmp.eq.s32.totalorder %s25, 0
      %p267 = por %p265, %p266
      %p268 = scmp.ne.s32.totalorder %s256, %s257
      %p269 = scmp.eq.s32.totalorder %s26, 1
      %p270 = por %p268, %p269
      %p272 = scmp.ne.s32.totalorder %s257, %s271
      %p273 = scmp.eq.s32.totalorder %s26, 0
      %p274 = por %p272, %p273
      %s276 = sadd.s32 %s275, 1
      %p279 = scmp.eq.s32.totalorder %s20, 1
      %p280 = scmp.ne.s32.totalorder %s275, %s277
      %p281 = scmp.eq.s32.totalorder %s20, 0
      %p282 = por %p280, %p281
      %p283 = scmp.ne.s32.totalorder %s275, %s277
      %p284 = scmp.eq.s32.totalorder %s25, 1
      %p285 = por %p283, %p284
      %p286 = scmp.ne.s32.totalorder %s277, %s278
      %p287 = scmp.eq.s32.totalorder %s25, 0
      %p288 = por %p286, %p287
      %p289 = scmp.ne.s32.totalorder %s277, %s278
      %p290 = scmp.eq.s32.totalorder %s26, 1
      %p291 = por %p289, %p290
      %p293 = scmp.ne.s32.totalorder %s278, %s292
      %p294 = scmp.eq.s32.totalorder %s26, 0
      %p295 = por %p293, %p294
      %s297 = sadd.s32 %s296, 1
      %p300 = scmp.eq.s32.totalorder %s20, 1
      %p301 = scmp.ne.s32.totalorder %s296, %s298
      %p302 = scmp.eq.s32.totalorder %s20, 0
      %p303 = por %p301, %p302
      %p304 = scmp.ne.s32.totalorder %s296, %s298
      %p305 = scmp.eq.s32.totalorder %s25, 1
      %p306 = por %p304, %p305
      %p307 = scmp.ne.s32.totalorder %s298, %s299
      %p308 = scmp.eq.s32.totalorder %s25, 0
      %p309 = por %p307, %p308
      %p310 = scmp.ne.s32.totalorder %s298, %s299
      %p311 = scmp.eq.s32.totalorder %s26, 1
      %p312 = por %p310, %p311
      %p314 = scmp.ne.s32.totalorder %s299, %s313
      %p315 = scmp.eq.s32.totalorder %s26, 0
      %p316 = por %p314, %p315
      %s317 = ssub.s32 %s27, %s39
      %p318 = scmp.eq.s32.totalorder %s317, 0
      %s320 = sadd.s32 %s319, 1
      %s321 = scalar_select %p318, %s319, %s320
      %p324 = pneg %p318
      %p325 = scmp.eq.s32.totalorder %s20, 1
      %p326 = por %p324, %p325
      %p327 = scmp.ne.s32.totalorder %s319, %s322
      %p328 = scmp.eq.s32.totalorder %s20, 0
      %p329 = por %p327, %p328
      %p330 = scmp.ne.s32.totalorder %s319, %s322
      %p331 = scmp.eq.s32.totalorder %s25, 1
      %p332 = por %p330, %p331
      %p333 = scmp.ne.s32.totalorder %s322, %s323
      %p334 = scmp.eq.s32.totalorder %s25, 0
      %p335 = por %p333, %p334
      %p336 = scmp.ne.s32.totalorder %s322, %s323
      %p337 = scmp.eq.s32.totalorder %s26, 1
      %p338 = por %p336, %p337
      %p340 = scmp.ne.s32.totalorder %s323, %s339
      %p341 = scmp.eq.s32.totalorder %s26, 0
      %p342 = por %p340, %p341
      %p343 = scmp.le.s32.totalorder 1, %s20
      %p344 = scmp.lt.s32.totalorder %s20, 3
      %p345 = pnand %p343, %p344
      %p346 = pneg %p345
      // Predicated region
      $region9: #{bert_lora_classifier_forward.11} parent=5 // pred_check
        _
      $region10: #{bert_lora_classifier_forward.11} parent=5 // pred_check_branch
        %348 = sbr.rel (%p345) target = $region12
      $region11: #{bert_lora_classifier_forward.11} parent=5 // pred_region
        %s349 = ssub.s32 %s20, 1
        // Predicated region
        $region13: #{bert_lora_classifier_forward.11} parent=11 // pred_check
          %p350 = pneg %p105
        $region14: #{bert_lora_classifier_forward.11} parent=11 // pred_check_branch
          %352 = sbr.rel (%p350) target = $region16
        $region15: #{bert_lora_classifier_forward.11} parent=11 // pred_region
          %354 = vsyncadd [#allocation5], 0
          %s355 = sshll.u32 %s2, 4
          %s356 = int_to_ptr.hbm [resolvable:$true] %s355
          %s357 = sshll.u32 [#allocation4], 4
          %s358 = int_to_ptr.vmem [resolvable:$true] %s357
          %363 = dma.hbm_to_vmem [thread:$0]  %s356, 1024, %s358, [#allocation5], 64, 64, 4
        $region16: #{bert_lora_classifier_forward.11} parent=11 // pred_fallthru
          _
        // Predicated region
        $region17: #{bert_lora_classifier_forward.11} parent=11 // pred_check
          %p364 = pneg %p126
        $region18: #{bert_lora_classifier_forward.11} parent=11 // pred_check_branch
          %366 = sbr.rel (%p364) target = $region20
        $region19: #{bert_lora_classifier_forward.11} parent=11 // pred_region
          _
        $region20: #{bert_lora_classifier_forward.11} parent=11 // pred_fallthru
          _
        // Predicated region
        $region21: #{bert_lora_classifier_forward.11} parent=11 // pred_check
          %p367 = pneg %p147
        $region22: #{bert_lora_classifier_forward.11} parent=11 // pred_check_branch
          %369 = sbr.rel (%p367) target = $region24
        $region23: #{bert_lora_classifier_forward.11} parent=11 // pred_region
          _
        $region24: #{bert_lora_classifier_forward.11} parent=11 // pred_fallthru
          _
        // Predicated region
        $region25: #{bert_lora_classifier_forward.11} parent=11 // pred_check
          %p370 = pneg %p168
        $region26: #{bert_lora_classifier_forward.11} parent=11 // pred_check_branch
          %372 = sbr.rel (%p370) target = $region28
        $region27: #{bert_lora_classifier_forward.11} parent=11 // pred_region
          _
        $region28: #{bert_lora_classifier_forward.11} parent=11 // pred_fallthru
          _
        // Predicated region
        $region29: #{bert_lora_classifier_forward.11} parent=11 // pred_check
          %p373 = pneg %p194
        $region30: #{bert_lora_classifier_forward.11} parent=11 // pred_check_branch
          %375 = sbr.rel (%p373) target = $region32
        $region31: #{bert_lora_classifier_forward.11} parent=11 // pred_region
          %s376 = smul.u32 2, %s30
          %p377 = scmp.lt.s32.totalorder %s376, 1
          %s378 = scalar_select %p377, %s376, 1
          %s379 = smul.addr %s378, 4
          %s380 = scalar_lea.vmem %s6, %s379
          %s381 = smul.u32 2, %s30
        $region32: #{bert_lora_classifier_forward.11} parent=11 // pred_fallthru
          _
        // Predicated region
        $region33: #{bert_lora_classifier_forward.11} parent=11 // pred_check
          %p382 = pneg %p220
        $region34: #{bert_lora_classifier_forward.11} parent=11 // pred_check_branch
          %384 = sbr.rel (%p382) target = $region36
        $region35: #{bert_lora_classifier_forward.11} parent=11 // pred_region
          %s385 = smul.u32 2, %s30
          %p386 = scmp.lt.s32.totalorder %s385, 1
          %s387 = scalar_select %p386, %s385, 1
          %s388 = scalar_lea.vmem %s7, %s387
          %s389 = smul.u32 2, %s30
        $region36: #{bert_lora_classifier_forward.11} parent=11 // pred_fallthru
          _
        // Predicated region
        $region37: #{bert_lora_classifier_forward.11} parent=11 // pred_check
          %p390 = pneg %p246
        $region38: #{bert_lora_classifier_forward.11} parent=11 // pred_check_branch
          %392 = sbr.rel (%p390) target = $region40
        $region39: #{bert_lora_classifier_forward.11} parent=11 // pred_region
          %s393 = smul.u32 32, %s30
          %395 = vsyncadd [#allocation7], 0
          %s396 = smul.addr %s393, 4
          %s397 = scalar_lea.hbm %s8, %s396
          %s398 = sshll.u32 %s397, 4
          %s399 = int_to_ptr.hbm [resolvable:$true] %s398
          %s400 = sshll.u32 [#allocation6], 4
          %s401 = int_to_ptr.vmem [resolvable:$true] %s400
          %406 = dma.hbm_to_vmem [thread:$0]  %s399, 2048, %s401, [#allocation7], 64, 64, 4
        $region40: #{bert_lora_classifier_forward.11} parent=11 // pred_fallthru
          _
        // Predicated region
        $region41: #{bert_lora_classifier_forward.11} parent=11 // pred_check
          %p407 = pneg %p267
        $region42: #{bert_lora_classifier_forward.11} parent=11 // pred_check_branch
          %409 = sbr.rel (%p407) target = $region44
        $region43: #{bert_lora_classifier_forward.11} parent=11 // pred_region
          _
        $region44: #{bert_lora_classifier_forward.11} parent=11 // pred_fallthru
          _
        // Predicated region
        $region45: #{bert_lora_classifier_forward.11} parent=11 // pred_check
          %p410 = pneg %p288
        $region46: #{bert_lora_classifier_forward.11} parent=11 // pred_check_branch
          %412 = sbr.rel (%p410) target = $region48
        $region47: #{bert_lora_classifier_forward.11} parent=11 // pred_region
          _
        $region48: #{bert_lora_classifier_forward.11} parent=11 // pred_fallthru
          _
        // Predicated region
        $region49: #{bert_lora_classifier_forward.11} parent=11 // pred_check
          %p413 = pneg %p309
        $region50: #{bert_lora_classifier_forward.11} parent=11 // pred_check_branch
          %415 = sbr.rel (%p413) target = $region52
        $region51: #{bert_lora_classifier_forward.11} parent=11 // pred_region
          _
        $region52: #{bert_lora_classifier_forward.11} parent=11 // pred_fallthru
          _
      $region12: #{bert_lora_classifier_forward.11} parent=5 // pred_fallthru
        _
      %p416 = scmp.lt.s32.totalorder %s20, 2
      // Predicated region
      $region53: #{bert_lora_classifier_forward.11} parent=5 // pred_check
        %p417 = pneg %p416
      $region54: #{bert_lora_classifier_forward.11} parent=5 // pred_check_branch
        %419 = sbr.rel (%p417) target = $region56
      $region55: #{bert_lora_classifier_forward.11} parent=5 // pred_region
        // Predicated region
        $region57: #{bert_lora_classifier_forward.11} parent=55 // pred_check
          %p420 = pneg %p52
        $region58: #{bert_lora_classifier_forward.11} parent=55 // pred_check_branch
          %422 = sbr.rel (%p420) target = $region60
        $region59: #{bert_lora_classifier_forward.11} parent=55 // pred_region
          %s423 = smul.u32 4, %s27
          %p424 = scmp.lt.s32.totalorder %s423, 7
          %s425 = scalar_select %p424, %s423, 7
          %s426 = smul.addr %s425, 4
          %s427 = scalar_lea.vmem %s0, %s426
          %s428 = smul.u32 4, %s27
        $region60: #{bert_lora_classifier_forward.11} parent=55 // pred_fallthru
          _
        // Predicated region
        $region61: #{bert_lora_classifier_forward.11} parent=55 // pred_check
          %p429 = pneg %p78
        $region62: #{bert_lora_classifier_forward.11} parent=55 // pred_check_branch
          %431 = sbr.rel (%p429) target = $region64
        $region63: #{bert_lora_classifier_forward.11} parent=55 // pred_region
          %s432 = smul.u32 4, %s27
          %p433 = scmp.lt.s32.totalorder %s432, 7
          %s434 = scalar_select %p433, %s432, 7
          %s435 = smul.addr %s434, 4
          %s436 = scalar_lea.vmem %s1, %s435
          %s437 = smul.u32 4, %s27
        $region64: #{bert_lora_classifier_forward.11} parent=55 // pred_fallthru
          _
      $region56: #{bert_lora_classifier_forward.11} parent=5 // pred_fallthru
        _
      %p438 = scmp.le.s32.totalorder 1, %s20
      %p439 = scmp.lt.s32.totalorder %s20, 3
      %p440 = pnand %p438, %p439
      %p441 = pneg %p440
      // Predicated region
      $region65: #{bert_lora_classifier_forward.11} parent=5 // pred_check
        _
      $region66: #{bert_lora_classifier_forward.11} parent=5 // pred_check_branch
        %443 = sbr.rel (%p440) target = $region68
      $region67: #{bert_lora_classifier_forward.11} parent=5 // pred_region
        %s444 = ssub.s32 %s20, 1
        // Predicated region
        $region69: #{bert_lora_classifier_forward.11} parent=67 // pred_check
          %p445 = pneg %p105
        $region70: #{bert_lora_classifier_forward.11} parent=67 // pred_check_branch
          %447 = sbr.rel (%p445) target = $region72
        $region71: #{bert_lora_classifier_forward.11} parent=67 // pred_region
          %449 = dma.done [#allocation5], 1024
        $region72: #{bert_lora_classifier_forward.11} parent=67 // pred_fallthru
          _
        // Predicated region
        $region73: #{bert_lora_classifier_forward.11} parent=67 // pred_check
          %p450 = pneg %p246
        $region74: #{bert_lora_classifier_forward.11} parent=67 // pred_check_branch
          %452 = sbr.rel (%p450) target = $region76
        $region75: #{bert_lora_classifier_forward.11} parent=67 // pred_region
          %454 = dma.done [#allocation7], 2048
        $region76: #{bert_lora_classifier_forward.11} parent=67 // pred_fallthru
          _
        %s455 = smul.u32 4, %s29
        %p456 = scmp.lt.s32.totalorder %s455, 7
        %s457 = scalar_select %p456, %s455, 7
        %s458 = smul.addr %s457, 4
        %s459 = scalar_lea.vmem %s0, %s458
        %p460 = pneg %p58
        %p461 = pneg %p55
        %s462 = smul.u32 4, %s29
        %p463 = scmp.lt.s32.totalorder %s462, 7
        %s464 = scalar_select %p463, %s462, 7
        %s465 = smul.addr %s464, 4
        %s466 = scalar_lea.vmem %s1, %s465
        %p467 = pneg %p84
        %p468 = pneg %p81
        %p469 = pneg %p105
        %p470 = pneg %p102
        %p471 = pneg %p126
        %p472 = pneg %p123
        %p473 = pneg %p147
        %p474 = pneg %p144
        %p475 = pneg %p168
        %p476 = pneg %p165
        %s477 = smul.u32 2, %s30
        %p478 = scmp.lt.s32.totalorder %s477, 1
        %s479 = scalar_select %p478, %s477, 1
        %s480 = smul.addr %s479, 4
        %s481 = scalar_lea.vmem %s6, %s480
        %p482 = pneg %p194
        %p483 = pneg %p191
        %s484 = smul.u32 2, %s30
        %p485 = scmp.lt.s32.totalorder %s484, 1
        %s486 = scalar_select %p485, %s484, 1
        %s487 = scalar_lea.vmem %s7, %s486
        %p488 = pneg %p220
        %p489 = pneg %p217
        %p490 = pneg %p246
        %p491 = pneg %p243
        %p492 = pneg %p267
        %p493 = pneg %p264
        %p494 = pneg %p288
        %p495 = pneg %p285
        %p496 = pneg %p309
        %p497 = pneg %p306
        %p498 = pneg %p335
        %p499 = pneg %p332
        %s500 = smul.u32 4, %s29
        %p501 = scmp.lt.s32.totalorder %s500, 7
        %s502 = scalar_select %p501, %s500, 7
        %s503 = smul.addr %s502, 4
        %s504 = scalar_lea.vmem %s12, %s503
        %s505 = smul.u32 4, %s29
        %p506 = scmp.lt.s32.totalorder %s505, 7
        %s507 = scalar_select %p506, %s505, 7
        %s508 = smul.addr %s507, 4
        %s509 = scalar_lea.vmem %s0, %s508
        %s510 = smul.u32 4, %s29
        %s511 = smul.u32 4, %s29
        %p512 = scmp.lt.s32.totalorder %s511, 7
        %s513 = scalar_select %p512, %s511, 7
        %s514 = smul.addr %s513, 4
        %s515 = scalar_lea.vmem %s1, %s514
        %s516 = smul.u32 4, %s29
        %s517 = smul.u32 2, %s30
        %p518 = scmp.lt.s32.totalorder %s517, 1
        %s519 = scalar_select %p518, %s517, 1
        %s520 = smul.addr %s519, 4
        %s521 = scalar_lea.vmem %s6, %s520
        %s522 = smul.u32 2, %s30
        %s523 = smul.u32 2, %s30
        %p524 = scmp.lt.s32.totalorder %s523, 1
        %s525 = scalar_select %p524, %s523, 1
        %s526 = scalar_lea.vmem %s7, %s525
        %s527 = smul.u32 2, %s30
        %s528 = smul.u32 32, %s30
        %s529 = smul.u32 4, %s29
        %p530 = scmp.lt.s32.totalorder %s529, 7
        %s531 = scalar_select %p530, %s529, 7
        %s532 = smul.addr %s531, 4
        %s533 = scalar_lea.vmem %s12, %s532
        %s534 = smul.u32 4, %s29
        %p535 = scmp.eq.s32.totalorder %s30, 0
        // Predicated region
        $region77: #{bert_lora_classifier_forward.11} parent=67 // pred_check
          %p536 = pneg %p535
        $region78: #{bert_lora_classifier_forward.11} parent=67 // pred_check_branch
          %538 = sbr.rel (%p536) target = $region80
        $region79: #{bert_lora_classifier_forward.11} parent=67 // pred_region
          %v539 = vld [vmem:[%s509] sm:$0xf]
          %v540 = vld [vmem:[%s509 + $0x4] sm:$0xf]
          %v541 = vld [vmem:[%s509 + $0x8] sm:$0xf]
          %v542 = vld [vmem:[%s509 + $0xc] sm:$0xf]
          %v543 = vld [vmem:[#allocation4] sm:$0xf]
          %v544 = vld [vmem:[#allocation4 + $0x4] sm:$0xf]
          %v545 = vld [vmem:[#allocation4 + $0x8] sm:$0xf]
          %v546 = vld [vmem:[#allocation4 + $0xc] sm:$0xf]
          %v547 = vld [vmem:[#allocation4 + $0x10] sm:$0xf]
          %v548 = vld [vmem:[#allocation4 + $0x14] sm:$0xf]
          %v549 = vld [vmem:[#allocation4 + $0x18] sm:$0xf]
          %v550 = vld [vmem:[#allocation4 + $0x1c] sm:$0xf]
          %v551 = vld [vmem:[#allocation4 + $0x20] sm:$0xf]
          %v552 = vld [vmem:[#allocation4 + $0x24] sm:$0xf]
          %v553 = vld [vmem:[#allocation4 + $0x28] sm:$0xf]
          %v554 = vld [vmem:[#allocation4 + $0x2c] sm:$0xf]
          %v555 = vld [vmem:[#allocation4 + $0x30] sm:$0xf]
          %v556 = vld [vmem:[#allocation4 + $0x34] sm:$0xf]
          %v557 = vld [vmem:[#allocation4 + $0x38] sm:$0xf]
          %v558 = vld [vmem:[#allocation4 + $0x3c] sm:$0xf]
          %v559 = vld [vmem:[%s3] sm:$0x1]
          %v561 = vperm.slane %v559, 0
          %v567 = vunpack.c.l.b16 %v539
          %v568 = vunpack.c.l.b16 %v540
          %v569 = vunpack.c.l.b16 %v541
          %v570 = vunpack.c.l.b16 %v542
          %v571 = vpack.c.b16 %v568, %v567
          %v572 = vpack.c.b16 %v570, %v569
          %v591 = vunpack.c.l.b16 %v543
          %v592 = vunpack.c.l.b16 %v544
          %v593 = vunpack.c.l.b16 %v545
          %v594 = vunpack.c.l.b16 %v546
          %v595 = vunpack.c.l.b16 %v547
          %v596 = vunpack.c.l.b16 %v548
          %v597 = vunpack.c.l.b16 %v549
          %v598 = vunpack.c.l.b16 %v550
          %v599 = vunpack.c.l.b16 %v551
          %v600 = vunpack.c.l.b16 %v552
          %v601 = vunpack.c.l.b16 %v553
          %v602 = vunpack.c.l.b16 %v554
          %v603 = vunpack.c.l.b16 %v555
          %v604 = vunpack.c.l.b16 %v556
          %v605 = vunpack.c.l.b16 %v557
          %v606 = vunpack.c.l.b16 %v558
          %v607 = vpack.c.b16 %v592, %v591
          %v608 = vpack.c.b16 %v594, %v593
          %v609 = vpack.c.b16 %v596, %v595
          %v610 = vpack.c.b16 %v598, %v597
          %v611 = vpack.c.b16 %v600, %v599
          %v612 = vpack.c.b16 %v602, %v601
          %v613 = vpack.c.b16 %v604, %v603
          %v614 = vpack.c.b16 %v606, %v605
          %623 = vmatpush.bf16.msra.mxu0 %v614
          %624 = vmatpush.bf16.msra.mxu0 %v613
          %625 = vmatpush.bf16.msra.mxu0 %v612
          %626 = vmatpush.bf16.msra.mxu0 %v611
          %627 = vmatpush.bf16.msra.mxu0 %v610
          %628 = vmatpush.bf16.msra.mxu0 %v609
          %629 = vmatpush.bf16.msra.mxu0 %v608
          %630 = vmatpush.bf16.msra.mxu0 %v607
          %631 = vmatmul.bf16.gmra.mxu0 %v571
          %v632 = vpop.f32.mrf.mxu0
          %v633 = vadd.f32 %v561, %v632
          %v634 = vpop.f32.mrf.mxu0
          %v635 = vadd.f32 %v561, %v634
          %636 = vmatmul.bf16.gmra.mxu0 %v572
          %v637 = vpop.f32.mrf.mxu0
          %v638 = vadd.f32 %v561, %v637
          %v639 = vpop.f32.mrf.mxu0
          %v640 = vadd.f32 %v561, %v639
          %641 = vdwg.mxu0
          %v642 = vld [vmem:[%s515] sm:$0xf]
          %v643 = vld [vmem:[%s515 + $0x4] sm:$0xf]
          %v644 = vld [vmem:[%s515 + $0x8] sm:$0xf]
          %v645 = vld [vmem:[%s515 + $0xc] sm:$0xf]
          %v646 = vunpack.c.l.bf16 %v642
          %v647 = vunpack.c.l.bf16 %v643
          %v648 = vunpack.c.l.bf16 %v644
          %v649 = vunpack.c.l.bf16 %v645
          %v650 = vadd.f32 %v646, %v633
          %v651 = vadd.f32 %v647, %v635
          %v652 = vadd.f32 %v648, %v638
          %v653 = vadd.f32 %v649, %v640
          %v654 = vld [vmem:[%s4] sm:$0x1]
          %v655 = vld [vmem:[%s5] sm:$0x1]
          %656 = vadd.xlane.f32.xlu0 %v650
          %v657 = vpop.xlane.xlu0 %656
          %658 = vadd.xlane.f32.xlu0 %v651
          %v659 = vpop.xlane.xlu0 %658
          %660 = vadd.xlane.f32.xlu0 %v652
          %v661 = vpop.xlane.xlu0 %660
          %662 = vadd.xlane.f32.xlu0 %v653
          %v663 = vpop.xlane.xlu0 %662
          %v664 = vrcp.pop 128.0
          %v665 = vmul.f32 128.0, %v664
          %v666 = vsub.f32 1.0, %v665
          %v667 = vmul.f32 %v664, %v666
          %v668 = vadd.f32 %v664, %v667
          %vm669 = vweird.f32 %v664
          %v670 = vsel %vm669, %v664, %v668
          %v671 = vmul.f32 %v657, %v670
          %v672 = vmul.f32 %v659, %v670
          %v673 = vmul.f32 %v661, %v670
          %v674 = vmul.f32 %v663, %v670
          %v675 = vsub.f32 %v650, %v671
          %v676 = vsub.f32 %v651, %v672
          %v677 = vsub.f32 %v652, %v673
          %v678 = vsub.f32 %v653, %v674
          %v679 = vmul.f32 %v675, %v675
          %v680 = vmul.f32 %v676, %v676
          %v681 = vmul.f32 %v677, %v677
          %v682 = vmul.f32 %v678, %v678
          %683 = vadd.xlane.f32.xlu0 %v679
          %v684 = vpop.xlane.xlu0 %683
          %685 = vadd.xlane.f32.xlu0 %v680
          %v686 = vpop.xlane.xlu0 %685
          %687 = vadd.xlane.f32.xlu0 %v681
          %v688 = vpop.xlane.xlu0 %687
          %689 = vadd.xlane.f32.xlu0 %v682
          %v690 = vpop.xlane.xlu0 %689
          %v691 = vmul.f32 %v684, %v670
          %v692 = vmul.f32 %v686, %v670
          %v693 = vmul.f32 %v688, %v670
          %v694 = vmul.f32 %v690, %v670
          %v695 = vadd.f32 %v691, 1e-12
          %v696 = vadd.f32 %v692, 1e-12
          %v697 = vadd.f32 %v693, 1e-12
          %v698 = vadd.f32 %v694, 1e-12
          %v699 = vrsqrt.pop %v695
          %v700 = vmul.f32 %v699, %v695
          %v701 = vmul.f32 %v700, %v699
          %v702 = vmul.f32 0.5, %v701
          %v703 = vsub.f32 1.5, %v702
          %v704 = vmul.f32 %v699, %v703
          %vm705 = vweird.f32 %v695
          %vm706 = vweird.f32 %v699
          %vm707 = vmor %vm705, %vm706
          %v708 = vsel %vm707, %v699, %v704
          %v709 = vrsqrt.pop %v696
          %v710 = vmul.f32 %v709, %v696
          %v711 = vmul.f32 %v710, %v709
          %v712 = vmul.f32 0.5, %v711
          %v713 = vsub.f32 1.5, %v712
          %v714 = vmul.f32 %v709, %v713
          %vm715 = vweird.f32 %v696
          %vm716 = vweird.f32 %v709
          %vm717 = vmor %vm715, %vm716
          %v718 = vsel %vm717, %v709, %v714
          %v719 = vrsqrt.pop %v697
          %v720 = vmul.f32 %v719, %v697
          %v721 = vmul.f32 %v720, %v719
          %v722 = vmul.f32 0.5, %v721
          %v723 = vsub.f32 1.5, %v722
          %v724 = vmul.f32 %v719, %v723
          %vm725 = vweird.f32 %v697
          %vm726 = vweird.f32 %v719
          %vm727 = vmor %vm725, %vm726
          %v728 = vsel %vm727, %v719, %v724
          %v729 = vrsqrt.pop %v698
          %v730 = vmul.f32 %v729, %v698
          %v731 = vmul.f32 %v730, %v729
          %v732 = vmul.f32 0.5, %v731
          %v733 = vsub.f32 1.5, %v732
          %v734 = vmul.f32 %v729, %v733
          %vm735 = vweird.f32 %v698
          %vm736 = vweird.f32 %v729
          %vm737 = vmor %vm735, %vm736
          %v738 = vsel %vm737, %v729, %v734
          %v739 = vmul.f32 %v675, %v708
          %v740 = vmul.f32 %v676, %v718
          %v741 = vmul.f32 %v677, %v728
          %v742 = vmul.f32 %v678, %v738
          %v744 = vperm.slane %v654, 0
          %v746 = vmul.f32 %v739, %v744
          %v747 = vmul.f32 %v740, %v744
          %v748 = vmul.f32 %v741, %v744
          %v749 = vmul.f32 %v742, %v744
          %v751 = vperm.slane %v655, 0
          %v753 = vadd.f32 %v746, %v751
          %v754 = vadd.f32 %v747, %v751
          %v755 = vadd.f32 %v748, %v751
          %v756 = vadd.f32 %v749, %v751
          %757 = vst [vmem:[#allocation2] sm:$0xff] %v753
          %758 = vst [vmem:[#allocation2 + $0x8] sm:$0xff] %v754
          %759 = vst [vmem:[#allocation2 + $0x10] sm:$0xff] %v755
          %760 = vst [vmem:[#allocation2 + $0x18] sm:$0xff] %v756
          %761 = vst [vmem:[#allocation3] sm:$0xff] 0.0
          %762 = vst [vmem:[#allocation3 + $0x8] sm:$0xff] 0.0
          %763 = vst [vmem:[#allocation3 + $0x10] sm:$0xff] 0.0
          %764 = vst [vmem:[#allocation3 + $0x18] sm:$0xff] 0.0
        $region80: #{bert_lora_classifier_forward.11} parent=67 // pred_fallthru
          _
        %v765 = vld [vmem:[#allocation2] sm:$0xff]
        %v766 = vld [vmem:[#allocation2 + $0x8] sm:$0xff]
        %v767 = vld [vmem:[#allocation2 + $0x10] sm:$0xff]
        %v768 = vld [vmem:[#allocation2 + $0x18] sm:$0xff]
        %v769 = vpack.c.bf16 %v766, %v765
        %v770 = vpack.c.bf16 %v768, %v767
        %v771 = vld [vmem:[%s521] sm:$0xff]
        %v772 = vld [vmem:[%s521 + $0x8] sm:$0xff]
        %v773 = vld [vmem:[%s521 + $0x10] sm:$0xff]
        %v774 = vld [vmem:[%s521 + $0x18] sm:$0xff]
        %v775 = vld [vmem:[%s521 + $0x20] sm:$0xff]
        %v776 = vld [vmem:[%s521 + $0x28] sm:$0xff]
        %v777 = vld [vmem:[%s521 + $0x30] sm:$0xff]
        %v778 = vld [vmem:[%s521 + $0x38] sm:$0xff]
        %v779 = vld [vmem:[%s521 + $0x40] sm:$0xff]
        %v780 = vld [vmem:[%s521 + $0x48] sm:$0xff]
        %v781 = vld [vmem:[%s521 + $0x50] sm:$0xff]
        %v782 = vld [vmem:[%s521 + $0x58] sm:$0xff]
        %v783 = vld [vmem:[%s521 + $0x60] sm:$0xff]
        %v784 = vld [vmem:[%s521 + $0x68] sm:$0xff]
        %v785 = vld [vmem:[%s521 + $0x70] sm:$0xff]
        %v786 = vld [vmem:[%s521 + $0x78] sm:$0xff]
        %v787 = vld [vmem:[%s526] sm:$0x3]
        %v789 = vperm.slane %v787, 0
        %v790 = vperm.slane %v787, 1
        %v809 = vunpack.c.l.b16 %v771
        %v810 = vunpack.c.h.b16 %v771
        %v811 = vunpack.c.l.b16 %v772
        %v812 = vunpack.c.h.b16 %v772
        %v813 = vunpack.c.l.b16 %v773
        %v814 = vunpack.c.h.b16 %v773
        %v815 = vunpack.c.l.b16 %v774
        %v816 = vunpack.c.h.b16 %v774
        %v817 = vunpack.c.l.b16 %v775
        %v818 = vunpack.c.h.b16 %v775
        %v819 = vunpack.c.l.b16 %v776
        %v820 = vunpack.c.h.b16 %v776
        %v821 = vunpack.c.l.b16 %v777
        %v822 = vunpack.c.h.b16 %v777
        %v823 = vunpack.c.l.b16 %v778
        %v824 = vunpack.c.h.b16 %v778
        %v825 = vunpack.c.l.b16 %v779
        %v826 = vunpack.c.h.b16 %v779
        %v827 = vunpack.c.l.b16 %v780
        %v828 = vunpack.c.h.b16 %v780
        %v829 = vunpack.c.l.b16 %v781
        %v830 = vunpack.c.h.b16 %v781
        %v831 = vunpack.c.l.b16 %v782
        %v832 = vunpack.c.h.b16 %v782
        %v833 = vunpack.c.l.b16 %v783
        %v834 = vunpack.c.h.b16 %v783
        %v835 = vunpack.c.l.b16 %v784
        %v836 = vunpack.c.h.b16 %v784
        %v837 = vunpack.c.l.b16 %v785
        %v838 = vunpack.c.h.b16 %v785
        %v839 = vunpack.c.l.b16 %v786
        %v840 = vunpack.c.h.b16 %v786
        %v841 = vpack.c.b16 %v811, %v809
        %v842 = vpack.c.b16 %v812, %v810
        %v843 = vpack.c.b16 %v815, %v813
        %v844 = vpack.c.b16 %v816, %v814
        %v845 = vpack.c.b16 %v819, %v817
        %v846 = vpack.c.b16 %v820, %v818
        %v847 = vpack.c.b16 %v823, %v821
        %v848 = vpack.c.b16 %v824, %v822
        %v849 = vpack.c.b16 %v827, %v825
        %v850 = vpack.c.b16 %v828, %v826
        %v851 = vpack.c.b16 %v831, %v829
        %v852 = vpack.c.b16 %v832, %v830
        %v853 = vpack.c.b16 %v835, %v833
        %v854 = vpack.c.b16 %v836, %v834
        %v855 = vpack.c.b16 %v839, %v837
        %v856 = vpack.c.b16 %v840, %v838
        %873 = vmatpush.bf16.msra.mxu0 %v855
        %874 = vmatpush.bf16.msra.mxu0 %v853
        %875 = vmatpush.bf16.msra.mxu0 %v851
        %876 = vmatpush.bf16.msra.mxu0 %v849
        %877 = vmatpush.bf16.msra.mxu0 %v847
        %878 = vmatpush.bf16.msra.mxu0 %v845
        %879 = vmatpush.bf16.msra.mxu0 %v843
        %880 = vmatpush.bf16.msra.mxu0 %v841
        %881 = vmatmul.bf16.gmra.mxu0 %v769
        %v882 = vpop.f32.mrf.mxu0
        %v883 = vadd.f32 %v789, %v882
        %v884 = vpop.f32.mrf.mxu0
        %v885 = vadd.f32 %v789, %v884
        %886 = vmatmul.bf16.gmra.mxu0 %v770
        %v887 = vpop.f32.mrf.mxu0
        %v888 = vadd.f32 %v789, %v887
        %v889 = vpop.f32.mrf.mxu0
        %v890 = vadd.f32 %v789, %v889
        %891 = vdwg.mxu0
        %892 = vmatpush.bf16.msra.mxu0 %v856
        %893 = vmatpush.bf16.msra.mxu0 %v854
        %894 = vmatpush.bf16.msra.mxu0 %v852
        %895 = vmatpush.bf16.msra.mxu0 %v850
        %896 = vmatpush.bf16.msra.mxu0 %v848
        %897 = vmatpush.bf16.msra.mxu0 %v846
        %898 = vmatpush.bf16.msra.mxu0 %v844
        %899 = vmatpush.bf16.msra.mxu0 %v842
        %900 = vmatmul.bf16.gmra.mxu0 %v769
        %v901 = vpop.f32.mrf.mxu0
        %v902 = vadd.f32 %v790, %v901
        %v903 = vpop.f32.mrf.mxu0
        %v904 = vadd.f32 %v790, %v903
        %905 = vmatmul.bf16.gmra.mxu0 %v770
        %v906 = vpop.f32.mrf.mxu0
        %v907 = vadd.f32 %v790, %v906
        %v908 = vpop.f32.mrf.mxu0
        %v909 = vadd.f32 %v790, %v908
        %910 = vdwg.mxu0
        %v911 = vmul.f32 %v883, %v883
        %v912 = vmul.f32 %v902, %v902
        %v913 = vmul.f32 %v885, %v885
        %v914 = vmul.f32 %v904, %v904
        %v915 = vmul.f32 %v888, %v888
        %v916 = vmul.f32 %v907, %v907
        %v917 = vmul.f32 %v890, %v890
        %v918 = vmul.f32 %v909, %v909
        %v919 = vmul.f32 %v883, %v911
        %v920 = vmul.f32 %v902, %v912
        %v921 = vmul.f32 %v885, %v913
        %v922 = vmul.f32 %v904, %v914
        %v923 = vmul.f32 %v888, %v915
        %v924 = vmul.f32 %v907, %v916
        %v925 = vmul.f32 %v890, %v917
        %v926 = vmul.f32 %v909, %v918
        %v927 = vmul.f32 %v919, 0.044715
        %v928 = vmul.f32 %v920, 0.044715
        %v929 = vmul.f32 %v921, 0.044715
        %v930 = vmul.f32 %v922, 0.044715
        %v931 = vmul.f32 %v923, 0.044715
        %v932 = vmul.f32 %v924, 0.044715
        %v933 = vmul.f32 %v925, 0.044715
        %v934 = vmul.f32 %v926, 0.044715
        %v935 = vadd.f32 %v883, %v927
        %v936 = vadd.f32 %v902, %v928
        %v937 = vadd.f32 %v885, %v929
        %v938 = vadd.f32 %v904, %v930
        %v939 = vadd.f32 %v888, %v931
        %v940 = vadd.f32 %v907, %v932
        %v941 = vadd.f32 %v890, %v933
        %v942 = vadd.f32 %v909, %v934
        %v943 = vmul.f32 %v935, 0.7978846
        %v944 = vmul.f32 %v936, 0.7978846
        %v945 = vmul.f32 %v937, 0.7978846
        %v946 = vmul.f32 %v938, 0.7978846
        %v947 = vmul.f32 %v939, 0.7978846
        %v948 = vmul.f32 %v940, 0.7978846
        %v949 = vmul.f32 %v941, 0.7978846
        %v950 = vmul.f32 %v942, 0.7978846
        %v951 = vtanh.pop %v943
        %v952 = vtanh.pop %v944
        %v953 = vtanh.pop %v945
        %v954 = vtanh.pop %v946
        %v955 = vtanh.pop %v947
        %v956 = vtanh.pop %v948
        %v957 = vtanh.pop %v949
        %v958 = vtanh.pop %v950
        %v959 = vadd.f32 %v951, 1.0
        %v960 = vadd.f32 %v952, 1.0
        %v961 = vadd.f32 %v953, 1.0
        %v962 = vadd.f32 %v954, 1.0
        %v963 = vadd.f32 %v955, 1.0
        %v964 = vadd.f32 %v956, 1.0
        %v965 = vadd.f32 %v957, 1.0
        %v966 = vadd.f32 %v958, 1.0
        %v967 = vmul.f32 %v959, 0.5
        %v968 = vmul.f32 %v960, 0.5
        %v969 = vmul.f32 %v961, 0.5
        %v970 = vmul.f32 %v962, 0.5
        %v971 = vmul.f32 %v963, 0.5
        %v972 = vmul.f32 %v964, 0.5
        %v973 = vmul.f32 %v965, 0.5
        %v974 = vmul.f32 %v966, 0.5
        %v975 = vmul.f32 %v883, %v967
        %v976 = vmul.f32 %v902, %v968
        %v977 = vmul.f32 %v885, %v969
        %v978 = vmul.f32 %v904, %v970
        %v979 = vmul.f32 %v888, %v971
        %v980 = vmul.f32 %v907, %v972
        %v981 = vmul.f32 %v890, %v973
        %v982 = vmul.f32 %v909, %v974
        %v983 = vld [vmem:[#allocation3] sm:$0xff]
        %v984 = vld [vmem:[#allocation3 + $0x8] sm:$0xff]
        %v985 = vld [vmem:[#allocation3 + $0x10] sm:$0xff]
        %v986 = vld [vmem:[#allocation3 + $0x18] sm:$0xff]
        %v987 = vpack.c.bf16 %v977, %v975
        %v988 = vpack.c.bf16 %v978, %v976
        %v989 = vpack.c.bf16 %v981, %v979
        %v990 = vpack.c.bf16 %v982, %v980
        %v991 = vld [vmem:[#allocation6] sm:$0xf]
        %v992 = vld [vmem:[#allocation6 + $0x4] sm:$0xf]
        %v993 = vld [vmem:[#allocation6 + $0x8] sm:$0xf]
        %v994 = vld [vmem:[#allocation6 + $0xc] sm:$0xf]
        %v995 = vld [vmem:[#allocation6 + $0x10] sm:$0xf]
        %v996 = vld [vmem:[#allocation6 + $0x14] sm:$0xf]
        %v997 = vld [vmem:[#allocation6 + $0x18] sm:$0xf]
        %v998 = vld [vmem:[#allocation6 + $0x1c] sm:$0xf]
        %v999 = vld [vmem:[#allocation6 + $0x20] sm:$0xf]
        %v1000 = vld [vmem:[#allocation6 + $0x24] sm:$0xf]
        %v1001 = vld [vmem:[#allocation6 + $0x28] sm:$0xf]
        %v1002 = vld [vmem:[#allocation6 + $0x2c] sm:$0xf]
        %v1003 = vld [vmem:[#allocation6 + $0x30] sm:$0xf]
        %v1004 = vld [vmem:[#allocation6 + $0x34] sm:$0xf]
        %v1005 = vld [vmem:[#allocation6 + $0x38] sm:$0xf]
        %v1006 = vld [vmem:[#allocation6 + $0x3c] sm:$0xf]
        %v1007 = vld [vmem:[#allocation6 + $0x40] sm:$0xf]
        %v1008 = vld [vmem:[#allocation6 + $0x44] sm:$0xf]
        %v1009 = vld [vmem:[#allocation6 + $0x48] sm:$0xf]
        %v1010 = vld [vmem:[#allocation6 + $0x4c] sm:$0xf]
        %v1011 = vld [vmem:[#allocation6 + $0x50] sm:$0xf]
        %v1012 = vld [vmem:[#allocation6 + $0x54] sm:$0xf]
        %v1013 = vld [vmem:[#allocation6 + $0x58] sm:$0xf]
        %v1014 = vld [vmem:[#allocation6 + $0x5c] sm:$0xf]
        %v1015 = vld [vmem:[#allocation6 + $0x60] sm:$0xf]
        %v1016 = vld [vmem:[#allocation6 + $0x64] sm:$0xf]
        %v1017 = vld [vmem:[#allocation6 + $0x68] sm:$0xf]
        %v1018 = vld [vmem:[#allocation6 + $0x6c] sm:$0xf]
        %v1019 = vld [vmem:[#allocation6 + $0x70] sm:$0xf]
        %v1020 = vld [vmem:[#allocation6 + $0x74] sm:$0xf]
        %v1021 = vld [vmem:[#allocation6 + $0x78] sm:$0xf]
        %v1022 = vld [vmem:[#allocation6 + $0x7c] sm:$0xf]
        %v1055 = vunpack.c.l.b16 %v991
        %v1056 = vunpack.c.l.b16 %v992
        %v1057 = vunpack.c.l.b16 %v993
        %v1058 = vunpack.c.l.b16 %v994
        %v1059 = vunpack.c.l.b16 %v995
        %v1060 = vunpack.c.l.b16 %v996
        %v1061 = vunpack.c.l.b16 %v997
        %v1062 = vunpack.c.l.b16 %v998
        %v1063 = vunpack.c.l.b16 %v999
        %v1064 = vunpack.c.l.b16 %v1000
        %v1065 = vunpack.c.l.b16 %v1001
        %v1066 = vunpack.c.l.b16 %v1002
        %v1067 = vunpack.c.l.b16 %v1003
        %v1068 = vunpack.c.l.b16 %v1004
        %v1069 = vunpack.c.l.b16 %v1005
        %v1070 = vunpack.c.l.b16 %v1006
        %v1071 = vunpack.c.l.b16 %v1007
        %v1072 = vunpack.c.l.b16 %v1008
        %v1073 = vunpack.c.l.b16 %v1009
        %v1074 = vunpack.c.l.b16 %v1010
        %v1075 = vunpack.c.l.b16 %v1011
        %v1076 = vunpack.c.l.b16 %v1012
        %v1077 = vunpack.c.l.b16 %v1013
        %v1078 = vunpack.c.l.b16 %v1014
        %v1079 = vunpack.c.l.b16 %v1015
        %v1080 = vunpack.c.l.b16 %v1016
        %v1081 = vunpack.c.l.b16 %v1017
        %v1082 = vunpack.c.l.b16 %v1018
        %v1083 = vunpack.c.l.b16 %v1019
        %v1084 = vunpack.c.l.b16 %v1020
        %v1085 = vunpack.c.l.b16 %v1021
        %v1086 = vunpack.c.l.b16 %v1022
        %v1087 = vpack.c.b16 %v1056, %v1055
        %v1088 = vpack.c.b16 %v1058, %v1057
        %v1089 = vpack.c.b16 %v1060, %v1059
        %v1090 = vpack.c.b16 %v1062, %v1061
        %v1091 = vpack.c.b16 %v1064, %v1063
        %v1092 = vpack.c.b16 %v1066, %v1065
        %v1093 = vpack.c.b16 %v1068, %v1067
        %v1094 = vpack.c.b16 %v1070, %v1069
        %v1095 = vpack.c.b16 %v1072, %v1071
        %v1096 = vpack.c.b16 %v1074, %v1073
        %v1097 = vpack.c.b16 %v1076, %v1075
        %v1098 = vpack.c.b16 %v1078, %v1077
        %v1099 = vpack.c.b16 %v1080, %v1079
        %v1100 = vpack.c.b16 %v1082, %v1081
        %v1101 = vpack.c.b16 %v1084, %v1083
        %v1102 = vpack.c.b16 %v1086, %v1085
        %1119 = vmatpush.bf16.msra.mxu0 %v1094
        %1120 = vmatpush.bf16.msra.mxu0 %v1093
        %1121 = vmatpush.bf16.msra.mxu0 %v1092
        %1122 = vmatpush.bf16.msra.mxu0 %v1091
        %1123 = vmatpush.bf16.msra.mxu0 %v1090
        %1124 = vmatpush.bf16.msra.mxu0 %v1089
        %1125 = vmatpush.bf16.msra.mxu0 %v1088
        %1126 = vmatpush.bf16.msra.mxu0 %v1087
        %1127 = vmatmul.bf16.gmra.mxu0 %v987
        %v1128 = vpop.f32.mrf.mxu0
        %v1129 = vadd.f32 0.0, %v1128
        %v1130 = vpop.f32.mrf.mxu0
        %v1131 = vadd.f32 0.0, %v1130
        %1132 = vmatmul.bf16.gmra.mxu0 %v989
        %v1133 = vpop.f32.mrf.mxu0
        %v1134 = vadd.f32 0.0, %v1133
        %v1135 = vpop.f32.mrf.mxu0
        %v1136 = vadd.f32 0.0, %v1135
        %1137 = vdwg.mxu0
        %1138 = vmatpush.bf16.msra.mxu0 %v1102
        %1139 = vmatpush.bf16.msra.mxu0 %v1101
        %1140 = vmatpush.bf16.msra.mxu0 %v1100
        %1141 = vmatpush.bf16.msra.mxu0 %v1099
        %1142 = vmatpush.bf16.msra.mxu0 %v1098
        %1143 = vmatpush.bf16.msra.mxu0 %v1097
        %1144 = vmatpush.bf16.msra.mxu0 %v1096
        %1145 = vmatpush.bf16.msra.mxu0 %v1095
        %1146 = vmatmul.bf16.gmra.mxu0 %v988
        %v1147 = vpop.f32.mrf.mxu0
        %v1148 = vadd.f32 %v1129, %v1147
        %v1149 = vpop.f32.mrf.mxu0
        %v1150 = vadd.f32 %v1131, %v1149
        %1151 = vmatmul.bf16.gmra.mxu0 %v990
        %v1152 = vpop.f32.mrf.mxu0
        %v1153 = vadd.f32 %v1134, %v1152
        %v1154 = vpop.f32.mrf.mxu0
        %v1155 = vadd.f32 %v1136, %v1154
        %1156 = vdwg.mxu0
        %v1157 = vadd.f32 %v983, %v1148
        %v1158 = vadd.f32 %v984, %v1150
        %v1159 = vadd.f32 %v985, %v1153
        %v1160 = vadd.f32 %v986, %v1155
        %1161 = vst [vmem:[#allocation3] sm:$0xff] %v1157
        %1162 = vst [vmem:[#allocation3 + $0x8] sm:$0xff] %v1158
        %1163 = vst [vmem:[#allocation3 + $0x10] sm:$0xff] %v1159
        %1164 = vst [vmem:[#allocation3 + $0x18] sm:$0xff] %v1160
        // Predicated region
        $region81: #{bert_lora_classifier_forward.11} parent=67 // pred_check
          %p1165 = pneg %p535
        $region82: #{bert_lora_classifier_forward.11} parent=67 // pred_check_branch
          %1167 = sbr.rel (%p1165) target = $region84
        $region83: #{bert_lora_classifier_forward.11} parent=67 // pred_region
          %v1168 = vld [vmem:[#allocation2] sm:$0xff]
          %v1169 = vld [vmem:[#allocation2 + $0x8] sm:$0xff]
          %v1170 = vld [vmem:[#allocation2 + $0x10] sm:$0xff]
          %v1171 = vld [vmem:[#allocation2 + $0x18] sm:$0xff]
          %v1172 = vld [vmem:[#allocation3] sm:$0xff]
          %v1173 = vld [vmem:[#allocation3 + $0x8] sm:$0xff]
          %v1174 = vld [vmem:[#allocation3 + $0x10] sm:$0xff]
          %v1175 = vld [vmem:[#allocation3 + $0x18] sm:$0xff]
          %v1176 = vadd.f32 %v1168, %v1172
          %v1177 = vadd.f32 %v1169, %v1173
          %v1178 = vadd.f32 %v1170, %v1174
          %v1179 = vadd.f32 %v1171, %v1175
          %v1180 = vld [vmem:[%s9] sm:$0x1]
          %v1182 = vperm.slane %v1180, 0
          %v1184 = vadd.f32 %v1176, %v1182
          %v1185 = vadd.f32 %v1177, %v1182
          %v1186 = vadd.f32 %v1178, %v1182
          %v1187 = vadd.f32 %v1179, %v1182
          %v1188 = vld [vmem:[%s10] sm:$0x1]
          %v1189 = vld [vmem:[%s11] sm:$0x1]
          %1190 = vadd.xlane.f32.xlu0 %v1184
          %v1191 = vpop.xlane.xlu0 %1190
          %1192 = vadd.xlane.f32.xlu0 %v1185
          %v1193 = vpop.xlane.xlu0 %1192
          %1194 = vadd.xlane.f32.xlu0 %v1186
          %v1195 = vpop.xlane.xlu0 %1194
          %1196 = vadd.xlane.f32.xlu0 %v1187
          %v1197 = vpop.xlane.xlu0 %1196
          %v1198 = vrcp.pop 128.0
          %v1199 = vmul.f32 128.0, %v1198
          %v1200 = vsub.f32 1.0, %v1199
          %v1201 = vmul.f32 %v1198, %v1200
          %v1202 = vadd.f32 %v1198, %v1201
          %vm1203 = vweird.f32 %v1198
          %v1204 = vsel %vm1203, %v1198, %v1202
          %v1205 = vmul.f32 %v1191, %v1204
          %v1206 = vmul.f32 %v1193, %v1204
          %v1207 = vmul.f32 %v1195, %v1204
          %v1208 = vmul.f32 %v1197, %v1204
          %v1209 = vsub.f32 %v1184, %v1205
          %v1210 = vsub.f32 %v1185, %v1206
          %v1211 = vsub.f32 %v1186, %v1207
          %v1212 = vsub.f32 %v1187, %v1208
          %v1213 = vmul.f32 %v1209, %v1209
          %v1214 = vmul.f32 %v1210, %v1210
          %v1215 = vmul.f32 %v1211, %v1211
          %v1216 = vmul.f32 %v1212, %v1212
          %1217 = vadd.xlane.f32.xlu0 %v1213
          %v1218 = vpop.xlane.xlu0 %1217
          %1219 = vadd.xlane.f32.xlu0 %v1214
          %v1220 = vpop.xlane.xlu0 %1219
          %1221 = vadd.xlane.f32.xlu0 %v1215
          %v1222 = vpop.xlane.xlu0 %1221
          %1223 = vadd.xlane.f32.xlu0 %v1216
          %v1224 = vpop.xlane.xlu0 %1223
          %v1225 = vmul.f32 %v1218, %v1204
          %v1226 = vmul.f32 %v1220, %v1204
          %v1227 = vmul.f32 %v1222, %v1204
          %v1228 = vmul.f32 %v1224, %v1204
          %v1229 = vadd.f32 %v1225, 1e-12
          %v1230 = vadd.f32 %v1226, 1e-12
          %v1231 = vadd.f32 %v1227, 1e-12
          %v1232 = vadd.f32 %v1228, 1e-12
          %v1233 = vrsqrt.pop %v1229
          %v1234 = vmul.f32 %v1233, %v1229
          %v1235 = vmul.f32 %v1234, %v1233
          %v1236 = vmul.f32 0.5, %v1235
          %v1237 = vsub.f32 1.5, %v1236
          %v1238 = vmul.f32 %v1233, %v1237
          %vm1239 = vweird.f32 %v1229
          %vm1240 = vweird.f32 %v1233
          %vm1241 = vmor %vm1239, %vm1240
          %v1242 = vsel %vm1241, %v1233, %v1238
          %v1243 = vrsqrt.pop %v1230
          %v1244 = vmul.f32 %v1243, %v1230
          %v1245 = vmul.f32 %v1244, %v1243
          %v1246 = vmul.f32 0.5, %v1245
          %v1247 = vsub.f32 1.5, %v1246
          %v1248 = vmul.f32 %v1243, %v1247
          %vm1249 = vweird.f32 %v1230
          %vm1250 = vweird.f32 %v1243
          %vm1251 = vmor %vm1249, %vm1250
          %v1252 = vsel %vm1251, %v1243, %v1248
          %v1253 = vrsqrt.pop %v1231
          %v1254 = vmul.f32 %v1253, %v1231
          %v1255 = vmul.f32 %v1254, %v1253
          %v1256 = vmul.f32 0.5, %v1255
          %v1257 = vsub.f32 1.5, %v1256
          %v1258 = vmul.f32 %v1253, %v1257
          %vm1259 = vweird.f32 %v1231
          %vm1260 = vweird.f32 %v1253
          %vm1261 = vmor %vm1259, %vm1260
          %v1262 = vsel %vm1261, %v1253, %v1258
          %v1263 = vrsqrt.pop %v1232
          %v1264 = vmul.f32 %v1263, %v1232
          %v1265 = vmul.f32 %v1264, %v1263
          %v1266 = vmul.f32 0.5, %v1265
          %v1267 = vsub.f32 1.5, %v1266
          %v1268 = vmul.f32 %v1263, %v1267
          %vm1269 = vweird.f32 %v1232
          %vm1270 = vweird.f32 %v1263
          %vm1271 = vmor %vm1269, %vm1270
          %v1272 = vsel %vm1271, %v1263, %v1268
          %v1273 = vmul.f32 %v1209, %v1242
          %v1274 = vmul.f32 %v1210, %v1252
          %v1275 = vmul.f32 %v1211, %v1262
          %v1276 = vmul.f32 %v1212, %v1272
          %v1278 = vperm.slane %v1188, 0
          %v1280 = vmul.f32 %v1273, %v1278
          %v1281 = vmul.f32 %v1274, %v1278
          %v1282 = vmul.f32 %v1275, %v1278
          %v1283 = vmul.f32 %v1276, %v1278
          %v1285 = vperm.slane %v1189, 0
          %v1287 = vadd.f32 %v1280, %v1285
          %v1288 = vadd.f32 %v1281, %v1285
          %v1289 = vadd.f32 %v1282, %v1285
          %v1290 = vadd.f32 %v1283, %v1285
          %v1291 = vpack.c.bf16 %v1287, %v1287
          %v1292 = vpack.c.bf16 %v1288, %v1288
          %v1293 = vpack.c.bf16 %v1289, %v1289
          %v1294 = vpack.c.bf16 %v1290, %v1290
          %1295 = vst [vmem:[%s533] sm:$0xf] %v1291
          %1296 = vst [vmem:[%s533 + $0x4] sm:$0xf] %v1292
          %1297 = vst [vmem:[%s533 + $0x8] sm:$0xf] %v1293
          %1298 = vst [vmem:[%s533 + $0xc] sm:$0xf] %v1294
        $region84: #{bert_lora_classifier_forward.11} parent=67 // pred_fallthru
          _
        %s1299 = smul.u32 4, %s29
        %p1300 = scmp.lt.s32.totalorder %s1299, 7
        %s1301 = scalar_select %p1300, %s1299, 7
        %s1302 = smul.addr %s1301, 4
        %s1303 = scalar_lea.vmem %s12, %s1302
        // Predicated region
        $region85: #{bert_lora_classifier_forward.11} parent=67 // pred_check
          %p1304 = pneg %p332
        $region86: #{bert_lora_classifier_forward.11} parent=67 // pred_check_branch
          %1306 = sbr.rel (%p1304) target = $region88
        $region87: #{bert_lora_classifier_forward.11} parent=67 // pred_region
          %s1307 = smul.u32 4, %s29
        $region88: #{bert_lora_classifier_forward.11} parent=67 // pred_fallthru
          _
      $region68: #{bert_lora_classifier_forward.11} parent=5 // pred_fallthru
        _
      %p1308 = scmp.le.s32.totalorder 2, %s20
      // Predicated region
      $region89: #{bert_lora_classifier_forward.11} parent=5 // pred_check
        %p1309 = pneg %p1308
      $region90: #{bert_lora_classifier_forward.11} parent=5 // pred_check_branch
        %1311 = sbr.rel (%p1309) target = $region92
      $region91: #{bert_lora_classifier_forward.11} parent=5 // pred_region
        %s1312 = ssub.s32 %s20, 2
        // Predicated region
        $region93: #{bert_lora_classifier_forward.11} parent=91 // pred_check
          %p1313 = pneg %p338
        $region94: #{bert_lora_classifier_forward.11} parent=91 // pred_check_branch
          %1315 = sbr.rel (%p1313) target = $region96
        $region95: #{bert_lora_classifier_forward.11} parent=91 // pred_region
          %s1316 = smul.u32 4, %s31
          %p1317 = scmp.lt.s32.totalorder %s1316, 7
          %s1318 = scalar_select %p1317, %s1316, 7
          %s1319 = smul.addr %s1318, 4
          %s1320 = scalar_lea.vmem %s12, %s1319
        $region96: #{bert_lora_classifier_forward.11} parent=91 // pred_fallthru
          _
      $region92: #{bert_lora_classifier_forward.11} parent=5 // pred_fallthru
        _
    $region6: #{bert_lora_classifier_forward.11} parent=1 // loop_footer
      %s24 = sadd.s32 1, %s20
    $region7: #{bert_lora_classifier_forward.11} parent=1 // loop_footer_branch
      %19 = sbr.rel target = $region3
    $region8: #{bert_lora_classifier_forward.11} parent=1 // loop_exit
      _
    %1321 = vsyncpa [#allocation5], 1
    %s1322 = scalar_lea.sflag [#allocation5], 1
    %1323 = vsyncpa %s1322, 1
    %1324 = vsyncpa [#allocation7], 1

// kernel: bert_lora_classifier_forward.12
$region0: #{bert_lora_classifier_forward.12}
  #allocation0 [shape = 'u32[]', space=smem, size = 0x4, offset = 0x4, fixed_abs, tag = 'smem constant byte address 0x4 - core index']
  #allocation1 [shape = 'u32[72,128]{1,0:T(1,128)}', space=vmem, size = 0x9000, scoped, tag = 'internal scratch']
  %s0 = inlined_call_operand.vmem [shape: bf16[8,8,128], index: 0, kind: input, shape index: {}]
  %s1 = inlined_call_operand.vmem [shape: f32[8,8], index: 1, kind: input, shape index: {}]
  %s2 = inlined_call_operand.vmem [shape: f32[8,128], index: 2, kind: output, shape index: {}]
  %s3 = sld [smem:[#allocation0]]
  $region18: #{bert_lora_classifier_forward.12} parent=0
    _
  %s5 = ssub.s32 1, %s3
  %s6 = scalar_select 0, %s5, %s3
  // Predicated region
  $region2: #{bert_lora_classifier_forward.12} parent=0 // pred_check
    _
  $region3: #{bert_lora_classifier_forward.12} parent=0 // pred_check_branch
    %8 = sbr.rel (0) target = $region5
  $region4: #{bert_lora_classifier_forward.12} parent=0 // pred_region
    _
  $region5: #{bert_lora_classifier_forward.12} parent=0 // pred_fallthru
    _
  // Predicated region
  $region6: #{bert_lora_classifier_forward.12} parent=0 // pred_check
    _
  $region7: #{bert_lora_classifier_forward.12} parent=0 // pred_check_branch
    %10 = sbr.rel (0) target = $region9
  $region8: #{bert_lora_classifier_forward.12} parent=0 // pred_region
    _
  $region9: #{bert_lora_classifier_forward.12} parent=0 // pred_fallthru
    _
  %v11 = vld [vmem:[%s0] sm:$0xf]
  %v12 = vld [vmem:[%s0 + $0x4] sm:$0xf]
  %v13 = vld [vmem:[%s0 + $0x8] sm:$0xf]
  %v14 = vld [vmem:[%s0 + $0xc] sm:$0xf]
  %v15 = vld [vmem:[%s0 + $0x10] sm:$0xf]
  %v16 = vld [vmem:[%s0 + $0x14] sm:$0xf]
  %v17 = vld [vmem:[%s0 + $0x18] sm:$0xf]
  %v18 = vld [vmem:[%s0 + $0x1c] sm:$0xf]
  %v19 = vunpack.c.l.bf16 %v11
  %v20 = vunpack.c.l.bf16 %v12
  %v21 = vunpack.c.l.bf16 %v13
  %v22 = vunpack.c.l.bf16 %v14
  %v23 = vunpack.c.l.bf16 %v15
  %v24 = vunpack.c.l.bf16 %v16
  %v25 = vunpack.c.l.bf16 %v17
  %v26 = vunpack.c.l.bf16 %v18
  %v27 = vld [vmem:[%s1] sm:$0xff]
  %v28 = vperm.slane %v27, 0
  %v29 = vlaneseq
  %v30 = vshrl.u32 %v29, 7
  %32 = vset.pattern.permute.xlu0 %v30
  %33 = vperm.xlu0 %32, %v28
  %v34 = vpop.permute.xlu0 %33
  %v35 = vperm.slane %v27, 1
  %v36 = vlaneseq
  %v37 = vshrl.u32 %v36, 7
  %39 = vset.pattern.permute.xlu0 %v37
  %40 = vperm.xlu0 %39, %v35
  %v41 = vpop.permute.xlu0 %40
  %v42 = vperm.slane %v27, 2
  %v43 = vlaneseq
  %v44 = vshrl.u32 %v43, 7
  %46 = vset.pattern.permute.xlu0 %v44
  %47 = vperm.xlu0 %46, %v42
  %v48 = vpop.permute.xlu0 %47
  %v49 = vperm.slane %v27, 3
  %v50 = vlaneseq
  %v51 = vshrl.u32 %v50, 7
  %53 = vset.pattern.permute.xlu0 %v51
  %54 = vperm.xlu0 %53, %v49
  %v55 = vpop.permute.xlu0 %54
  %v56 = vperm.slane %v27, 4
  %v57 = vlaneseq
  %v58 = vshrl.u32 %v57, 7
  %60 = vset.pattern.permute.xlu0 %v58
  %61 = vperm.xlu0 %60, %v56
  %v62 = vpop.permute.xlu0 %61
  %v63 = vperm.slane %v27, 5
  %v64 = vlaneseq
  %v65 = vshrl.u32 %v64, 7
  %67 = vset.pattern.permute.xlu0 %v65
  %68 = vperm.xlu0 %67, %v63
  %v69 = vpop.permute.xlu0 %68
  %v70 = vperm.slane %v27, 6
  %v71 = vlaneseq
  %v72 = vshrl.u32 %v71, 7
  %74 = vset.pattern.permute.xlu0 %v72
  %75 = vperm.xlu0 %74, %v70
  %v76 = vpop.permute.xlu0 %75
  %v77 = vperm.slane %v27, 7
  %v78 = vlaneseq
  %v79 = vshrl.u32 %v78, 7
  %81 = vset.pattern.permute.xlu0 %v79
  %82 = vperm.xlu0 %81, %v77
  %v83 = vpop.permute.xlu0 %82
  %v84 = vmul.f32 %v19, %v34
  %v85 = vmul.f32 %v20, %v41
  %v86 = vmul.f32 %v21, %v48
  %v87 = vmul.f32 %v22, %v55
  %v88 = vmul.f32 %v23, %v62
  %v89 = vmul.f32 %v24, %v69
  %v90 = vmul.f32 %v25, %v76
  %v91 = vmul.f32 %v26, %v83
  %v92 = vrot.slane %v84, 4
  %v93 = vadd.f32 %v84, %v92
  %v94 = vrot.slane %v93, 2
  %v95 = vadd.f32 %v93, %v94
  %v96 = vrot.slane %v95, 1
  %v97 = vadd.f32 %v95, %v96
  %v98 = vrot.slane %v85, 4
  %v99 = vadd.f32 %v85, %v98
  %v100 = vrot.slane %v99, 2
  %v101 = vadd.f32 %v99, %v100
  %v102 = vrot.slane %v101, 1
  %v103 = vadd.f32 %v101, %v102
  %v104 = vrot.slane %v86, 4
  %v105 = vadd.f32 %v86, %v104
  %v106 = vrot.slane %v105, 2
  %v107 = vadd.f32 %v105, %v106
  %v108 = vrot.slane %v107, 1
  %v109 = vadd.f32 %v107, %v108
  %v110 = vrot.slane %v87, 4
  %v111 = vadd.f32 %v87, %v110
  %v112 = vrot.slane %v111, 2
  %v113 = vadd.f32 %v111, %v112
  %v114 = vrot.slane %v113, 1
  %v115 = vadd.f32 %v113, %v114
  %v116 = vrot.slane %v88, 4
  %v117 = vadd.f32 %v88, %v116
  %v118 = vrot.slane %v117, 2
  %v119 = vadd.f32 %v117, %v118
  %v120 = vrot.slane %v119, 1
  %v121 = vadd.f32 %v119, %v120
  %v122 = vrot.slane %v89, 4
  %v123 = vadd.f32 %v89, %v122
  %v124 = vrot.slane %v123, 2
  %v125 = vadd.f32 %v123, %v124
  %v126 = vrot.slane %v125, 1
  %v127 = vadd.f32 %v125, %v126
  %v128 = vrot.slane %v90, 4
  %v129 = vadd.f32 %v90, %v128
  %v130 = vrot.slane %v129, 2
  %v131 = vadd.f32 %v129, %v130
  %v132 = vrot.slane %v131, 1
  %v133 = vadd.f32 %v131, %v132
  %v134 = vrot.slane %v91, 4
  %v135 = vadd.f32 %v91, %v134
  %v136 = vrot.slane %v135, 2
  %v137 = vadd.f32 %v135, %v136
  %v138 = vrot.slane %v137, 1
  %v139 = vadd.f32 %v137, %v138
  %vm140 = vcmask 64512
  %v141 = vsel %vm140, %v27, 0.0
  %142 = vadd.xlane.f32.xlu0 %v141
  %v143 = vpop.xlane.xlu0 %142
  %v144 = vmax.f32 %v143, 1e-09
  %v146 = vrot.slane %v144, 1
  %v147 = vrot.slane %v144, 2
  %v148 = vrot.slane %v144, 3
  %v149 = vrot.slane %v144, 4
  %v150 = vrot.slane %v144, 5
  %v151 = vrot.slane %v144, 6
  %v152 = vrot.slane %v144, 7
  %v161 = vrcp.pop %v144
  %v162 = vmul.f32 %v144, %v161
  %v163 = vsub.f32 1.0, %v162
  %v164 = vmul.f32 %v161, %v163
  %v165 = vadd.f32 %v161, %v164
  %vm166 = vweird.f32 %v144
  %vm167 = vweird.f32 %v161
  %vm168 = vmor %vm166, %vm167
  %v169 = vsel %vm168, %v161, %v165
  %v170 = vand.u32 2147483647, %v144
  %vm171 = vcmp.eq.f32.partialorder %v170, 8.507059e+37
  %v172 = vand.u32 %v144, 2147483648
  %v173 = vor.u32 1.1754944e-38, %v172
  %v174 = vsel %vm171, %v173, %v169
  %v175 = vmul.f32 %v97, %v174
  %v176 = vrcp.pop %v146
  %v177 = vmul.f32 %v146, %v176
  %v178 = vsub.f32 1.0, %v177
  %v179 = vmul.f32 %v176, %v178
  %v180 = vadd.f32 %v176, %v179
  %vm181 = vweird.f32 %v146
  %vm182 = vweird.f32 %v176
  %vm183 = vmor %vm181, %vm182
  %v184 = vsel %vm183, %v176, %v180
  %v185 = vand.u32 2147483647, %v146
  %vm186 = vcmp.eq.f32.partialorder %v185, 8.507059e+37
  %v187 = vand.u32 %v146, 2147483648
  %v188 = vor.u32 1.1754944e-38, %v187
  %v189 = vsel %vm186, %v188, %v184
  %v190 = vmul.f32 %v103, %v189
  %v191 = vrcp.pop %v147
  %v192 = vmul.f32 %v147, %v191
  %v193 = vsub.f32 1.0, %v192
  %v194 = vmul.f32 %v191, %v193
  %v195 = vadd.f32 %v191, %v194
  %vm196 = vweird.f32 %v147
  %vm197 = vweird.f32 %v191
  %vm198 = vmor %vm196, %vm197
  %v199 = vsel %vm198, %v191, %v195
  %v200 = vand.u32 2147483647, %v147
  %vm201 = vcmp.eq.f32.partialorder %v200, 8.507059e+37
  %v202 = vand.u32 %v147, 2147483648
  %v203 = vor.u32 1.1754944e-38, %v202
  %v204 = vsel %vm201, %v203, %v199
  %v205 = vmul.f32 %v109, %v204
  %v206 = vrcp.pop %v148
  %v207 = vmul.f32 %v148, %v206
  %v208 = vsub.f32 1.0, %v207
  %v209 = vmul.f32 %v206, %v208
  %v210 = vadd.f32 %v206, %v209
  %vm211 = vweird.f32 %v148
  %vm212 = vweird.f32 %v206
  %vm213 = vmor %vm211, %vm212
  %v214 = vsel %vm213, %v206, %v210
  %v215 = vand.u32 2147483647, %v148
  %vm216 = vcmp.eq.f32.partialorder %v215, 8.507059e+37
  %v217 = vand.u32 %v148, 2147483648
  %v218 = vor.u32 1.1754944e-38, %v217
  %v219 = vsel %vm216, %v218, %v214
  %v220 = vmul.f32 %v115, %v219
  %v221 = vrcp.pop %v149
  %v222 = vmul.f32 %v149, %v221
  %v223 = vsub.f32 1.0, %v222
  %v224 = vmul.f32 %v221, %v223
  %v225 = vadd.f32 %v221, %v224
  %vm226 = vweird.f32 %v149
  %vm227 = vweird.f32 %v221
  %vm228 = vmor %vm226, %vm227
  %v229 = vsel %vm228, %v221, %v225
  %v230 = vand.u32 2147483647, %v149
  %vm231 = vcmp.eq.f32.partialorder %v230, 8.507059e+37
  %v232 = vand.u32 %v149, 2147483648
  %v233 = vor.u32 1.1754944e-38, %v232
  %v234 = vsel %vm231, %v233, %v229
  %v235 = vmul.f32 %v121, %v234
  %v236 = vrcp.pop %v150
  %v237 = vmul.f32 %v150, %v236
  %v238 = vsub.f32 1.0, %v237
  %v239 = vmul.f32 %v236, %v238
  %v240 = vadd.f32 %v236, %v239
  %vm241 = vweird.f32 %v150
  %vm242 = vweird.f32 %v236
  %vm243 = vmor %vm241, %vm242
  %v244 = vsel %vm243, %v236, %v240
  %v245 = vand.u32 2147483647, %v150
  %vm246 = vcmp.eq.f32.partialorder %v245, 8.507059e+37
  %v247 = vand.u32 %v150, 2147483648
  %v248 = vor.u32 1.1754944e-38, %v247
  %v249 = vsel %vm246, %v248, %v244
  %v250 = vmul.f32 %v127, %v249
  %v251 = vrcp.pop %v151
  %v252 = vmul.f32 %v151, %v251
  %v253 = vsub.f32 1.0, %v252
  %v254 = vmul.f32 %v251, %v253
  %v255 = vadd.f32 %v251, %v254
  %vm256 = vweird.f32 %v151
  %vm257 = vweird.f32 %v251
  %vm258 = vmor %vm256, %vm257
  %v259 = vsel %vm258, %v251, %v255
  %v260 = vand.u32 2147483647, %v151
  %vm261 = vcmp.eq.f32.partialorder %v260, 8.507059e+37
  %v262 = vand.u32 %v151, 2147483648
  %v263 = vor.u32 1.1754944e-38, %v262
  %v264 = vsel %vm261, %v263, %v259
  %v265 = vmul.f32 %v133, %v264
  %v266 = vrcp.pop %v152
  %v267 = vmul.f32 %v152, %v266
  %v268 = vsub.f32 1.0, %v267
  %v269 = vmul.f32 %v266, %v268
  %v270 = vadd.f32 %v266, %v269
  %vm271 = vweird.f32 %v152
  %vm272 = vweird.f32 %v266
  %vm273 = vmor %vm271, %vm272
  %v274 = vsel %vm273, %v266, %v270
  %v275 = vand.u32 2147483647, %v152
  %vm276 = vcmp.eq.f32.partialorder %v275, 8.507059e+37
  %v277 = vand.u32 %v152, 2147483648
  %v278 = vor.u32 1.1754944e-38, %v277
  %v279 = vsel %vm276, %v278, %v274
  %v280 = vmul.f32 %v139, %v279
  %v289 = vrot.slane %v190, 7
  %vm290 = vcmask 1041409
  %v291 = vsel %vm290, %v289, %v175
  %v292 = vrot.slane %v205, 6
  %vm293 = vcmask 1042434
  %v294 = vsel %vm293, %v292, %v291
  %v295 = vrot.slane %v220, 5
  %vm296 = vcmask 1043459
  %v297 = vsel %vm296, %v295, %v294
  %v298 = vrot.slane %v235, 4
  %vm299 = vcmask 1044484
  %v300 = vsel %vm299, %v298, %v297
  %v301 = vrot.slane %v250, 3
  %vm302 = vcmask 1045509
  %v303 = vsel %vm302, %v301, %v300
  %v304 = vrot.slane %v265, 2
  %vm305 = vcmask 1046534
  %v306 = vsel %vm305, %v304, %v303
  %v307 = vrot.slane %v280, 1
  %vm308 = vcmask 1047559
  %v309 = vsel %vm308, %v307, %v306
  %311 = vst [vmem:[%s2] sm:$0xff] %v309
  // Predicated region
  $region10: #{bert_lora_classifier_forward.12} parent=0 // pred_check
    _
  $region11: #{bert_lora_classifier_forward.12} parent=0 // pred_check_branch
    %313 = sbr.rel (0) target = $region13
  $region12: #{bert_lora_classifier_forward.12} parent=0 // pred_region
    _
  $region13: #{bert_lora_classifier_forward.12} parent=0 // pred_fallthru
    _
  // Predicated region
  $region14: #{bert_lora_classifier_forward.12} parent=0 // pred_check
    _
  $region15: #{bert_lora_classifier_forward.12} parent=0 // pred_check_branch
    %315 = sbr.rel (0) target = $region17
  $region16: #{bert_lora_classifier_forward.12} parent=0 // pred_region
    _
  $region17: #{bert_lora_classifier_forward.12} parent=0 // pred_fallthru
    _

// kernel: bert_lora_classifier_forward.13
$region0: #{bert_lora_classifier_forward.13}
  #allocation0 [shape = 'u32[]', space=smem, size = 0x4, offset = 0x4, fixed_abs, tag = 'smem constant byte address 0x4 - core index']
  #allocation1 [shape = 'u32[72,128]{1,0:T(1,128)}', space=vmem, size = 0x9000, scoped, tag = 'internal scratch']
  %s0 = inlined_call_operand.vmem [shape: f32[2,128], index: 0, kind: input, shape index: {}]
  %s1 = inlined_call_operand.vmem [shape: f32[2,128], index: 1, kind: input, shape index: {}]
  %s2 = inlined_call_operand.vmem [shape: f32[2,128], index: 2, kind: input, shape index: {}]
  %s3 = inlined_call_operand.vmem [shape: f32[2,128], index: 3, kind: input, shape index: {}]
  %s4 = inlined_call_operand.vmem [shape: f32[2,1], index: 4, kind: output, shape index: {0}]
  %s5 = inlined_call_operand.vmem [shape: f32[2,1], index: 5, kind: output, shape index: {1}]
  %s6 = inlined_call_operand.hbm [shape: f32[1,1], index: 6, kind: output, shape index: {2}]
  %7 = xla_tuple %s4, %s5, %s6
  %s8 = sld [smem:[#allocation0]]
  $region42: #{bert_lora_classifier_forward.13} parent=0
    _
  %s10 = ssub.s32 1, %s8
  %s11 = scalar_select 0, %s10, %s8
  $region1: #{bert_lora_classifier_forward.13} parent=0
    #allocation2 [shape = 'u8[512]{0}', space=vmem, size = 0x400, scoped, tag = 'output window, operand 2, single buffered']
    #allocation3 [shape = 's32[1]{0}', space=sflag, size = 0x4, scoped, tag = 'scoped memory for bert_lora_classifier_forward.13']
    %12 = vsyncpa [#allocation3], 0
    // Predicated region
    $region2: #{bert_lora_classifier_forward.13} parent=1 // pred_check
      _
    $region3: #{bert_lora_classifier_forward.13} parent=1 // pred_check_branch
      %14 = sbr.rel (0) target = $region5
    $region4: #{bert_lora_classifier_forward.13} parent=1 // pred_region
      _
    $region5: #{bert_lora_classifier_forward.13} parent=1 // pred_fallthru
      _
    // Predicated region
    $region6: #{bert_lora_classifier_forward.13} parent=1 // pred_check
      _
    $region7: #{bert_lora_classifier_forward.13} parent=1 // pred_check_branch
      %16 = sbr.rel (0) target = $region9
    $region8: #{bert_lora_classifier_forward.13} parent=1 // pred_region
      _
    $region9: #{bert_lora_classifier_forward.13} parent=1 // pred_fallthru
      _
    // Predicated region
    $region10: #{bert_lora_classifier_forward.13} parent=1 // pred_check
      _
    $region11: #{bert_lora_classifier_forward.13} parent=1 // pred_check_branch
      %18 = sbr.rel (0) target = $region13
    $region12: #{bert_lora_classifier_forward.13} parent=1 // pred_region
      _
    $region13: #{bert_lora_classifier_forward.13} parent=1 // pred_fallthru
      _
    // Predicated region
    $region14: #{bert_lora_classifier_forward.13} parent=1 // pred_check
      _
    $region15: #{bert_lora_classifier_forward.13} parent=1 // pred_check_branch
      %20 = sbr.rel (0) target = $region17
    $region16: #{bert_lora_classifier_forward.13} parent=1 // pred_region
      _
    $region17: #{bert_lora_classifier_forward.13} parent=1 // pred_fallthru
      _
    %v21 = vld [vmem:[%s0] sm:$0x3]
    %v22 = vld [vmem:[%s1] sm:$0x3]
    %v23 = vmul.f32 %v21, %v22
    %vm24 = vcmask 1041408
    %v25 = vsel %vm24, %v23, 0.0
    %26 = vadd.xlane.f32.xlu0 %v25
    %v27 = vpop.xlane.xlu0 %26
    %v28 = vmul.f32 %v21, %v21
    %v29 = vsel %vm24, %v28, 0.0
    %30 = vadd.xlane.f32.xlu0 %v29
    %v31 = vpop.xlane.xlu0 %30
    %v32 = vrsqrt.pop %v31
    %v33 = vmul.f32 %v32, %v31
    %v34 = vmul.f32 %v33, %v32
    %v35 = vmul.f32 0.5, %v34
    %v36 = vsub.f32 1.5, %v35
    %v37 = vmul.f32 %v32, %v36
    %v38 = vmul.f32 %v31, %v37
    %vm39 = vcmp.eq.f32.partialorder %v31, inf
    %v40 = vsel %vm39, %v31, %v38
    %vm41 = vcmp.eq.f32.partialorder %v31, 0.0
    %v42 = vand.u32 %v31, 2147483648
    %v43 = vsel %vm41, %v42, %v40
    %v44 = vmul.f32 %v22, %v22
    %v45 = vsel %vm24, %v44, 0.0
    %46 = vadd.xlane.f32.xlu0 %v45
    %v47 = vpop.xlane.xlu0 %46
    %v48 = vrsqrt.pop %v47
    %v49 = vmul.f32 %v48, %v47
    %v50 = vmul.f32 %v49, %v48
    %v51 = vmul.f32 0.5, %v50
    %v52 = vsub.f32 1.5, %v51
    %v53 = vmul.f32 %v48, %v52
    %v54 = vmul.f32 %v47, %v53
    %vm55 = vcmp.eq.f32.partialorder %v47, inf
    %v56 = vsel %vm55, %v47, %v54
    %vm57 = vcmp.eq.f32.partialorder %v47, 0.0
    %v58 = vand.u32 %v47, 2147483648
    %v59 = vsel %vm57, %v58, %v56
    %v60 = vmul.f32 %v43, %v59
    %v61 = vadd.f32 %v60, 1e-08
    %v62 = vrcp.pop %v61
    %v63 = vmul.f32 %v61, %v62
    %v64 = vsub.f32 1.0, %v63
    %v65 = vmul.f32 %v62, %v64
    %v66 = vadd.f32 %v62, %v65
    %vm67 = vweird.f32 %v61
    %vm68 = vweird.f32 %v62
    %vm69 = vmor %vm67, %vm68
    %v70 = vsel %vm69, %v62, %v66
    %v71 = vand.u32 2147483647, %v61
    %vm72 = vcmp.eq.f32.partialorder %v71, 8.507059e+37
    %v73 = vand.u32 %v61, 2147483648
    %v74 = vor.u32 1.1754944e-38, %v73
    %v75 = vsel %vm72, %v74, %v70
    %v76 = vmul.f32 %v27, %v75
    %v77 = vxor.u32 %v76, 2147483648
    %v78 = vmul.f32 %v77, 1.442695
    %v79 = vpow.pop %v78
    %v80 = vadd.f32 %v79, 1.0
    %v81 = vrcp.pop %v80
    %v82 = vmul.f32 %v80, %v81
    %v83 = vsub.f32 1.0, %v82
    %v84 = vmul.f32 %v81, %v83
    %v85 = vadd.f32 %v81, %v84
    %vm86 = vweird.f32 %v80
    %vm87 = vweird.f32 %v81
    %vm88 = vmor %vm86, %vm87
    %v89 = vsel %vm88, %v81, %v85
    %v90 = vand.u32 2147483647, %v80
    %vm91 = vcmp.eq.f32.partialorder %v90, 8.507059e+37
    %v92 = vand.u32 %v80, 2147483648
    %v93 = vor.u32 1.1754944e-38, %v92
    %v94 = vsel %vm91, %v93, %v89
    %v95 = vmul.f32 1.0, %v94
    %v96 = vld [vmem:[%s2] sm:$0x3]
    %v97 = vld [vmem:[%s3] sm:$0x3]
    %v98 = vmul.f32 %v96, %v97
    %v99 = vsel %vm24, %v98, 0.0
    %100 = vadd.xlane.f32.xlu0 %v99
    %v101 = vpop.xlane.xlu0 %100
    %v102 = vmul.f32 %v96, %v96
    %v103 = vsel %vm24, %v102, 0.0
    %104 = vadd.xlane.f32.xlu0 %v103
    %v105 = vpop.xlane.xlu0 %104
    %v106 = vrsqrt.pop %v105
    %v107 = vmul.f32 %v106, %v105
    %v108 = vmul.f32 %v107, %v106
    %v109 = vmul.f32 0.5, %v108
    %v110 = vsub.f32 1.5, %v109
    %v111 = vmul.f32 %v106, %v110
    %v112 = vmul.f32 %v105, %v111
    %vm113 = vcmp.eq.f32.partialorder %v105, inf
    %v114 = vsel %vm113, %v105, %v112
    %vm115 = vcmp.eq.f32.partialorder %v105, 0.0
    %v116 = vand.u32 %v105, 2147483648
    %v117 = vsel %vm115, %v116, %v114
    %v118 = vmul.f32 %v97, %v97
    %v119 = vsel %vm24, %v118, 0.0
    %120 = vadd.xlane.f32.xlu0 %v119
    %v121 = vpop.xlane.xlu0 %120
    %v122 = vrsqrt.pop %v121
    %v123 = vmul.f32 %v122, %v121
    %v124 = vmul.f32 %v123, %v122
    %v125 = vmul.f32 0.5, %v124
    %v126 = vsub.f32 1.5, %v125
    %v127 = vmul.f32 %v122, %v126
    %v128 = vmul.f32 %v121, %v127
    %vm129 = vcmp.eq.f32.partialorder %v121, inf
    %v130 = vsel %vm129, %v121, %v128
    %vm131 = vcmp.eq.f32.partialorder %v121, 0.0
    %v132 = vand.u32 %v121, 2147483648
    %v133 = vsel %vm131, %v132, %v130
    %v134 = vmul.f32 %v117, %v133
    %v135 = vadd.f32 %v134, 1e-08
    %v136 = vrcp.pop %v135
    %v137 = vmul.f32 %v135, %v136
    %v138 = vsub.f32 1.0, %v137
    %v139 = vmul.f32 %v136, %v138
    %v140 = vadd.f32 %v136, %v139
    %vm141 = vweird.f32 %v135
    %vm142 = vweird.f32 %v136
    %vm143 = vmor %vm141, %vm142
    %v144 = vsel %vm143, %v136, %v140
    %v145 = vand.u32 2147483647, %v135
    %vm146 = vcmp.eq.f32.partialorder %v145, 8.507059e+37
    %v147 = vand.u32 %v135, 2147483648
    %v148 = vor.u32 1.1754944e-38, %v147
    %v149 = vsel %vm146, %v148, %v144
    %v150 = vmul.f32 %v101, %v149
    %v151 = vxor.u32 %v150, 2147483648
    %v152 = vmul.f32 %v151, 1.442695
    %v153 = vpow.pop %v152
    %v154 = vadd.f32 %v153, 1.0
    %v155 = vrcp.pop %v154
    %v156 = vmul.f32 %v154, %v155
    %v157 = vsub.f32 1.0, %v156
    %v158 = vmul.f32 %v155, %v157
    %v159 = vadd.f32 %v155, %v158
    %vm160 = vweird.f32 %v154
    %vm161 = vweird.f32 %v155
    %vm162 = vmor %vm160, %vm161
    %v163 = vsel %vm162, %v155, %v159
    %v164 = vand.u32 2147483647, %v154
    %vm165 = vcmp.eq.f32.partialorder %v164, 8.507059e+37
    %v166 = vand.u32 %v154, 2147483648
    %v167 = vor.u32 1.1754944e-38, %v166
    %v168 = vsel %vm165, %v167, %v163
    %v169 = vmul.f32 1.0, %v168
    %vm170 = vcmask 1024
    %171 = vst.msk [vmem:[%s4] sm:$0x3] %vm170, %v95
    %172 = vst.msk [vmem:[%s5] sm:$0x3] %vm170, %v169
    %v173 = vadd.f32 %v95, 1e-15
    %v174 = vlog2.pop %v173
    %v175 = vmul.f32 %v174, 0.6931472
    %v176 = vsel %vm170, %v175, 0.0
    %177 = vadd.xlane.f32.xlu0 %v176
    %v178 = vpop.xlane.xlu0 %177
    %v179 = vrot.slane %v178, 4
    %v180 = vadd.f32 %v178, %v179
    %v181 = vrot.slane %v180, 2
    %v182 = vadd.f32 %v180, %v181
    %v183 = vrot.slane %v182, 1
    %v184 = vadd.f32 %v182, %v183
    %s185 = vtos %v184
    %v186 = vstv %s185
    %v187 = vrcp.pop 2.0
    %v188 = vmul.f32 2.0, %v187
    %v189 = vsub.f32 1.0, %v188
    %v190 = vmul.f32 %v187, %v189
    %v191 = vadd.f32 %v187, %v190
    %vm192 = vweird.f32 %v187
    %v193 = vsel %vm192, %v187, %v191
    %v194 = vmul.f32 %v186, %v193
    %v195 = vsub.f32 0.0, %v194
    %v196 = vsub.f32 1.0, %v169
    %v197 = vadd.f32 %v196, 1e-15
    %v198 = vlog2.pop %v197
    %v199 = vmul.f32 %v198, 0.6931472
    %v200 = vsel %vm170, %v199, 0.0
    %201 = vadd.xlane.f32.xlu0 %v200
    %v202 = vpop.xlane.xlu0 %201
    %v203 = vrot.slane %v202, 4
    %v204 = vadd.f32 %v202, %v203
    %v205 = vrot.slane %v204, 2
    %v206 = vadd.f32 %v204, %v205
    %v207 = vrot.slane %v206, 1
    %v208 = vadd.f32 %v206, %v207
    %s209 = vtos %v208
    %v210 = vstv %s209
    %v211 = vmul.f32 %v210, %v193
    %v212 = vsub.f32 0.0, %v211
    %v213 = vadd.f32 %v195, %v212
    %vm214 = vcmask 0
    %215 = vst.msk [vmem:[#allocation2] sm:$0x1] %vm214, %v213
    // Predicated region
    $region18: #{bert_lora_classifier_forward.13} parent=1 // pred_check
      _
    $region19: #{bert_lora_classifier_forward.13} parent=1 // pred_check_branch
      %217 = sbr.rel (0) target = $region21
    $region20: #{bert_lora_classifier_forward.13} parent=1 // pred_region
      _
    $region21: #{bert_lora_classifier_forward.13} parent=1 // pred_fallthru
      _
    // Predicated region
    $region22: #{bert_lora_classifier_forward.13} parent=1 // pred_check
      _
    $region23: #{bert_lora_classifier_forward.13} parent=1 // pred_check_branch
      %219 = sbr.rel (0) target = $region25
    $region24: #{bert_lora_classifier_forward.13} parent=1 // pred_region
      _
    $region25: #{bert_lora_classifier_forward.13} parent=1 // pred_fallthru
      _
    // Predicated region
    $region26: #{bert_lora_classifier_forward.13} parent=1 // pred_check
      _
    $region27: #{bert_lora_classifier_forward.13} parent=1 // pred_check_branch
      %221 = sbr.rel (0) target = $region29
    $region28: #{bert_lora_classifier_forward.13} parent=1 // pred_region
      %223 = vsyncadd [#allocation3], 0
      %s225 = sshll.u32 [#allocation2], 4
      %s226 = int_to_ptr.vmem [resolvable:$true] %s225
      %s227 = sshll.u32 %s6, 4
      %s228 = int_to_ptr.hbm [resolvable:$true] %s227
      %230 = dma.vmem_to_hbm [thread:$0]  %s226, 16, %s228, [#allocation3]
    $region29: #{bert_lora_classifier_forward.13} parent=1 // pred_fallthru
      _
    // Predicated region
    $region30: #{bert_lora_classifier_forward.13} parent=1 // pred_check
      _
    $region31: #{bert_lora_classifier_forward.13} parent=1 // pred_check_branch
      %232 = sbr.rel (0) target = $region33
    $region32: #{bert_lora_classifier_forward.13} parent=1 // pred_region
      _
    $region33: #{bert_lora_classifier_forward.13} parent=1 // pred_fallthru
      _
    // Predicated region
    $region34: #{bert_lora_classifier_forward.13} parent=1 // pred_check
      _
    $region35: #{bert_lora_classifier_forward.13} parent=1 // pred_check_branch
      %234 = sbr.rel (0) target = $region37
    $region36: #{bert_lora_classifier_forward.13} parent=1 // pred_region
      _
    $region37: #{bert_lora_classifier_forward.13} parent=1 // pred_fallthru
      _
    // Predicated region
    $region38: #{bert_lora_classifier_forward.13} parent=1 // pred_check
      _
    $region39: #{bert_lora_classifier_forward.13} parent=1 // pred_check_branch
      %236 = sbr.rel (0) target = $region41
    $region40: #{bert_lora_classifier_forward.13} parent=1 // pred_region
      %238 = dma.done [#allocation3], 16
    $region41: #{bert_lora_classifier_forward.13} parent=1 // pred_fallthru
      _
    %239 = vsyncpa [#allocation3], 1

// kernel: bert_lora_classifier_forward.9
$region0: #{bert_lora_classifier_forward.9}
  #allocation0 [shape = 'u32[]', space=smem, size = 0x4, offset = 0x4, fixed_abs, tag = 'smem constant byte address 0x4 - core index']
  #allocation1 [shape = 'u32[72,128]{1,0:T(1,128)}', space=vmem, size = 0x9000, scoped, tag = 'internal scratch']
  #allocation2 [shape = 'f32[32,128]{1,0:T(8,128)}', space=vmem, size = 0x4000, scoped, tag = 'scratch operand']
  #allocation3 [shape = 'f32[32,128]{1,0:T(8,128)}', space=vmem, size = 0x4000, scoped, tag = 'scratch operand']
  %s0 = inlined_call_operand.vmem [shape: bf16[64,128], index: 0, kind: input, shape index: {}]
  %s1 = inlined_call_operand.vmem [shape: bf16[64,128], index: 1, kind: input, shape index: {}]
  %s2 = inlined_call_operand.hbm [shape: bf16[128,128], index: 2, kind: input, shape index: {}]
  %s3 = inlined_call_operand.vmem [shape: f32[1,128], index: 3, kind: input, shape index: {}]
  %s4 = inlined_call_operand.vmem [shape: f32[1,128], index: 4, kind: input, shape index: {}]
  %s5 = inlined_call_operand.vmem [shape: f32[1,128], index: 5, kind: input, shape index: {}]
  %s6 = inlined_call_operand.vmem [shape: bf16[128,256], index: 6, kind: input, shape index: {}]
  %s7 = inlined_call_operand.vmem [shape: f32[1,256], index: 7, kind: input, shape index: {}]
  %s8 = inlined_call_operand.vmem [shape: bf16[256,128], index: 8, kind: input, shape index: {}]
  %s9 = inlined_call_operand.vmem [shape: f32[1,128], index: 9, kind: input, shape index: {}]
  %s10 = inlined_call_operand.vmem [shape: f32[1,128], index: 10, kind: input, shape index: {}]
  %s11 = inlined_call_operand.vmem [shape: f32[1,128], index: 11, kind: input, shape index: {}]
  %s12 = inlined_call_operand.hbm [shape: bf16[128,128], index: 12, kind: input, shape index: {}]
  %s13 = inlined_call_operand.vmem [shape: f32[1,128], index: 13, kind: input, shape index: {}]
  %s14 = inlined_call_operand.vmem [shape: bf16[128,256], index: 14, kind: input, shape index: {}]
  %s15 = inlined_call_operand.vmem [shape: f32[1,256], index: 15, kind: input, shape index: {}]
  %s16 = inlined_call_operand.vmem [shape: bf16[64,128], index: 16, kind: output, shape index: {0}]
  %s17 = inlined_call_operand.vmem [shape: bf16[64,128], index: 17, kind: output, shape index: {1}]
  %s18 = inlined_call_operand.vmem [shape: bf16[64,256], index: 18, kind: output, shape index: {2}]
  %19 = xla_tuple %s16, %s17, %s18
  %s20 = sld [smem:[#allocation0]]
  $region129: #{bert_lora_classifier_forward.9} parent=0
    _
  %s22 = ssub.s32 1, %s20
  %s23 = scalar_select 0, %s22, %s20
  $region1: #{bert_lora_classifier_forward.9} parent=0
    #allocation4 [shape = 'u8[32768]{0}', space=vmem, size = 0x8000, scoped, tag = 'input window, operand 2, single buffered']
    #allocation5 [shape = 's32[2]{0}', space=sflag, size = 0x8, scoped, tag = 'scoped memory for bert_lora_classifier_forward.9']
    #allocation6 [shape = 'u8[32768]{0}', space=vmem, size = 0x8000, scoped, tag = 'input window, operand 12, single buffered']
    #allocation7 [shape = 's32[1]{0}', space=sflag, size = 0x4, scoped, tag = 'scoped memory for bert_lora_classifier_forward.9']
    %24 = vsyncpa [#allocation5], 0
    %25 = vsyncpa [#allocation7], 0
    loop: start=0, step=1, limit=4
    $region2: #{bert_lora_classifier_forward.9} parent=1 // loop_pre_header
      _
    $region3: #{bert_lora_classifier_forward.9} parent=1 // loop_header
      %s27 = sphi 0, %s31
      %p28 = scmp.ge.s32.totalorder %s27, 4
      %s34 = sphi 0, %s46
      %s35 = sphi 0, %s42
      %s36 = sphi 0, %s34
      %s37 = sphi 0, %s35
      %s38 = sphi 0, %s36
      %s39 = sphi 0, %s37
      %s49 = sphi 0, %s51
      %s52 = sphi 0, %s49
      %s53 = sphi 0, %s52
      %s69 = sphi 0, %s53
      %s75 = sphi 0, %s77
      %s78 = sphi 0, %s75
      %s79 = sphi 0, %s78
      %s95 = sphi 0, %s79
      %s99 = sphi 0, %s99
      %s101 = sphi 0, %s99
      %s102 = sphi 0, %s101
      %s116 = sphi 0, %s102
      %s120 = sphi 0, %s120
      %s122 = sphi 0, %s120
      %s123 = sphi 0, %s122
      %s137 = sphi 0, %s123
      %s141 = sphi 0, %s141
      %s143 = sphi 0, %s141
      %s144 = sphi 0, %s143
      %s158 = sphi 0, %s144
      %s162 = sphi 0, %s162
      %s164 = sphi 0, %s162
      %s165 = sphi 0, %s164
      %s179 = sphi 0, %s165
      %s185 = sphi 0, %s187
      %s188 = sphi 0, %s185
      %s189 = sphi 0, %s188
      %s205 = sphi 0, %s189
      %s211 = sphi 0, %s213
      %s214 = sphi 0, %s211
      %s215 = sphi 0, %s214
      %s231 = sphi 0, %s215
      %s237 = sphi 0, %s239
      %s240 = sphi 0, %s237
      %s241 = sphi 0, %s240
      %s257 = sphi 0, %s241
      %s261 = sphi 0, %s261
      %s263 = sphi 0, %s261
      %s264 = sphi 0, %s263
      %s278 = sphi 0, %s264
      %s282 = sphi 0, %s282
      %s284 = sphi 0, %s282
      %s285 = sphi 0, %s284
      %s299 = sphi 0, %s285
      %s303 = sphi 0, %s303
      %s305 = sphi 0, %s303
      %s306 = sphi 0, %s305
      %s320 = sphi 0, %s306
      %s324 = sphi 0, %s324
      %s326 = sphi 0, %s324
      %s327 = sphi 0, %s326
      %s341 = sphi 0, %s327
      %s345 = sphi 0, %s345
      %s347 = sphi 0, %s345
      %s348 = sphi 0, %s347
      %s362 = sphi 0, %s348
      %s366 = sphi 0, %s366
      %s368 = sphi 0, %s366
      %s369 = sphi 0, %s368
      %s383 = sphi 0, %s369
      %s387 = sphi 0, %s387
      %s389 = sphi 0, %s387
      %s390 = sphi 0, %s389
      %s404 = sphi 0, %s390
      %s410 = sphi 0, %s412
      %s413 = sphi 0, %s410
      %s414 = sphi 0, %s413
      %s430 = sphi 0, %s414
      %s436 = sphi 0, %s438
      %s439 = sphi 0, %s436
      %s440 = sphi 0, %s439
      %s456 = sphi 0, %s440
      %s462 = sphi 0, %s464
      %s465 = sphi 0, %s462
      %s466 = sphi 0, %s465
      %s482 = sphi 0, %s466
    $region4: #{bert_lora_classifier_forward.9} parent=1 // loop_header_branch
      %30 = sbr.rel (%p28) target = $region8
    $region5: #{bert_lora_classifier_forward.9} parent=1 // loop_body
      %s32 = ssub.s32 %s27, 1
      %s33 = ssub.s32 %s27, 2
      %s40 = sadd.s32 1, %s35
      %p41 = scmp.ge.s32.totalorder %s40, 1
      %s42 = scalar_select %p41, 0, %s40
      %s43 = sadd.s32 1, %s34
      %s44 = scalar_select %p41, %s43, %s34
      %p45 = scmp.ge.s32.totalorder %s44, 2
      %s46 = scalar_select %p45, 0, %s44
      %s47 = ssub.s32 %s34, %s46
      %p48 = scmp.eq.s32.totalorder %s47, 0
      %s50 = sadd.s32 %s49, 1
      %s51 = scalar_select %p48, %s49, %s50
      %p54 = pneg %p48
      %p55 = scmp.eq.s32.totalorder %s27, 1
      %p56 = por %p54, %p55
      %p57 = scmp.ne.s32.totalorder %s49, %s52
      %p58 = scmp.eq.s32.totalorder %s27, 0
      %p59 = por %p57, %p58
      %p60 = scmp.ne.s32.totalorder %s49, %s52
      %p61 = scmp.eq.s32.totalorder %s32, 1
      %p62 = por %p60, %p61
      %p63 = scmp.ne.s32.totalorder %s52, %s53
      %p64 = scmp.eq.s32.totalorder %s32, 0
      %p65 = por %p63, %p64
      %p66 = scmp.ne.s32.totalorder %s52, %s53
      %p67 = scmp.eq.s32.totalorder %s33, 1
      %p68 = por %p66, %p67
      %p70 = scmp.ne.s32.totalorder %s53, %s69
      %p71 = scmp.eq.s32.totalorder %s33, 0
      %p72 = por %p70, %p71
      %s73 = ssub.s32 %s34, %s46
      %p74 = scmp.eq.s32.totalorder %s73, 0
      %s76 = sadd.s32 %s75, 1
      %s77 = scalar_select %p74, %s75, %s76
      %p80 = pneg %p74
      %p81 = scmp.eq.s32.totalorder %s27, 1
      %p82 = por %p80, %p81
      %p83 = scmp.ne.s32.totalorder %s75, %s78
      %p84 = scmp.eq.s32.totalorder %s27, 0
      %p85 = por %p83, %p84
      %p86 = scmp.ne.s32.totalorder %s75, %s78
      %p87 = scmp.eq.s32.totalorder %s32, 1
      %p88 = por %p86, %p87
      %p89 = scmp.ne.s32.totalorder %s78, %s79
      %p90 = scmp.eq.s32.totalorder %s32, 0
      %p91 = por %p89, %p90
      %p92 = scmp.ne.s32.totalorder %s78, %s79
      %p93 = scmp.eq.s32.totalorder %s33, 1
      %p94 = por %p92, %p93
      %p96 = scmp.ne.s32.totalorder %s79, %s95
      %p97 = scmp.eq.s32.totalorder %s33, 0
      %p98 = por %p96, %p97
      %s100 = sadd.s32 %s99, 1
      %p103 = scmp.eq.s32.totalorder %s27, 1
      %p104 = scmp.ne.s32.totalorder %s99, %s101
      %p105 = scmp.eq.s32.totalorder %s27, 0
      %p106 = por %p104, %p105
      %p107 = scmp.ne.s32.totalorder %s99, %s101
      %p108 = scmp.eq.s32.totalorder %s32, 1
      %p109 = por %p107, %p108
      %p110 = scmp.ne.s32.totalorder %s101, %s102
      %p111 = scmp.eq.s32.totalorder %s32, 0
      %p112 = por %p110, %p111
      %p113 = scmp.ne.s32.totalorder %s101, %s102
      %p114 = scmp.eq.s32.totalorder %s33, 1
      %p115 = por %p113, %p114
      %p117 = scmp.ne.s32.totalorder %s102, %s116
      %p118 = scmp.eq.s32.totalorder %s33, 0
      %p119 = por %p117, %p118
      %s121 = sadd.s32 %s120, 1
      %p124 = scmp.eq.s32.totalorder %s27, 1
      %p125 = scmp.ne.s32.totalorder %s120, %s122
      %p126 = scmp.eq.s32.totalorder %s27, 0
      %p127 = por %p125, %p126
      %p128 = scmp.ne.s32.totalorder %s120, %s122
      %p129 = scmp.eq.s32.totalorder %s32, 1
      %p130 = por %p128, %p129
      %p131 = scmp.ne.s32.totalorder %s122, %s123
      %p132 = scmp.eq.s32.totalorder %s32, 0
      %p133 = por %p131, %p132
      %p134 = scmp.ne.s32.totalorder %s122, %s123
      %p135 = scmp.eq.s32.totalorder %s33, 1
      %p136 = por %p134, %p135
      %p138 = scmp.ne.s32.totalorder %s123, %s137
      %p139 = scmp.eq.s32.totalorder %s33, 0
      %p140 = por %p138, %p139
      %s142 = sadd.s32 %s141, 1
      %p145 = scmp.eq.s32.totalorder %s27, 1
      %p146 = scmp.ne.s32.totalorder %s141, %s143
      %p147 = scmp.eq.s32.totalorder %s27, 0
      %p148 = por %p146, %p147
      %p149 = scmp.ne.s32.totalorder %s141, %s143
      %p150 = scmp.eq.s32.totalorder %s32, 1
      %p151 = por %p149, %p150
      %p152 = scmp.ne.s32.totalorder %s143, %s144
      %p153 = scmp.eq.s32.totalorder %s32, 0
      %p154 = por %p152, %p153
      %p155 = scmp.ne.s32.totalorder %s143, %s144
      %p156 = scmp.eq.s32.totalorder %s33, 1
      %p157 = por %p155, %p156
      %p159 = scmp.ne.s32.totalorder %s144, %s158
      %p160 = scmp.eq.s32.totalorder %s33, 0
      %p161 = por %p159, %p160
      %s163 = sadd.s32 %s162, 1
      %p166 = scmp.eq.s32.totalorder %s27, 1
      %p167 = scmp.ne.s32.totalorder %s162, %s164
      %p168 = scmp.eq.s32.totalorder %s27, 0
      %p169 = por %p167, %p168
      %p170 = scmp.ne.s32.totalorder %s162, %s164
      %p171 = scmp.eq.s32.totalorder %s32, 1
      %p172 = por %p170, %p171
      %p173 = scmp.ne.s32.totalorder %s164, %s165
      %p174 = scmp.eq.s32.totalorder %s32, 0
      %p175 = por %p173, %p174
      %p176 = scmp.ne.s32.totalorder %s164, %s165
      %p177 = scmp.eq.s32.totalorder %s33, 1
      %p178 = por %p176, %p177
      %p180 = scmp.ne.s32.totalorder %s165, %s179
      %p181 = scmp.eq.s32.totalorder %s33, 0
      %p182 = por %p180, %p181
      %s183 = ssub.s32 %s35, %s42
      %p184 = scmp.eq.s32.totalorder %s183, 0
      %s186 = sadd.s32 %s185, 1
      %s187 = scalar_select %p184, %s185, %s186
      %p190 = pneg %p184
      %p191 = scmp.eq.s32.totalorder %s27, 1
      %p192 = por %p190, %p191
      %p193 = scmp.ne.s32.totalorder %s185, %s188
      %p194 = scmp.eq.s32.totalorder %s27, 0
      %p195 = por %p193, %p194
      %p196 = scmp.ne.s32.totalorder %s185, %s188
      %p197 = scmp.eq.s32.totalorder %s32, 1
      %p198 = por %p196, %p197
      %p199 = scmp.ne.s32.totalorder %s188, %s189
      %p200 = scmp.eq.s32.totalorder %s32, 0
      %p201 = por %p199, %p200
      %p202 = scmp.ne.s32.totalorder %s188, %s189
      %p203 = scmp.eq.s32.totalorder %s33, 1
      %p204 = por %p202, %p203
      %p206 = scmp.ne.s32.totalorder %s189, %s205
      %p207 = scmp.eq.s32.totalorder %s33, 0
      %p208 = por %p206, %p207
      %s209 = ssub.s32 %s35, %s42
      %p210 = scmp.eq.s32.totalorder %s209, 0
      %s212 = sadd.s32 %s211, 1
      %s213 = scalar_select %p210, %s211, %s212
      %p216 = pneg %p210
      %p217 = scmp.eq.s32.totalorder %s27, 1
      %p218 = por %p216, %p217
      %p219 = scmp.ne.s32.totalorder %s211, %s214
      %p220 = scmp.eq.s32.totalorder %s27, 0
      %p221 = por %p219, %p220
      %p222 = scmp.ne.s32.totalorder %s211, %s214
      %p223 = scmp.eq.s32.totalorder %s32, 1
      %p224 = por %p222, %p223
      %p225 = scmp.ne.s32.totalorder %s214, %s215
      %p226 = scmp.eq.s32.totalorder %s32, 0
      %p227 = por %p225, %p226
      %p228 = scmp.ne.s32.totalorder %s214, %s215
      %p229 = scmp.eq.s32.totalorder %s33, 1
      %p230 = por %p228, %p229
      %p232 = scmp.ne.s32.totalorder %s215, %s231
      %p233 = scmp.eq.s32.totalorder %s33, 0
      %p234 = por %p232, %p233
      %s235 = ssub.s32 %s35, %s42
      %p236 = scmp.eq.s32.totalorder %s235, 0
      %s238 = sadd.s32 %s237, 1
      %s239 = scalar_select %p236, %s237, %s238
      %p242 = pneg %p236
      %p243 = scmp.eq.s32.totalorder %s27, 1
      %p244 = por %p242, %p243
      %p245 = scmp.ne.s32.totalorder %s237, %s240
      %p246 = scmp.eq.s32.totalorder %s27, 0
      %p247 = por %p245, %p246
      %p248 = scmp.ne.s32.totalorder %s237, %s240
      %p249 = scmp.eq.s32.totalorder %s32, 1
      %p250 = por %p248, %p249
      %p251 = scmp.ne.s32.totalorder %s240, %s241
      %p252 = scmp.eq.s32.totalorder %s32, 0
      %p253 = por %p251, %p252
      %p254 = scmp.ne.s32.totalorder %s240, %s241
      %p255 = scmp.eq.s32.totalorder %s33, 1
      %p256 = por %p254, %p255
      %p258 = scmp.ne.s32.totalorder %s241, %s257
      %p259 = scmp.eq.s32.totalorder %s33, 0
      %p260 = por %p258, %p259
      %s262 = sadd.s32 %s261, 1
      %p265 = scmp.eq.s32.totalorder %s27, 1
      %p266 = scmp.ne.s32.totalorder %s261, %s263
      %p267 = scmp.eq.s32.totalorder %s27, 0
      %p268 = por %p266, %p267
      %p269 = scmp.ne.s32.totalorder %s261, %s263
      %p270 = scmp.eq.s32.totalorder %s32, 1
      %p271 = por %p269, %p270
      %p272 = scmp.ne.s32.totalorder %s263, %s264
      %p273 = scmp.eq.s32.totalorder %s32, 0
      %p274 = por %p272, %p273
      %p275 = scmp.ne.s32.totalorder %s263, %s264
      %p276 = scmp.eq.s32.totalorder %s33, 1
      %p277 = por %p275, %p276
      %p279 = scmp.ne.s32.totalorder %s264, %s278
      %p280 = scmp.eq.s32.totalorder %s33, 0
      %p281 = por %p279, %p280
      %s283 = sadd.s32 %s282, 1
      %p286 = scmp.eq.s32.totalorder %s27, 1
      %p287 = scmp.ne.s32.totalorder %s282, %s284
      %p288 = scmp.eq.s32.totalorder %s27, 0
      %p289 = por %p287, %p288
      %p290 = scmp.ne.s32.totalorder %s282, %s284
      %p291 = scmp.eq.s32.totalorder %s32, 1
      %p292 = por %p290, %p291
      %p293 = scmp.ne.s32.totalorder %s284, %s285
      %p294 = scmp.eq.s32.totalorder %s32, 0
      %p295 = por %p293, %p294
      %p296 = scmp.ne.s32.totalorder %s284, %s285
      %p297 = scmp.eq.s32.totalorder %s33, 1
      %p298 = por %p296, %p297
      %p300 = scmp.ne.s32.totalorder %s285, %s299
      %p301 = scmp.eq.s32.totalorder %s33, 0
      %p302 = por %p300, %p301
      %s304 = sadd.s32 %s303, 1
      %p307 = scmp.eq.s32.totalorder %s27, 1
      %p308 = scmp.ne.s32.totalorder %s303, %s305
      %p309 = scmp.eq.s32.totalorder %s27, 0
      %p310 = por %p308, %p309
      %p311 = scmp.ne.s32.totalorder %s303, %s305
      %p312 = scmp.eq.s32.totalorder %s32, 1
      %p313 = por %p311, %p312
      %p314 = scmp.ne.s32.totalorder %s305, %s306
      %p315 = scmp.eq.s32.totalorder %s32, 0
      %p316 = por %p314, %p315
      %p317 = scmp.ne.s32.totalorder %s305, %s306
      %p318 = scmp.eq.s32.totalorder %s33, 1
      %p319 = por %p317, %p318
      %p321 = scmp.ne.s32.totalorder %s306, %s320
      %p322 = scmp.eq.s32.totalorder %s33, 0
      %p323 = por %p321, %p322
      %s325 = sadd.s32 %s324, 1
      %p328 = scmp.eq.s32.totalorder %s27, 1
      %p329 = scmp.ne.s32.totalorder %s324, %s326
      %p330 = scmp.eq.s32.totalorder %s27, 0
      %p331 = por %p329, %p330
      %p332 = scmp.ne.s32.totalorder %s324, %s326
      %p333 = scmp.eq.s32.totalorder %s32, 1
      %p334 = por %p332, %p333
      %p335 = scmp.ne.s32.totalorder %s326, %s327
      %p336 = scmp.eq.s32.totalorder %s32, 0
      %p337 = por %p335, %p336
      %p338 = scmp.ne.s32.totalorder %s326, %s327
      %p339 = scmp.eq.s32.totalorder %s33, 1
      %p340 = por %p338, %p339
      %p342 = scmp.ne.s32.totalorder %s327, %s341
      %p343 = scmp.eq.s32.totalorder %s33, 0
      %p344 = por %p342, %p343
      %s346 = sadd.s32 %s345, 1
      %p349 = scmp.eq.s32.totalorder %s27, 1
      %p350 = scmp.ne.s32.totalorder %s345, %s347
      %p351 = scmp.eq.s32.totalorder %s27, 0
      %p352 = por %p350, %p351
      %p353 = scmp.ne.s32.totalorder %s345, %s347
      %p354 = scmp.eq.s32.totalorder %s32, 1
      %p355 = por %p353, %p354
      %p356 = scmp.ne.s32.totalorder %s347, %s348
      %p357 = scmp.eq.s32.totalorder %s32, 0
      %p358 = por %p356, %p357
      %p359 = scmp.ne.s32.totalorder %s347, %s348
      %p360 = scmp.eq.s32.totalorder %s33, 1
      %p361 = por %p359, %p360
      %p363 = scmp.ne.s32.totalorder %s348, %s362
      %p364 = scmp.eq.s32.totalorder %s33, 0
      %p365 = por %p363, %p364
      %s367 = sadd.s32 %s366, 1
      %p370 = scmp.eq.s32.totalorder %s27, 1
      %p371 = scmp.ne.s32.totalorder %s366, %s368
      %p372 = scmp.eq.s32.totalorder %s27, 0
      %p373 = por %p371, %p372
      %p374 = scmp.ne.s32.totalorder %s366, %s368
      %p375 = scmp.eq.s32.totalorder %s32, 1
      %p376 = por %p374, %p375
      %p377 = scmp.ne.s32.totalorder %s368, %s369
      %p378 = scmp.eq.s32.totalorder %s32, 0
      %p379 = por %p377, %p378
      %p380 = scmp.ne.s32.totalorder %s368, %s369
      %p381 = scmp.eq.s32.totalorder %s33, 1
      %p382 = por %p380, %p381
      %p384 = scmp.ne.s32.totalorder %s369, %s383
      %p385 = scmp.eq.s32.totalorder %s33, 0
      %p386 = por %p384, %p385
      %s388 = sadd.s32 %s387, 1
      %p391 = scmp.eq.s32.totalorder %s27, 1
      %p392 = scmp.ne.s32.totalorder %s387, %s389
      %p393 = scmp.eq.s32.totalorder %s27, 0
      %p394 = por %p392, %p393
      %p395 = scmp.ne.s32.totalorder %s387, %s389
      %p396 = scmp.eq.s32.totalorder %s32, 1
      %p397 = por %p395, %p396
      %p398 = scmp.ne.s32.totalorder %s389, %s390
      %p399 = scmp.eq.s32.totalorder %s32, 0
      %p400 = por %p398, %p399
      %p401 = scmp.ne.s32.totalorder %s389, %s390
      %p402 = scmp.eq.s32.totalorder %s33, 1
      %p403 = por %p401, %p402
      %p405 = scmp.ne.s32.totalorder %s390, %s404
      %p406 = scmp.eq.s32.totalorder %s33, 0
      %p407 = por %p405, %p406
      %s408 = ssub.s32 %s34, %s46
      %p409 = scmp.eq.s32.totalorder %s408, 0
      %s411 = sadd.s32 %s410, 1
      %s412 = scalar_select %p409, %s410, %s411
      %p415 = pneg %p409
      %p416 = scmp.eq.s32.totalorder %s27, 1
      %p417 = por %p415, %p416
      %p418 = scmp.ne.s32.totalorder %s410, %s413
      %p419 = scmp.eq.s32.totalorder %s27, 0
      %p420 = por %p418, %p419
      %p421 = scmp.ne.s32.totalorder %s410, %s413
      %p422 = scmp.eq.s32.totalorder %s32, 1
      %p423 = por %p421, %p422
      %p424 = scmp.ne.s32.totalorder %s413, %s414
      %p425 = scmp.eq.s32.totalorder %s32, 0
      %p426 = por %p424, %p425
      %p427 = scmp.ne.s32.totalorder %s413, %s414
      %p428 = scmp.eq.s32.totalorder %s33, 1
      %p429 = por %p427, %p428
      %p431 = scmp.ne.s32.totalorder %s414, %s430
      %p432 = scmp.eq.s32.totalorder %s33, 0
      %p433 = por %p431, %p432
      %s434 = ssub.s32 %s34, %s46
      %p435 = scmp.eq.s32.totalorder %s434, 0
      %s437 = sadd.s32 %s436, 1
      %s438 = scalar_select %p435, %s436, %s437
      %p441 = pneg %p435
      %p442 = scmp.eq.s32.totalorder %s27, 1
      %p443 = por %p441, %p442
      %p444 = scmp.ne.s32.totalorder %s436, %s439
      %p445 = scmp.eq.s32.totalorder %s27, 0
      %p446 = por %p444, %p445
      %p447 = scmp.ne.s32.totalorder %s436, %s439
      %p448 = scmp.eq.s32.totalorder %s32, 1
      %p449 = por %p447, %p448
      %p450 = scmp.ne.s32.totalorder %s439, %s440
      %p451 = scmp.eq.s32.totalorder %s32, 0
      %p452 = por %p450, %p451
      %p453 = scmp.ne.s32.totalorder %s439, %s440
      %p454 = scmp.eq.s32.totalorder %s33, 1
      %p455 = por %p453, %p454
      %p457 = scmp.ne.s32.totalorder %s440, %s456
      %p458 = scmp.eq.s32.totalorder %s33, 0
      %p459 = por %p457, %p458
      %s460 = ssub.s32 %s34, %s46
      %p461 = scmp.eq.s32.totalorder %s460, 0
      %s463 = sadd.s32 %s462, 1
      %s464 = scalar_select %p461, %s462, %s463
      %p467 = pneg %p461
      %p468 = scmp.eq.s32.totalorder %s27, 1
      %p469 = por %p467, %p468
      %p470 = scmp.ne.s32.totalorder %s462, %s465
      %p471 = scmp.eq.s32.totalorder %s27, 0
      %p472 = por %p470, %p471
      %p473 = scmp.ne.s32.totalorder %s462, %s465
      %p474 = scmp.eq.s32.totalorder %s32, 1
      %p475 = por %p473, %p474
      %p476 = scmp.ne.s32.totalorder %s465, %s466
      %p477 = scmp.eq.s32.totalorder %s32, 0
      %p478 = por %p476, %p477
      %p479 = scmp.ne.s32.totalorder %s465, %s466
      %p480 = scmp.eq.s32.totalorder %s33, 1
      %p481 = por %p479, %p480
      %p483 = scmp.ne.s32.totalorder %s466, %s482
      %p484 = scmp.eq.s32.totalorder %s33, 0
      %p485 = por %p483, %p484
      %p486 = scmp.le.s32.totalorder 1, %s27
      %p487 = scmp.lt.s32.totalorder %s27, 3
      %p488 = pnand %p486, %p487
      %p489 = pneg %p488
      // Predicated region
      $region9: #{bert_lora_classifier_forward.9} parent=5 // pred_check
        _
      $region10: #{bert_lora_classifier_forward.9} parent=5 // pred_check_branch
        %491 = sbr.rel (%p488) target = $region12
      $region11: #{bert_lora_classifier_forward.9} parent=5 // pred_region
        %s492 = ssub.s32 %s27, 1
        // Predicated region
        $region13: #{bert_lora_classifier_forward.9} parent=11 // pred_check
          %p493 = pneg %p112
        $region14: #{bert_lora_classifier_forward.9} parent=11 // pred_check_branch
          %495 = sbr.rel (%p493) target = $region16
        $region15: #{bert_lora_classifier_forward.9} parent=11 // pred_region
          %497 = vsyncadd [#allocation5], 0
          %s498 = sshll.u32 %s2, 4
          %s499 = int_to_ptr.hbm [resolvable:$true] %s498
          %s500 = sshll.u32 [#allocation4], 4
          %s501 = int_to_ptr.vmem [resolvable:$true] %s500
          %506 = dma.hbm_to_vmem [thread:$0]  %s499, 1024, %s501, [#allocation5], 64, 64, 4
        $region16: #{bert_lora_classifier_forward.9} parent=11 // pred_fallthru
          _
        // Predicated region
        $region17: #{bert_lora_classifier_forward.9} parent=11 // pred_check
          %p507 = pneg %p133
        $region18: #{bert_lora_classifier_forward.9} parent=11 // pred_check_branch
          %509 = sbr.rel (%p507) target = $region20
        $region19: #{bert_lora_classifier_forward.9} parent=11 // pred_region
          _
        $region20: #{bert_lora_classifier_forward.9} parent=11 // pred_fallthru
          _
        // Predicated region
        $region21: #{bert_lora_classifier_forward.9} parent=11 // pred_check
          %p510 = pneg %p154
        $region22: #{bert_lora_classifier_forward.9} parent=11 // pred_check_branch
          %512 = sbr.rel (%p510) target = $region24
        $region23: #{bert_lora_classifier_forward.9} parent=11 // pred_region
          _
        $region24: #{bert_lora_classifier_forward.9} parent=11 // pred_fallthru
          _
        // Predicated region
        $region25: #{bert_lora_classifier_forward.9} parent=11 // pred_check
          %p513 = pneg %p175
        $region26: #{bert_lora_classifier_forward.9} parent=11 // pred_check_branch
          %515 = sbr.rel (%p513) target = $region28
        $region27: #{bert_lora_classifier_forward.9} parent=11 // pred_region
          _
        $region28: #{bert_lora_classifier_forward.9} parent=11 // pred_fallthru
          _
        // Predicated region
        $region29: #{bert_lora_classifier_forward.9} parent=11 // pred_check
          %p516 = pneg %p201
        $region30: #{bert_lora_classifier_forward.9} parent=11 // pred_check_branch
          %518 = sbr.rel (%p516) target = $region32
        $region31: #{bert_lora_classifier_forward.9} parent=11 // pred_region
          %s519 = smul.u32 2, %s37
          %p520 = scmp.lt.s32.totalorder %s519, 1
          %s521 = scalar_select %p520, %s519, 1
          %s522 = smul.addr %s521, 4
          %s523 = scalar_lea.vmem %s6, %s522
          %s524 = smul.u32 2, %s37
        $region32: #{bert_lora_classifier_forward.9} parent=11 // pred_fallthru
          _
        // Predicated region
        $region33: #{bert_lora_classifier_forward.9} parent=11 // pred_check
          %p525 = pneg %p227
        $region34: #{bert_lora_classifier_forward.9} parent=11 // pred_check_branch
          %527 = sbr.rel (%p525) target = $region36
        $region35: #{bert_lora_classifier_forward.9} parent=11 // pred_region
          %s528 = smul.u32 2, %s37
          %p529 = scmp.lt.s32.totalorder %s528, 1
          %s530 = scalar_select %p529, %s528, 1
          %s531 = scalar_lea.vmem %s7, %s530
          %s532 = smul.u32 2, %s37
        $region36: #{bert_lora_classifier_forward.9} parent=11 // pred_fallthru
          _
        // Predicated region
        $region37: #{bert_lora_classifier_forward.9} parent=11 // pred_check
          %p533 = pneg %p253
        $region38: #{bert_lora_classifier_forward.9} parent=11 // pred_check_branch
          %535 = sbr.rel (%p533) target = $region40
        $region39: #{bert_lora_classifier_forward.9} parent=11 // pred_region
          %s536 = smul.u32 32, %s37
          %p537 = scmp.lt.s32.totalorder %s536, 31
          %s538 = scalar_select %p537, %s536, 31
          %s539 = smul.addr %s538, 4
          %s540 = scalar_lea.vmem %s8, %s539
          %s541 = smul.u32 32, %s37
        $region40: #{bert_lora_classifier_forward.9} parent=11 // pred_fallthru
          _
        // Predicated region
        $region41: #{bert_lora_classifier_forward.9} parent=11 // pred_check
          %p542 = pneg %p274
        $region42: #{bert_lora_classifier_forward.9} parent=11 // pred_check_branch
          %544 = sbr.rel (%p542) target = $region44
        $region43: #{bert_lora_classifier_forward.9} parent=11 // pred_region
          _
        $region44: #{bert_lora_classifier_forward.9} parent=11 // pred_fallthru
          _
        // Predicated region
        $region45: #{bert_lora_classifier_forward.9} parent=11 // pred_check
          %p545 = pneg %p295
        $region46: #{bert_lora_classifier_forward.9} parent=11 // pred_check_branch
          %547 = sbr.rel (%p545) target = $region48
        $region47: #{bert_lora_classifier_forward.9} parent=11 // pred_region
          _
        $region48: #{bert_lora_classifier_forward.9} parent=11 // pred_fallthru
          _
        // Predicated region
        $region49: #{bert_lora_classifier_forward.9} parent=11 // pred_check
          %p548 = pneg %p316
        $region50: #{bert_lora_classifier_forward.9} parent=11 // pred_check_branch
          %550 = sbr.rel (%p548) target = $region52
        $region51: #{bert_lora_classifier_forward.9} parent=11 // pred_region
          _
        $region52: #{bert_lora_classifier_forward.9} parent=11 // pred_fallthru
          _
        // Predicated region
        $region53: #{bert_lora_classifier_forward.9} parent=11 // pred_check
          %p551 = pneg %p337
        $region54: #{bert_lora_classifier_forward.9} parent=11 // pred_check_branch
          %553 = sbr.rel (%p551) target = $region56
        $region55: #{bert_lora_classifier_forward.9} parent=11 // pred_region
          %555 = vsyncadd [#allocation7], 0
          %s556 = sshll.u32 %s12, 4
          %s557 = int_to_ptr.hbm [resolvable:$true] %s556
          %s558 = sshll.u32 [#allocation6], 4
          %s559 = int_to_ptr.vmem [resolvable:$true] %s558
          %564 = dma.hbm_to_vmem [thread:$0]  %s557, 1024, %s559, [#allocation7], 64, 64, 4
        $region56: #{bert_lora_classifier_forward.9} parent=11 // pred_fallthru
          _
        // Predicated region
        $region57: #{bert_lora_classifier_forward.9} parent=11 // pred_check
          %p565 = pneg %p358
        $region58: #{bert_lora_classifier_forward.9} parent=11 // pred_check_branch
          %567 = sbr.rel (%p565) target = $region60
        $region59: #{bert_lora_classifier_forward.9} parent=11 // pred_region
          _
        $region60: #{bert_lora_classifier_forward.9} parent=11 // pred_fallthru
          _
        // Predicated region
        $region61: #{bert_lora_classifier_forward.9} parent=11 // pred_check
          %p568 = pneg %p379
        $region62: #{bert_lora_classifier_forward.9} parent=11 // pred_check_branch
          %570 = sbr.rel (%p568) target = $region64
        $region63: #{bert_lora_classifier_forward.9} parent=11 // pred_region
          _
        $region64: #{bert_lora_classifier_forward.9} parent=11 // pred_fallthru
          _
        // Predicated region
        $region65: #{bert_lora_classifier_forward.9} parent=11 // pred_check
          %p571 = pneg %p400
        $region66: #{bert_lora_classifier_forward.9} parent=11 // pred_check_branch
          %573 = sbr.rel (%p571) target = $region68
        $region67: #{bert_lora_classifier_forward.9} parent=11 // pred_region
          _
        $region68: #{bert_lora_classifier_forward.9} parent=11 // pred_fallthru
          _
      $region12: #{bert_lora_classifier_forward.9} parent=5 // pred_fallthru
        _
      %p574 = scmp.lt.s32.totalorder %s27, 2
      // Predicated region
      $region69: #{bert_lora_classifier_forward.9} parent=5 // pred_check
        %p575 = pneg %p574
      $region70: #{bert_lora_classifier_forward.9} parent=5 // pred_check_branch
        %577 = sbr.rel (%p575) target = $region72
      $region71: #{bert_lora_classifier_forward.9} parent=5 // pred_region
        // Predicated region
        $region73: #{bert_lora_classifier_forward.9} parent=71 // pred_check
          %p578 = pneg %p59
        $region74: #{bert_lora_classifier_forward.9} parent=71 // pred_check_branch
          %580 = sbr.rel (%p578) target = $region76
        $region75: #{bert_lora_classifier_forward.9} parent=71 // pred_region
          %s581 = smul.u32 4, %s34
          %p582 = scmp.lt.s32.totalorder %s581, 7
          %s583 = scalar_select %p582, %s581, 7
          %s584 = smul.addr %s583, 4
          %s585 = scalar_lea.vmem %s0, %s584
          %s586 = smul.u32 4, %s34
        $region76: #{bert_lora_classifier_forward.9} parent=71 // pred_fallthru
          _
        // Predicated region
        $region77: #{bert_lora_classifier_forward.9} parent=71 // pred_check
          %p587 = pneg %p85
        $region78: #{bert_lora_classifier_forward.9} parent=71 // pred_check_branch
          %589 = sbr.rel (%p587) target = $region80
        $region79: #{bert_lora_classifier_forward.9} parent=71 // pred_region
          %s590 = smul.u32 4, %s34
          %p591 = scmp.lt.s32.totalorder %s590, 7
          %s592 = scalar_select %p591, %s590, 7
          %s593 = smul.addr %s592, 4
          %s594 = scalar_lea.vmem %s1, %s593
          %s595 = smul.u32 4, %s34
        $region80: #{bert_lora_classifier_forward.9} parent=71 // pred_fallthru
          _
      $region72: #{bert_lora_classifier_forward.9} parent=5 // pred_fallthru
        _
      %p596 = scmp.le.s32.totalorder 1, %s27
      %p597 = scmp.lt.s32.totalorder %s27, 3
      %p598 = pnand %p596, %p597
      %p599 = pneg %p598
      // Predicated region
      $region81: #{bert_lora_classifier_forward.9} parent=5 // pred_check
        _
      $region82: #{bert_lora_classifier_forward.9} parent=5 // pred_check_branch
        %601 = sbr.rel (%p598) target = $region84
      $region83: #{bert_lora_classifier_forward.9} parent=5 // pred_region
        %s602 = ssub.s32 %s27, 1
        // Predicated region
        $region85: #{bert_lora_classifier_forward.9} parent=83 // pred_check
          %p603 = pneg %p112
        $region86: #{bert_lora_classifier_forward.9} parent=83 // pred_check_branch
          %605 = sbr.rel (%p603) target = $region88
        $region87: #{bert_lora_classifier_forward.9} parent=83 // pred_region
          %607 = dma.done [#allocation5], 1024
        $region88: #{bert_lora_classifier_forward.9} parent=83 // pred_fallthru
          _
        // Predicated region
        $region89: #{bert_lora_classifier_forward.9} parent=83 // pred_check
          %p608 = pneg %p337
        $region90: #{bert_lora_classifier_forward.9} parent=83 // pred_check_branch
          %610 = sbr.rel (%p608) target = $region92
        $region91: #{bert_lora_classifier_forward.9} parent=83 // pred_region
          %612 = dma.done [#allocation7], 1024
        $region92: #{bert_lora_classifier_forward.9} parent=83 // pred_fallthru
          _
        %s613 = smul.u32 4, %s36
        %p614 = scmp.lt.s32.totalorder %s613, 7
        %s615 = scalar_select %p614, %s613, 7
        %s616 = smul.addr %s615, 4
        %s617 = scalar_lea.vmem %s0, %s616
        %p618 = pneg %p65
        %p619 = pneg %p62
        %s620 = smul.u32 4, %s36
        %p621 = scmp.lt.s32.totalorder %s620, 7
        %s622 = scalar_select %p621, %s620, 7
        %s623 = smul.addr %s622, 4
        %s624 = scalar_lea.vmem %s1, %s623
        %p625 = pneg %p91
        %p626 = pneg %p88
        %p627 = pneg %p112
        %p628 = pneg %p109
        %p629 = pneg %p133
        %p630 = pneg %p130
        %p631 = pneg %p154
        %p632 = pneg %p151
        %p633 = pneg %p175
        %p634 = pneg %p172
        %s635 = smul.u32 2, %s37
        %p636 = scmp.lt.s32.totalorder %s635, 1
        %s637 = scalar_select %p636, %s635, 1
        %s638 = smul.addr %s637, 4
        %s639 = scalar_lea.vmem %s6, %s638
        %p640 = pneg %p201
        %p641 = pneg %p198
        %s642 = smul.u32 2, %s37
        %p643 = scmp.lt.s32.totalorder %s642, 1
        %s644 = scalar_select %p643, %s642, 1
        %s645 = scalar_lea.vmem %s7, %s644
        %p646 = pneg %p227
        %p647 = pneg %p224
        %s648 = smul.u32 32, %s37
        %p649 = scmp.lt.s32.totalorder %s648, 31
        %s650 = scalar_select %p649, %s648, 31
        %s651 = smul.addr %s650, 4
        %s652 = scalar_lea.vmem %s8, %s651
        %p653 = pneg %p253
        %p654 = pneg %p250
        %p655 = pneg %p274
        %p656 = pneg %p271
        %p657 = pneg %p295
        %p658 = pneg %p292
        %p659 = pneg %p316
        %p660 = pneg %p313
        %p661 = pneg %p337
        %p662 = pneg %p334
        %p663 = pneg %p358
        %p664 = pneg %p355
        %p665 = pneg %p379
        %p666 = pneg %p376
        %p667 = pneg %p400
        %p668 = pneg %p397
        %p669 = pneg %p426
        %p670 = pneg %p423
        %s671 = smul.u32 4, %s36
        %p672 = scmp.lt.s32.totalorder %s671, 7
        %s673 = scalar_select %p672, %s671, 7
        %s674 = smul.addr %s673, 4
        %s675 = scalar_lea.vmem %s16, %s674
        %p676 = pneg %p452
        %p677 = pneg %p449
        %s678 = smul.u32 4, %s36
        %p679 = scmp.lt.s32.totalorder %s678, 7
        %s680 = scalar_select %p679, %s678, 7
        %s681 = smul.addr %s680, 4
        %s682 = scalar_lea.vmem %s17, %s681
        %p683 = pneg %p478
        %p684 = pneg %p475
        %s685 = smul.u32 4, %s36
        %p686 = scmp.lt.s32.totalorder %s685, 7
        %s687 = scalar_select %p686, %s685, 7
        %s688 = smul.addr %s687, 2
        %s689 = smul.addr %s688, 4
        %s690 = scalar_lea.vmem %s18, %s689
        %s691 = smul.u32 4, %s36
        %p692 = scmp.lt.s32.totalorder %s691, 7
        %s693 = scalar_select %p692, %s691, 7
        %s694 = smul.addr %s693, 4
        %s695 = scalar_lea.vmem %s0, %s694
        %s696 = smul.u32 4, %s36
        %s697 = smul.u32 4, %s36
        %p698 = scmp.lt.s32.totalorder %s697, 7
        %s699 = scalar_select %p698, %s697, 7
        %s700 = smul.addr %s699, 4
        %s701 = scalar_lea.vmem %s1, %s700
        %s702 = smul.u32 4, %s36
        %s703 = smul.u32 2, %s37
        %p704 = scmp.lt.s32.totalorder %s703, 1
        %s705 = scalar_select %p704, %s703, 1
        %s706 = smul.addr %s705, 4
        %s707 = scalar_lea.vmem %s6, %s706
        %s708 = smul.u32 2, %s37
        %s709 = smul.u32 2, %s37
        %p710 = scmp.lt.s32.totalorder %s709, 1
        %s711 = scalar_select %p710, %s709, 1
        %s712 = scalar_lea.vmem %s7, %s711
        %s713 = smul.u32 2, %s37
        %s714 = smul.u32 32, %s37
        %p715 = scmp.lt.s32.totalorder %s714, 31
        %s716 = scalar_select %p715, %s714, 31
        %s717 = smul.addr %s716, 4
        %s718 = scalar_lea.vmem %s8, %s717
        %s719 = smul.u32 32, %s37
        %s720 = smul.u32 4, %s36
        %p721 = scmp.lt.s32.totalorder %s720, 7
        %s722 = scalar_select %p721, %s720, 7
        %s723 = smul.addr %s722, 4
        %s724 = scalar_lea.vmem %s16, %s723
        %s725 = smul.u32 4, %s36
        %s726 = smul.u32 4, %s36
        %p727 = scmp.lt.s32.totalorder %s726, 7
        %s728 = scalar_select %p727, %s726, 7
        %s729 = smul.addr %s728, 4
        %s730 = scalar_lea.vmem %s17, %s729
        %s731 = smul.u32 4, %s36
        %s732 = smul.u32 4, %s36
        %p733 = scmp.lt.s32.totalorder %s732, 7
        %s734 = scalar_select %p733, %s732, 7
        %s735 = smul.addr %s734, 2
        %s736 = smul.addr %s735, 4
        %s737 = scalar_lea.vmem %s18, %s736
        %s738 = smul.u32 4, %s36
        %p739 = scmp.eq.s32.totalorder %s37, 0
        // Predicated region
        $region93: #{bert_lora_classifier_forward.9} parent=83 // pred_check
          %p740 = pneg %p739
        $region94: #{bert_lora_classifier_forward.9} parent=83 // pred_check_branch
          %742 = sbr.rel (%p740) target = $region96
        $region95: #{bert_lora_classifier_forward.9} parent=83 // pred_region
          %v743 = vld [vmem:[%s695] sm:$0xf]
          %v744 = vld [vmem:[%s695 + $0x4] sm:$0xf]
          %v745 = vld [vmem:[%s695 + $0x8] sm:$0xf]
          %v746 = vld [vmem:[%s695 + $0xc] sm:$0xf]
          %v747 = vld [vmem:[#allocation4] sm:$0xf]
          %v748 = vld [vmem:[#allocation4 + $0x4] sm:$0xf]
          %v749 = vld [vmem:[#allocation4 + $0x8] sm:$0xf]
          %v750 = vld [vmem:[#allocation4 + $0xc] sm:$0xf]
          %v751 = vld [vmem:[#allocation4 + $0x10] sm:$0xf]
          %v752 = vld [vmem:[#allocation4 + $0x14] sm:$0xf]
          %v753 = vld [vmem:[#allocation4 + $0x18] sm:$0xf]
          %v754 = vld [vmem:[#allocation4 + $0x1c] sm:$0xf]
          %v755 = vld [vmem:[#allocation4 + $0x20] sm:$0xf]
          %v756 = vld [vmem:[#allocation4 + $0x24] sm:$0xf]
          %v757 = vld [vmem:[#allocation4 + $0x28] sm:$0xf]
          %v758 = vld [vmem:[#allocation4 + $0x2c] sm:$0xf]
          %v759 = vld [vmem:[#allocation4 + $0x30] sm:$0xf]
          %v760 = vld [vmem:[#allocation4 + $0x34] sm:$0xf]
          %v761 = vld [vmem:[#allocation4 + $0x38] sm:$0xf]
          %v762 = vld [vmem:[#allocation4 + $0x3c] sm:$0xf]
          %v763 = vld [vmem:[%s3] sm:$0x1]
          %v765 = vperm.slane %v763, 0
          %v771 = vunpack.c.l.b16 %v743
          %v772 = vunpack.c.l.b16 %v744
          %v773 = vunpack.c.l.b16 %v745
          %v774 = vunpack.c.l.b16 %v746
          %v775 = vpack.c.b16 %v772, %v771
          %v776 = vpack.c.b16 %v774, %v773
          %v795 = vunpack.c.l.b16 %v747
          %v796 = vunpack.c.l.b16 %v748
          %v797 = vunpack.c.l.b16 %v749
          %v798 = vunpack.c.l.b16 %v750
          %v799 = vunpack.c.l.b16 %v751
          %v800 = vunpack.c.l.b16 %v752
          %v801 = vunpack.c.l.b16 %v753
          %v802 = vunpack.c.l.b16 %v754
          %v803 = vunpack.c.l.b16 %v755
          %v804 = vunpack.c.l.b16 %v756
          %v805 = vunpack.c.l.b16 %v757
          %v806 = vunpack.c.l.b16 %v758
          %v807 = vunpack.c.l.b16 %v759
          %v808 = vunpack.c.l.b16 %v760
          %v809 = vunpack.c.l.b16 %v761
          %v810 = vunpack.c.l.b16 %v762
          %v811 = vpack.c.b16 %v796, %v795
          %v812 = vpack.c.b16 %v798, %v797
          %v813 = vpack.c.b16 %v800, %v799
          %v814 = vpack.c.b16 %v802, %v801
          %v815 = vpack.c.b16 %v804, %v803
          %v816 = vpack.c.b16 %v806, %v805
          %v817 = vpack.c.b16 %v808, %v807
          %v818 = vpack.c.b16 %v810, %v809
          %827 = vmatpush.bf16.msra.mxu0 %v818
          %828 = vmatpush.bf16.msra.mxu0 %v817
          %829 = vmatpush.bf16.msra.mxu0 %v816
          %830 = vmatpush.bf16.msra.mxu0 %v815
          %831 = vmatpush.bf16.msra.mxu0 %v814
          %832 = vmatpush.bf16.msra.mxu0 %v813
          %833 = vmatpush.bf16.msra.mxu0 %v812
          %834 = vmatpush.bf16.msra.mxu0 %v811
          %835 = vmatmul.bf16.gmra.mxu0 %v775
          %v836 = vpop.f32.mrf.mxu0
          %v837 = vadd.f32 %v765, %v836
          %v838 = vpop.f32.mrf.mxu0
          %v839 = vadd.f32 %v765, %v838
          %840 = vmatmul.bf16.gmra.mxu0 %v776
          %v841 = vpop.f32.mrf.mxu0
          %v842 = vadd.f32 %v765, %v841
          %v843 = vpop.f32.mrf.mxu0
          %v844 = vadd.f32 %v765, %v843
          %845 = vdwg.mxu0
          %v846 = vld [vmem:[%s701] sm:$0xf]
          %v847 = vld [vmem:[%s701 + $0x4] sm:$0xf]
          %v848 = vld [vmem:[%s701 + $0x8] sm:$0xf]
          %v849 = vld [vmem:[%s701 + $0xc] sm:$0xf]
          %v850 = vunpack.c.l.bf16 %v846
          %v851 = vunpack.c.l.bf16 %v847
          %v852 = vunpack.c.l.bf16 %v848
          %v853 = vunpack.c.l.bf16 %v849
          %v854 = vadd.f32 %v850, %v837
          %v855 = vadd.f32 %v851, %v839
          %v856 = vadd.f32 %v852, %v842
          %v857 = vadd.f32 %v853, %v844
          %v858 = vld [vmem:[%s4] sm:$0x1]
          %v859 = vld [vmem:[%s5] sm:$0x1]
          %860 = vadd.xlane.f32.xlu0 %v854
          %v861 = vpop.xlane.xlu0 %860
          %862 = vadd.xlane.f32.xlu0 %v855
          %v863 = vpop.xlane.xlu0 %862
          %864 = vadd.xlane.f32.xlu0 %v856
          %v865 = vpop.xlane.xlu0 %864
          %866 = vadd.xlane.f32.xlu0 %v857
          %v867 = vpop.xlane.xlu0 %866
          %v868 = vrcp.pop 128.0
          %v869 = vmul.f32 128.0, %v868
          %v870 = vsub.f32 1.0, %v869
          %v871 = vmul.f32 %v868, %v870
          %v872 = vadd.f32 %v868, %v871
          %vm873 = vweird.f32 %v868
          %v874 = vsel %vm873, %v868, %v872
          %v875 = vmul.f32 %v861, %v874
          %v876 = vmul.f32 %v863, %v874
          %v877 = vmul.f32 %v865, %v874
          %v878 = vmul.f32 %v867, %v874
          %v879 = vsub.f32 %v854, %v875
          %v880 = vsub.f32 %v855, %v876
          %v881 = vsub.f32 %v856, %v877
          %v882 = vsub.f32 %v857, %v878
          %v883 = vmul.f32 %v879, %v879
          %v884 = vmul.f32 %v880, %v880
          %v885 = vmul.f32 %v881, %v881
          %v886 = vmul.f32 %v882, %v882
          %887 = vadd.xlane.f32.xlu0 %v883
          %v888 = vpop.xlane.xlu0 %887
          %889 = vadd.xlane.f32.xlu0 %v884
          %v890 = vpop.xlane.xlu0 %889
          %891 = vadd.xlane.f32.xlu0 %v885
          %v892 = vpop.xlane.xlu0 %891
          %893 = vadd.xlane.f32.xlu0 %v886
          %v894 = vpop.xlane.xlu0 %893
          %v895 = vmul.f32 %v888, %v874
          %v896 = vmul.f32 %v890, %v874
          %v897 = vmul.f32 %v892, %v874
          %v898 = vmul.f32 %v894, %v874
          %v899 = vadd.f32 %v895, 1e-12
          %v900 = vadd.f32 %v896, 1e-12
          %v901 = vadd.f32 %v897, 1e-12
          %v902 = vadd.f32 %v898, 1e-12
          %v903 = vrsqrt.pop %v899
          %v904 = vmul.f32 %v903, %v899
          %v905 = vmul.f32 %v904, %v903
          %v906 = vmul.f32 0.5, %v905
          %v907 = vsub.f32 1.5, %v906
          %v908 = vmul.f32 %v903, %v907
          %vm909 = vweird.f32 %v899
          %vm910 = vweird.f32 %v903
          %vm911 = vmor %vm909, %vm910
          %v912 = vsel %vm911, %v903, %v908
          %v913 = vrsqrt.pop %v900
          %v914 = vmul.f32 %v913, %v900
          %v915 = vmul.f32 %v914, %v913
          %v916 = vmul.f32 0.5, %v915
          %v917 = vsub.f32 1.5, %v916
          %v918 = vmul.f32 %v913, %v917
          %vm919 = vweird.f32 %v900
          %vm920 = vweird.f32 %v913
          %vm921 = vmor %vm919, %vm920
          %v922 = vsel %vm921, %v913, %v918
          %v923 = vrsqrt.pop %v901
          %v924 = vmul.f32 %v923, %v901
          %v925 = vmul.f32 %v924, %v923
          %v926 = vmul.f32 0.5, %v925
          %v927 = vsub.f32 1.5, %v926
          %v928 = vmul.f32 %v923, %v927
          %vm929 = vweird.f32 %v901
          %vm930 = vweird.f32 %v923
          %vm931 = vmor %vm929, %vm930
          %v932 = vsel %vm931, %v923, %v928
          %v933 = vrsqrt.pop %v902
          %v934 = vmul.f32 %v933, %v902
          %v935 = vmul.f32 %v934, %v933
          %v936 = vmul.f32 0.5, %v935
          %v937 = vsub.f32 1.5, %v936
          %v938 = vmul.f32 %v933, %v937
          %vm939 = vweird.f32 %v902
          %vm940 = vweird.f32 %v933
          %vm941 = vmor %vm939, %vm940
          %v942 = vsel %vm941, %v933, %v938
          %v943 = vmul.f32 %v879, %v912
          %v944 = vmul.f32 %v880, %v922
          %v945 = vmul.f32 %v881, %v932
          %v946 = vmul.f32 %v882, %v942
          %v948 = vperm.slane %v858, 0
          %v950 = vmul.f32 %v943, %v948
          %v951 = vmul.f32 %v944, %v948
          %v952 = vmul.f32 %v945, %v948
          %v953 = vmul.f32 %v946, %v948
          %v955 = vperm.slane %v859, 0
          %v957 = vadd.f32 %v950, %v955
          %v958 = vadd.f32 %v951, %v955
          %v959 = vadd.f32 %v952, %v955
          %v960 = vadd.f32 %v953, %v955
          %961 = vst [vmem:[#allocation2] sm:$0xff] %v957
          %962 = vst [vmem:[#allocation2 + $0x8] sm:$0xff] %v958
          %963 = vst [vmem:[#allocation2 + $0x10] sm:$0xff] %v959
          %964 = vst [vmem:[#allocation2 + $0x18] sm:$0xff] %v960
          %965 = vst [vmem:[#allocation3] sm:$0xff] 0.0
          %966 = vst [vmem:[#allocation3 + $0x8] sm:$0xff] 0.0
          %967 = vst [vmem:[#allocation3 + $0x10] sm:$0xff] 0.0
          %968 = vst [vmem:[#allocation3 + $0x18] sm:$0xff] 0.0
        $region96: #{bert_lora_classifier_forward.9} parent=83 // pred_fallthru
          _
        %v969 = vld [vmem:[#allocation2] sm:$0xff]
        %v970 = vld [vmem:[#allocation2 + $0x8] sm:$0xff]
        %v971 = vld [vmem:[#allocation2 + $0x10] sm:$0xff]
        %v972 = vld [vmem:[#allocation2 + $0x18] sm:$0xff]
        %v973 = vpack.c.bf16 %v970, %v969
        %v974 = vpack.c.bf16 %v972, %v971
        %v975 = vld [vmem:[%s707] sm:$0xff]
        %v976 = vld [vmem:[%s707 + $0x8] sm:$0xff]
        %v977 = vld [vmem:[%s707 + $0x10] sm:$0xff]
        %v978 = vld [vmem:[%s707 + $0x18] sm:$0xff]
        %v979 = vld [vmem:[%s707 + $0x20] sm:$0xff]
        %v980 = vld [vmem:[%s707 + $0x28] sm:$0xff]
        %v981 = vld [vmem:[%s707 + $0x30] sm:$0xff]
        %v982 = vld [vmem:[%s707 + $0x38] sm:$0xff]
        %v983 = vld [vmem:[%s707 + $0x40] sm:$0xff]
        %v984 = vld [vmem:[%s707 + $0x48] sm:$0xff]
        %v985 = vld [vmem:[%s707 + $0x50] sm:$0xff]
        %v986 = vld [vmem:[%s707 + $0x58] sm:$0xff]
        %v987 = vld [vmem:[%s707 + $0x60] sm:$0xff]
        %v988 = vld [vmem:[%s707 + $0x68] sm:$0xff]
        %v989 = vld [vmem:[%s707 + $0x70] sm:$0xff]
        %v990 = vld [vmem:[%s707 + $0x78] sm:$0xff]
        %v991 = vld [vmem:[%s712] sm:$0x3]
        %v993 = vperm.slane %v991, 0
        %v994 = vperm.slane %v991, 1
        %v1013 = vunpack.c.l.b16 %v975
        %v1014 = vunpack.c.h.b16 %v975
        %v1015 = vunpack.c.l.b16 %v976
        %v1016 = vunpack.c.h.b16 %v976
        %v1017 = vunpack.c.l.b16 %v977
        %v1018 = vunpack.c.h.b16 %v977
        %v1019 = vunpack.c.l.b16 %v978
        %v1020 = vunpack.c.h.b16 %v978
        %v1021 = vunpack.c.l.b16 %v979
        %v1022 = vunpack.c.h.b16 %v979
        %v1023 = vunpack.c.l.b16 %v980
        %v1024 = vunpack.c.h.b16 %v980
        %v1025 = vunpack.c.l.b16 %v981
        %v1026 = vunpack.c.h.b16 %v981
        %v1027 = vunpack.c.l.b16 %v982
        %v1028 = vunpack.c.h.b16 %v982
        %v1029 = vunpack.c.l.b16 %v983
        %v1030 = vunpack.c.h.b16 %v983
        %v1031 = vunpack.c.l.b16 %v984
        %v1032 = vunpack.c.h.b16 %v984
        %v1033 = vunpack.c.l.b16 %v985
        %v1034 = vunpack.c.h.b16 %v985
        %v1035 = vunpack.c.l.b16 %v986
        %v1036 = vunpack.c.h.b16 %v986
        %v1037 = vunpack.c.l.b16 %v987
        %v1038 = vunpack.c.h.b16 %v987
        %v1039 = vunpack.c.l.b16 %v988
        %v1040 = vunpack.c.h.b16 %v988
        %v1041 = vunpack.c.l.b16 %v989
        %v1042 = vunpack.c.h.b16 %v989
        %v1043 = vunpack.c.l.b16 %v990
        %v1044 = vunpack.c.h.b16 %v990
        %v1045 = vpack.c.b16 %v1015, %v1013
        %v1046 = vpack.c.b16 %v1016, %v1014
        %v1047 = vpack.c.b16 %v1019, %v1017
        %v1048 = vpack.c.b16 %v1020, %v1018
        %v1049 = vpack.c.b16 %v1023, %v1021
        %v1050 = vpack.c.b16 %v1024, %v1022
        %v1051 = vpack.c.b16 %v1027, %v1025
        %v1052 = vpack.c.b16 %v1028, %v1026
        %v1053 = vpack.c.b16 %v1031, %v1029
        %v1054 = vpack.c.b16 %v1032, %v1030
        %v1055 = vpack.c.b16 %v1035, %v1033
        %v1056 = vpack.c.b16 %v1036, %v1034
        %v1057 = vpack.c.b16 %v1039, %v1037
        %v1058 = vpack.c.b16 %v1040, %v1038
        %v1059 = vpack.c.b16 %v1043, %v1041
        %v1060 = vpack.c.b16 %v1044, %v1042
        %1077 = vmatpush.bf16.msra.mxu0 %v1059
        %1078 = vmatpush.bf16.msra.mxu0 %v1057
        %1079 = vmatpush.bf16.msra.mxu0 %v1055
        %1080 = vmatpush.bf16.msra.mxu0 %v1053
        %1081 = vmatpush.bf16.msra.mxu0 %v1051
        %1082 = vmatpush.bf16.msra.mxu0 %v1049
        %1083 = vmatpush.bf16.msra.mxu0 %v1047
        %1084 = vmatpush.bf16.msra.mxu0 %v1045
        %1085 = vmatmul.bf16.gmra.mxu0 %v973
        %v1086 = vpop.f32.mrf.mxu0
        %v1087 = vadd.f32 %v993, %v1086
        %v1088 = vpop.f32.mrf.mxu0
        %v1089 = vadd.f32 %v993, %v1088
        %1090 = vmatmul.bf16.gmra.mxu0 %v974
        %v1091 = vpop.f32.mrf.mxu0
        %v1092 = vadd.f32 %v993, %v1091
        %v1093 = vpop.f32.mrf.mxu0
        %v1094 = vadd.f32 %v993, %v1093
        %1095 = vdwg.mxu0
        %1096 = vmatpush.bf16.msra.mxu0 %v1060
        %1097 = vmatpush.bf16.msra.mxu0 %v1058
        %1098 = vmatpush.bf16.msra.mxu0 %v1056
        %1099 = vmatpush.bf16.msra.mxu0 %v1054
        %1100 = vmatpush.bf16.msra.mxu0 %v1052
        %1101 = vmatpush.bf16.msra.mxu0 %v1050
        %1102 = vmatpush.bf16.msra.mxu0 %v1048
        %1103 = vmatpush.bf16.msra.mxu0 %v1046
        %1104 = vmatmul.bf16.gmra.mxu0 %v973
        %v1105 = vpop.f32.mrf.mxu0
        %v1106 = vadd.f32 %v994, %v1105
        %v1107 = vpop.f32.mrf.mxu0
        %v1108 = vadd.f32 %v994, %v1107
        %1109 = vmatmul.bf16.gmra.mxu0 %v974
        %v1110 = vpop.f32.mrf.mxu0
        %v1111 = vadd.f32 %v994, %v1110
        %v1112 = vpop.f32.mrf.mxu0
        %v1113 = vadd.f32 %v994, %v1112
        %1114 = vdwg.mxu0
        %v1115 = vmul.f32 %v1087, %v1087
        %v1116 = vmul.f32 %v1106, %v1106
        %v1117 = vmul.f32 %v1089, %v1089
        %v1118 = vmul.f32 %v1108, %v1108
        %v1119 = vmul.f32 %v1092, %v1092
        %v1120 = vmul.f32 %v1111, %v1111
        %v1121 = vmul.f32 %v1094, %v1094
        %v1122 = vmul.f32 %v1113, %v1113
        %v1123 = vmul.f32 %v1087, %v1115
        %v1124 = vmul.f32 %v1106, %v1116
        %v1125 = vmul.f32 %v1089, %v1117
        %v1126 = vmul.f32 %v1108, %v1118
        %v1127 = vmul.f32 %v1092, %v1119
        %v1128 = vmul.f32 %v1111, %v1120
        %v1129 = vmul.f32 %v1094, %v1121
        %v1130 = vmul.f32 %v1113, %v1122
        %v1131 = vmul.f32 %v1123, 0.044715
        %v1132 = vmul.f32 %v1124, 0.044715
        %v1133 = vmul.f32 %v1125, 0.044715
        %v1134 = vmul.f32 %v1126, 0.044715
        %v1135 = vmul.f32 %v1127, 0.044715
        %v1136 = vmul.f32 %v1128, 0.044715
        %v1137 = vmul.f32 %v1129, 0.044715
        %v1138 = vmul.f32 %v1130, 0.044715
        %v1139 = vadd.f32 %v1087, %v1131
        %v1140 = vadd.f32 %v1106, %v1132
        %v1141 = vadd.f32 %v1089, %v1133
        %v1142 = vadd.f32 %v1108, %v1134
        %v1143 = vadd.f32 %v1092, %v1135
        %v1144 = vadd.f32 %v1111, %v1136
        %v1145 = vadd.f32 %v1094, %v1137
        %v1146 = vadd.f32 %v1113, %v1138
        %v1147 = vmul.f32 %v1139, 0.7978846
        %v1148 = vmul.f32 %v1140, 0.7978846
        %v1149 = vmul.f32 %v1141, 0.7978846
        %v1150 = vmul.f32 %v1142, 0.7978846
        %v1151 = vmul.f32 %v1143, 0.7978846
        %v1152 = vmul.f32 %v1144, 0.7978846
        %v1153 = vmul.f32 %v1145, 0.7978846
        %v1154 = vmul.f32 %v1146, 0.7978846
        %v1155 = vtanh.pop %v1147
        %v1156 = vtanh.pop %v1148
        %v1157 = vtanh.pop %v1149
        %v1158 = vtanh.pop %v1150
        %v1159 = vtanh.pop %v1151
        %v1160 = vtanh.pop %v1152
        %v1161 = vtanh.pop %v1153
        %v1162 = vtanh.pop %v1154
        %v1163 = vadd.f32 %v1155, 1.0
        %v1164 = vadd.f32 %v1156, 1.0
        %v1165 = vadd.f32 %v1157, 1.0
        %v1166 = vadd.f32 %v1158, 1.0
        %v1167 = vadd.f32 %v1159, 1.0
        %v1168 = vadd.f32 %v1160, 1.0
        %v1169 = vadd.f32 %v1161, 1.0
        %v1170 = vadd.f32 %v1162, 1.0
        %v1171 = vmul.f32 %v1163, 0.5
        %v1172 = vmul.f32 %v1164, 0.5
        %v1173 = vmul.f32 %v1165, 0.5
        %v1174 = vmul.f32 %v1166, 0.5
        %v1175 = vmul.f32 %v1167, 0.5
        %v1176 = vmul.f32 %v1168, 0.5
        %v1177 = vmul.f32 %v1169, 0.5
        %v1178 = vmul.f32 %v1170, 0.5
        %v1179 = vmul.f32 %v1087, %v1171
        %v1180 = vmul.f32 %v1106, %v1172
        %v1181 = vmul.f32 %v1089, %v1173
        %v1182 = vmul.f32 %v1108, %v1174
        %v1183 = vmul.f32 %v1092, %v1175
        %v1184 = vmul.f32 %v1111, %v1176
        %v1185 = vmul.f32 %v1094, %v1177
        %v1186 = vmul.f32 %v1113, %v1178
        %v1187 = vld [vmem:[#allocation3] sm:$0xff]
        %v1188 = vld [vmem:[#allocation3 + $0x8] sm:$0xff]
        %v1189 = vld [vmem:[#allocation3 + $0x10] sm:$0xff]
        %v1190 = vld [vmem:[#allocation3 + $0x18] sm:$0xff]
        %v1191 = vpack.c.bf16 %v1181, %v1179
        %v1192 = vpack.c.bf16 %v1182, %v1180
        %v1193 = vpack.c.bf16 %v1185, %v1183
        %v1194 = vpack.c.bf16 %v1186, %v1184
        %v1195 = vld [vmem:[%s718] sm:$0xf]
        %v1196 = vld [vmem:[%s718 + $0x4] sm:$0xf]
        %v1197 = vld [vmem:[%s718 + $0x8] sm:$0xf]
        %v1198 = vld [vmem:[%s718 + $0xc] sm:$0xf]
        %v1199 = vld [vmem:[%s718 + $0x10] sm:$0xf]
        %v1200 = vld [vmem:[%s718 + $0x14] sm:$0xf]
        %v1201 = vld [vmem:[%s718 + $0x18] sm:$0xf]
        %v1202 = vld [vmem:[%s718 + $0x1c] sm:$0xf]
        %v1203 = vld [vmem:[%s718 + $0x20] sm:$0xf]
        %v1204 = vld [vmem:[%s718 + $0x24] sm:$0xf]
        %v1205 = vld [vmem:[%s718 + $0x28] sm:$0xf]
        %v1206 = vld [vmem:[%s718 + $0x2c] sm:$0xf]
        %v1207 = vld [vmem:[%s718 + $0x30] sm:$0xf]
        %v1208 = vld [vmem:[%s718 + $0x34] sm:$0xf]
        %v1209 = vld [vmem:[%s718 + $0x38] sm:$0xf]
        %v1210 = vld [vmem:[%s718 + $0x3c] sm:$0xf]
        %v1211 = vld [vmem:[%s718 + $0x40] sm:$0xf]
        %v1212 = vld [vmem:[%s718 + $0x44] sm:$0xf]
        %v1213 = vld [vmem:[%s718 + $0x48] sm:$0xf]
        %v1214 = vld [vmem:[%s718 + $0x4c] sm:$0xf]
        %v1215 = vld [vmem:[%s718 + $0x50] sm:$0xf]
        %v1216 = vld [vmem:[%s718 + $0x54] sm:$0xf]
        %v1217 = vld [vmem:[%s718 + $0x58] sm:$0xf]
        %v1218 = vld [vmem:[%s718 + $0x5c] sm:$0xf]
        %v1219 = vld [vmem:[%s718 + $0x60] sm:$0xf]
        %v1220 = vld [vmem:[%s718 + $0x64] sm:$0xf]
        %v1221 = vld [vmem:[%s718 + $0x68] sm:$0xf]
        %v1222 = vld [vmem:[%s718 + $0x6c] sm:$0xf]
        %v1223 = vld [vmem:[%s718 + $0x70] sm:$0xf]
        %v1224 = vld [vmem:[%s718 + $0x74] sm:$0xf]
        %v1225 = vld [vmem:[%s718 + $0x78] sm:$0xf]
        %v1226 = vld [vmem:[%s718 + $0x7c] sm:$0xf]
        %v1259 = vunpack.c.l.b16 %v1195
        %v1260 = vunpack.c.l.b16 %v1196
        %v1261 = vunpack.c.l.b16 %v1197
        %v1262 = vunpack.c.l.b16 %v1198
        %v1263 = vunpack.c.l.b16 %v1199
        %v1264 = vunpack.c.l.b16 %v1200
        %v1265 = vunpack.c.l.b16 %v1201
        %v1266 = vunpack.c.l.b16 %v1202
        %v1267 = vunpack.c.l.b16 %v1203
        %v1268 = vunpack.c.l.b16 %v1204
        %v1269 = vunpack.c.l.b16 %v1205
        %v1270 = vunpack.c.l.b16 %v1206
        %v1271 = vunpack.c.l.b16 %v1207
        %v1272 = vunpack.c.l.b16 %v1208
        %v1273 = vunpack.c.l.b16 %v1209
        %v1274 = vunpack.c.l.b16 %v1210
        %v1275 = vunpack.c.l.b16 %v1211
        %v1276 = vunpack.c.l.b16 %v1212
        %v1277 = vunpack.c.l.b16 %v1213
        %v1278 = vunpack.c.l.b16 %v1214
        %v1279 = vunpack.c.l.b16 %v1215
        %v1280 = vunpack.c.l.b16 %v1216
        %v1281 = vunpack.c.l.b16 %v1217
        %v1282 = vunpack.c.l.b16 %v1218
        %v1283 = vunpack.c.l.b16 %v1219
        %v1284 = vunpack.c.l.b16 %v1220
        %v1285 = vunpack.c.l.b16 %v1221
        %v1286 = vunpack.c.l.b16 %v1222
        %v1287 = vunpack.c.l.b16 %v1223
        %v1288 = vunpack.c.l.b16 %v1224
        %v1289 = vunpack.c.l.b16 %v1225
        %v1290 = vunpack.c.l.b16 %v1226
        %v1291 = vpack.c.b16 %v1260, %v1259
        %v1292 = vpack.c.b16 %v1262, %v1261
        %v1293 = vpack.c.b16 %v1264, %v1263
        %v1294 = vpack.c.b16 %v1266, %v1265
        %v1295 = vpack.c.b16 %v1268, %v1267
        %v1296 = vpack.c.b16 %v1270, %v1269
        %v1297 = vpack.c.b16 %v1272, %v1271
        %v1298 = vpack.c.b16 %v1274, %v1273
        %v1299 = vpack.c.b16 %v1276, %v1275
        %v1300 = vpack.c.b16 %v1278, %v1277
        %v1301 = vpack.c.b16 %v1280, %v1279
        %v1302 = vpack.c.b16 %v1282, %v1281
        %v1303 = vpack.c.b16 %v1284, %v1283
        %v1304 = vpack.c.b16 %v1286, %v1285
        %v1305 = vpack.c.b16 %v1288, %v1287
        %v1306 = vpack.c.b16 %v1290, %v1289
        %1323 = vmatpush.bf16.msra.mxu0 %v1298
        %1324 = vmatpush.bf16.msra.mxu0 %v1297
        %1325 = vmatpush.bf16.msra.mxu0 %v1296
        %1326 = vmatpush.bf16.msra.mxu0 %v1295
        %1327 = vmatpush.bf16.msra.mxu0 %v1294
        %1328 = vmatpush.bf16.msra.mxu0 %v1293
        %1329 = vmatpush.bf16.msra.mxu0 %v1292
        %1330 = vmatpush.bf16.msra.mxu0 %v1291
        %1331 = vmatmul.bf16.gmra.mxu0 %v1191
        %v1332 = vpop.f32.mrf.mxu0
        %v1333 = vadd.f32 0.0, %v1332
        %v1334 = vpop.f32.mrf.mxu0
        %v1335 = vadd.f32 0.0, %v1334
        %1336 = vmatmul.bf16.gmra.mxu0 %v1193
        %v1337 = vpop.f32.mrf.mxu0
        %v1338 = vadd.f32 0.0, %v1337
        %v1339 = vpop.f32.mrf.mxu0
        %v1340 = vadd.f32 0.0, %v1339
        %1341 = vdwg.mxu0
        %1342 = vmatpush.bf16.msra.mxu0 %v1306
        %1343 = vmatpush.bf16.msra.mxu0 %v1305
        %1344 = vmatpush.bf16.msra.mxu0 %v1304
        %1345 = vmatpush.bf16.msra.mxu0 %v1303
        %1346 = vmatpush.bf16.msra.mxu0 %v1302
        %1347 = vmatpush.bf16.msra.mxu0 %v1301
        %1348 = vmatpush.bf16.msra.mxu0 %v1300
        %1349 = vmatpush.bf16.msra.mxu0 %v1299
        %1350 = vmatmul.bf16.gmra.mxu0 %v1192
        %v1351 = vpop.f32.mrf.mxu0
        %v1352 = vadd.f32 %v1333, %v1351
        %v1353 = vpop.f32.mrf.mxu0
        %v1354 = vadd.f32 %v1335, %v1353
        %1355 = vmatmul.bf16.gmra.mxu0 %v1194
        %v1356 = vpop.f32.mrf.mxu0
        %v1357 = vadd.f32 %v1338, %v1356
        %v1358 = vpop.f32.mrf.mxu0
        %v1359 = vadd.f32 %v1340, %v1358
        %1360 = vdwg.mxu0
        %v1361 = vadd.f32 %v1187, %v1352
        %v1362 = vadd.f32 %v1188, %v1354
        %v1363 = vadd.f32 %v1189, %v1357
        %v1364 = vadd.f32 %v1190, %v1359
        %1365 = vst [vmem:[#allocation3] sm:$0xff] %v1361
        %1366 = vst [vmem:[#allocation3 + $0x8] sm:$0xff] %v1362
        %1367 = vst [vmem:[#allocation3 + $0x10] sm:$0xff] %v1363
        %1368 = vst [vmem:[#allocation3 + $0x18] sm:$0xff] %v1364
        // Predicated region
        $region97: #{bert_lora_classifier_forward.9} parent=83 // pred_check
          %p1369 = pneg %p739
        $region98: #{bert_lora_classifier_forward.9} parent=83 // pred_check_branch
          %1371 = sbr.rel (%p1369) target = $region100
        $region99: #{bert_lora_classifier_forward.9} parent=83 // pred_region
          %v1372 = vld [vmem:[#allocation2] sm:$0xff]
          %v1373 = vld [vmem:[#allocation2 + $0x8] sm:$0xff]
          %v1374 = vld [vmem:[#allocation2 + $0x10] sm:$0xff]
          %v1375 = vld [vmem:[#allocation2 + $0x18] sm:$0xff]
          %v1376 = vld [vmem:[#allocation3] sm:$0xff]
          %v1377 = vld [vmem:[#allocation3 + $0x8] sm:$0xff]
          %v1378 = vld [vmem:[#allocation3 + $0x10] sm:$0xff]
          %v1379 = vld [vmem:[#allocation3 + $0x18] sm:$0xff]
          %v1380 = vadd.f32 %v1372, %v1376
          %v1381 = vadd.f32 %v1373, %v1377
          %v1382 = vadd.f32 %v1374, %v1378
          %v1383 = vadd.f32 %v1375, %v1379
          %v1384 = vld [vmem:[%s9] sm:$0x1]
          %v1386 = vperm.slane %v1384, 0
          %v1388 = vadd.f32 %v1380, %v1386
          %v1389 = vadd.f32 %v1381, %v1386
          %v1390 = vadd.f32 %v1382, %v1386
          %v1391 = vadd.f32 %v1383, %v1386
          %v1392 = vld [vmem:[%s10] sm:$0x1]
          %v1393 = vld [vmem:[%s11] sm:$0x1]
          %1394 = vadd.xlane.f32.xlu0 %v1388
          %v1395 = vpop.xlane.xlu0 %1394
          %1396 = vadd.xlane.f32.xlu0 %v1389
          %v1397 = vpop.xlane.xlu0 %1396
          %1398 = vadd.xlane.f32.xlu0 %v1390
          %v1399 = vpop.xlane.xlu0 %1398
          %1400 = vadd.xlane.f32.xlu0 %v1391
          %v1401 = vpop.xlane.xlu0 %1400
          %v1402 = vrcp.pop 128.0
          %v1403 = vmul.f32 128.0, %v1402
          %v1404 = vsub.f32 1.0, %v1403
          %v1405 = vmul.f32 %v1402, %v1404
          %v1406 = vadd.f32 %v1402, %v1405
          %vm1407 = vweird.f32 %v1402
          %v1408 = vsel %vm1407, %v1402, %v1406
          %v1409 = vmul.f32 %v1395, %v1408
          %v1410 = vmul.f32 %v1397, %v1408
          %v1411 = vmul.f32 %v1399, %v1408
          %v1412 = vmul.f32 %v1401, %v1408
          %v1413 = vsub.f32 %v1388, %v1409
          %v1414 = vsub.f32 %v1389, %v1410
          %v1415 = vsub.f32 %v1390, %v1411
          %v1416 = vsub.f32 %v1391, %v1412
          %v1417 = vmul.f32 %v1413, %v1413
          %v1418 = vmul.f32 %v1414, %v1414
          %v1419 = vmul.f32 %v1415, %v1415
          %v1420 = vmul.f32 %v1416, %v1416
          %1421 = vadd.xlane.f32.xlu0 %v1417
          %v1422 = vpop.xlane.xlu0 %1421
          %1423 = vadd.xlane.f32.xlu0 %v1418
          %v1424 = vpop.xlane.xlu0 %1423
          %1425 = vadd.xlane.f32.xlu0 %v1419
          %v1426 = vpop.xlane.xlu0 %1425
          %1427 = vadd.xlane.f32.xlu0 %v1420
          %v1428 = vpop.xlane.xlu0 %1427
          %v1429 = vmul.f32 %v1422, %v1408
          %v1430 = vmul.f32 %v1424, %v1408
          %v1431 = vmul.f32 %v1426, %v1408
          %v1432 = vmul.f32 %v1428, %v1408
          %v1433 = vadd.f32 %v1429, 1e-12
          %v1434 = vadd.f32 %v1430, 1e-12
          %v1435 = vadd.f32 %v1431, 1e-12
          %v1436 = vadd.f32 %v1432, 1e-12
          %v1437 = vrsqrt.pop %v1433
          %v1438 = vmul.f32 %v1437, %v1433
          %v1439 = vmul.f32 %v1438, %v1437
          %v1440 = vmul.f32 0.5, %v1439
          %v1441 = vsub.f32 1.5, %v1440
          %v1442 = vmul.f32 %v1437, %v1441
          %vm1443 = vweird.f32 %v1433
          %vm1444 = vweird.f32 %v1437
          %vm1445 = vmor %vm1443, %vm1444
          %v1446 = vsel %vm1445, %v1437, %v1442
          %v1447 = vrsqrt.pop %v1434
          %v1448 = vmul.f32 %v1447, %v1434
          %v1449 = vmul.f32 %v1448, %v1447
          %v1450 = vmul.f32 0.5, %v1449
          %v1451 = vsub.f32 1.5, %v1450
          %v1452 = vmul.f32 %v1447, %v1451
          %vm1453 = vweird.f32 %v1434
          %vm1454 = vweird.f32 %v1447
          %vm1455 = vmor %vm1453, %vm1454
          %v1456 = vsel %vm1455, %v1447, %v1452
          %v1457 = vrsqrt.pop %v1435
          %v1458 = vmul.f32 %v1457, %v1435
          %v1459 = vmul.f32 %v1458, %v1457
          %v1460 = vmul.f32 0.5, %v1459
          %v1461 = vsub.f32 1.5, %v1460
          %v1462 = vmul.f32 %v1457, %v1461
          %vm1463 = vweird.f32 %v1435
          %vm1464 = vweird.f32 %v1457
          %vm1465 = vmor %vm1463, %vm1464
          %v1466 = vsel %vm1465, %v1457, %v1462
          %v1467 = vrsqrt.pop %v1436
          %v1468 = vmul.f32 %v1467, %v1436
          %v1469 = vmul.f32 %v1468, %v1467
          %v1470 = vmul.f32 0.5, %v1469
          %v1471 = vsub.f32 1.5, %v1470
          %v1472 = vmul.f32 %v1467, %v1471
          %vm1473 = vweird.f32 %v1436
          %vm1474 = vweird.f32 %v1467
          %vm1475 = vmor %vm1473, %vm1474
          %v1476 = vsel %vm1475, %v1467, %v1472
          %v1477 = vmul.f32 %v1413, %v1446
          %v1478 = vmul.f32 %v1414, %v1456
          %v1479 = vmul.f32 %v1415, %v1466
          %v1480 = vmul.f32 %v1416, %v1476
          %v1482 = vperm.slane %v1392, 0
          %v1484 = vmul.f32 %v1477, %v1482
          %v1485 = vmul.f32 %v1478, %v1482
          %v1486 = vmul.f32 %v1479, %v1482
          %v1487 = vmul.f32 %v1480, %v1482
          %v1489 = vperm.slane %v1393, 0
          %v1491 = vadd.f32 %v1484, %v1489
          %v1492 = vadd.f32 %v1485, %v1489
          %v1493 = vadd.f32 %v1486, %v1489
          %v1494 = vadd.f32 %v1487, %v1489
          %v1495 = vpack.c.bf16 %v1491, %v1491
          %v1496 = vpack.c.bf16 %v1492, %v1492
          %v1497 = vpack.c.bf16 %v1493, %v1493
          %v1498 = vpack.c.bf16 %v1494, %v1494
          %1499 = vst [vmem:[%s724] sm:$0xf] %v1495
          %1500 = vst [vmem:[%s724 + $0x4] sm:$0xf] %v1496
          %1501 = vst [vmem:[%s724 + $0x8] sm:$0xf] %v1497
          %1502 = vst [vmem:[%s724 + $0xc] sm:$0xf] %v1498
          %v1503 = vld [vmem:[#allocation6] sm:$0xf]
          %v1504 = vld [vmem:[#allocation6 + $0x4] sm:$0xf]
          %v1505 = vld [vmem:[#allocation6 + $0x8] sm:$0xf]
          %v1506 = vld [vmem:[#allocation6 + $0xc] sm:$0xf]
          %v1507 = vld [vmem:[#allocation6 + $0x10] sm:$0xf]
          %v1508 = vld [vmem:[#allocation6 + $0x14] sm:$0xf]
          %v1509 = vld [vmem:[#allocation6 + $0x18] sm:$0xf]
          %v1510 = vld [vmem:[#allocation6 + $0x1c] sm:$0xf]
          %v1511 = vld [vmem:[#allocation6 + $0x20] sm:$0xf]
          %v1512 = vld [vmem:[#allocation6 + $0x24] sm:$0xf]
          %v1513 = vld [vmem:[#allocation6 + $0x28] sm:$0xf]
          %v1514 = vld [vmem:[#allocation6 + $0x2c] sm:$0xf]
          %v1515 = vld [vmem:[#allocation6 + $0x30] sm:$0xf]
          %v1516 = vld [vmem:[#allocation6 + $0x34] sm:$0xf]
          %v1517 = vld [vmem:[#allocation6 + $0x38] sm:$0xf]
          %v1518 = vld [vmem:[#allocation6 + $0x3c] sm:$0xf]
          %v1519 = vld [vmem:[%s13] sm:$0x1]
          %v1521 = vperm.slane %v1519, 0
          %v1527 = vunpack.c.l.b16 %v1495
          %v1528 = vunpack.c.l.b16 %v1496
          %v1529 = vunpack.c.l.b16 %v1497
          %v1530 = vunpack.c.l.b16 %v1498
          %v1531 = vpack.c.b16 %v1528, %v1527
          %v1532 = vpack.c.b16 %v1530, %v1529
          %v1551 = vunpack.c.l.b16 %v1503
          %v1552 = vunpack.c.l.b16 %v1504
          %v1553 = vunpack.c.l.b16 %v1505
          %v1554 = vunpack.c.l.b16 %v1506
          %v1555 = vunpack.c.l.b16 %v1507
          %v1556 = vunpack.c.l.b16 %v1508
          %v1557 = vunpack.c.l.b16 %v1509
          %v1558 = vunpack.c.l.b16 %v1510
          %v1559 = vunpack.c.l.b16 %v1511
          %v1560 = vunpack.c.l.b16 %v1512
          %v1561 = vunpack.c.l.b16 %v1513
          %v1562 = vunpack.c.l.b16 %v1514
          %v1563 = vunpack.c.l.b16 %v1515
          %v1564 = vunpack.c.l.b16 %v1516
          %v1565 = vunpack.c.l.b16 %v1517
          %v1566 = vunpack.c.l.b16 %v1518
          %v1567 = vpack.c.b16 %v1552, %v1551
          %v1568 = vpack.c.b16 %v1554, %v1553
          %v1569 = vpack.c.b16 %v1556, %v1555
          %v1570 = vpack.c.b16 %v1558, %v1557
          %v1571 = vpack.c.b16 %v1560, %v1559
          %v1572 = vpack.c.b16 %v1562, %v1561
          %v1573 = vpack.c.b16 %v1564, %v1563
          %v1574 = vpack.c.b16 %v1566, %v1565
          %1583 = vmatpush.bf16.msra.mxu0 %v1574
          %1584 = vmatpush.bf16.msra.mxu0 %v1573
          %1585 = vmatpush.bf16.msra.mxu0 %v1572
          %1586 = vmatpush.bf16.msra.mxu0 %v1571
          %1587 = vmatpush.bf16.msra.mxu0 %v1570
          %1588 = vmatpush.bf16.msra.mxu0 %v1569
          %1589 = vmatpush.bf16.msra.mxu0 %v1568
          %1590 = vmatpush.bf16.msra.mxu0 %v1567
          %1591 = vmatmul.bf16.gmra.mxu0 %v1531
          %v1592 = vpop.f32.mrf.mxu0
          %v1593 = vadd.f32 %v1521, %v1592
          %v1594 = vpop.f32.mrf.mxu0
          %v1595 = vadd.f32 %v1521, %v1594
          %1596 = vmatmul.bf16.gmra.mxu0 %v1532
          %v1597 = vpop.f32.mrf.mxu0
          %v1598 = vadd.f32 %v1521, %v1597
          %v1599 = vpop.f32.mrf.mxu0
          %v1600 = vadd.f32 %v1521, %v1599
          %1601 = vdwg.mxu0
          %v1602 = vpack.c.bf16 %v1593, %v1593
          %v1603 = vpack.c.bf16 %v1595, %v1595
          %v1604 = vpack.c.bf16 %v1598, %v1598
          %v1605 = vpack.c.bf16 %v1600, %v1600
          %1606 = vst [vmem:[%s730] sm:$0xf] %v1602
          %1607 = vst [vmem:[%s730 + $0x4] sm:$0xf] %v1603
          %1608 = vst [vmem:[%s730 + $0x8] sm:$0xf] %v1604
          %1609 = vst [vmem:[%s730 + $0xc] sm:$0xf] %v1605
          %v1610 = vld [vmem:[%s14] sm:$0xff]
          %v1611 = vld [vmem:[%s14 + $0x8] sm:$0xff]
          %v1612 = vld [vmem:[%s14 + $0x10] sm:$0xff]
          %v1613 = vld [vmem:[%s14 + $0x18] sm:$0xff]
          %v1614 = vld [vmem:[%s14 + $0x20] sm:$0xff]
          %v1615 = vld [vmem:[%s14 + $0x28] sm:$0xff]
          %v1616 = vld [vmem:[%s14 + $0x30] sm:$0xff]
          %v1617 = vld [vmem:[%s14 + $0x38] sm:$0xff]
          %v1618 = vld [vmem:[%s14 + $0x40] sm:$0xff]
          %v1619 = vld [vmem:[%s14 + $0x48] sm:$0xff]
          %v1620 = vld [vmem:[%s14 + $0x50] sm:$0xff]
          %v1621 = vld [vmem:[%s14 + $0x58] sm:$0xff]
          %v1622 = vld [vmem:[%s14 + $0x60] sm:$0xff]
          %v1623 = vld [vmem:[%s14 + $0x68] sm:$0xff]
          %v1624 = vld [vmem:[%s14 + $0x70] sm:$0xff]
          %v1625 = vld [vmem:[%s14 + $0x78] sm:$0xff]
          %v1626 = vld [vmem:[%s15] sm:$0x3]
          %v1628 = vperm.slane %v1626, 0
          %v1629 = vperm.slane %v1626, 1
          %v1648 = vunpack.c.l.b16 %v1610
          %v1649 = vunpack.c.h.b16 %v1610
          %v1650 = vunpack.c.l.b16 %v1611
          %v1651 = vunpack.c.h.b16 %v1611
          %v1652 = vunpack.c.l.b16 %v1612
          %v1653 = vunpack.c.h.b16 %v1612
          %v1654 = vunpack.c.l.b16 %v1613
          %v1655 = vunpack.c.h.b16 %v1613
          %v1656 = vunpack.c.l.b16 %v1614
          %v1657 = vunpack.c.h.b16 %v1614
          %v1658 = vunpack.c.l.b16 %v1615
          %v1659 = vunpack.c.h.b16 %v1615
          %v1660 = vunpack.c.l.b16 %v1616
          %v1661 = vunpack.c.h.b16 %v1616
          %v1662 = vunpack.c.l.b16 %v1617
          %v1663 = vunpack.c.h.b16 %v1617
          %v1664 = vunpack.c.l.b16 %v1618
          %v1665 = vunpack.c.h.b16 %v1618
          %v1666 = vunpack.c.l.b16 %v1619
          %v1667 = vunpack.c.h.b16 %v1619
          %v1668 = vunpack.c.l.b16 %v1620
          %v1669 = vunpack.c.h.b16 %v1620
          %v1670 = vunpack.c.l.b16 %v1621
          %v1671 = vunpack.c.h.b16 %v1621
          %v1672 = vunpack.c.l.b16 %v1622
          %v1673 = vunpack.c.h.b16 %v1622
          %v1674 = vunpack.c.l.b16 %v1623
          %v1675 = vunpack.c.h.b16 %v1623
          %v1676 = vunpack.c.l.b16 %v1624
          %v1677 = vunpack.c.h.b16 %v1624
          %v1678 = vunpack.c.l.b16 %v1625
          %v1679 = vunpack.c.h.b16 %v1625
          %v1680 = vpack.c.b16 %v1650, %v1648
          %v1681 = vpack.c.b16 %v1651, %v1649
          %v1682 = vpack.c.b16 %v1654, %v1652
          %v1683 = vpack.c.b16 %v1655, %v1653
          %v1684 = vpack.c.b16 %v1658, %v1656
          %v1685 = vpack.c.b16 %v1659, %v1657
          %v1686 = vpack.c.b16 %v1662, %v1660
          %v1687 = vpack.c.b16 %v1663, %v1661
          %v1688 = vpack.c.b16 %v1666, %v1664
          %v1689 = vpack.c.b16 %v1667, %v1665
          %v1690 = vpack.c.b16 %v1670, %v1668
          %v1691 = vpack.c.b16 %v1671, %v1669
          %v1692 = vpack.c.b16 %v1674, %v1672
          %v1693 = vpack.c.b16 %v1675, %v1673
          %v1694 = vpack.c.b16 %v1678, %v1676
          %v1695 = vpack.c.b16 %v1679, %v1677
          %1712 = vmatpush.bf16.msra.mxu0 %v1694
          %1713 = vmatpush.bf16.msra.mxu0 %v1692
          %1714 = vmatpush.bf16.msra.mxu0 %v1690
          %1715 = vmatpush.bf16.msra.mxu0 %v1688
          %1716 = vmatpush.bf16.msra.mxu0 %v1686
          %1717 = vmatpush.bf16.msra.mxu0 %v1684
          %1718 = vmatpush.bf16.msra.mxu0 %v1682
          %1719 = vmatpush.bf16.msra.mxu0 %v1680
          %1720 = vmatmul.bf16.gmra.mxu0 %v1531
          %v1721 = vpop.f32.mrf.mxu0
          %v1722 = vadd.f32 %v1628, %v1721
          %v1723 = vpop.f32.mrf.mxu0
          %v1724 = vadd.f32 %v1628, %v1723
          %1725 = vmatmul.bf16.gmra.mxu0 %v1532
          %v1726 = vpop.f32.mrf.mxu0
          %v1727 = vadd.f32 %v1628, %v1726
          %v1728 = vpop.f32.mrf.mxu0
          %v1729 = vadd.f32 %v1628, %v1728
          %1730 = vdwg.mxu0
          %1731 = vmatpush.bf16.msra.mxu0 %v1695
          %1732 = vmatpush.bf16.msra.mxu0 %v1693
          %1733 = vmatpush.bf16.msra.mxu0 %v1691
          %1734 = vmatpush.bf16.msra.mxu0 %v1689
          %1735 = vmatpush.bf16.msra.mxu0 %v1687
          %1736 = vmatpush.bf16.msra.mxu0 %v1685
          %1737 = vmatpush.bf16.msra.mxu0 %v1683
          %1738 = vmatpush.bf16.msra.mxu0 %v1681
          %1739 = vmatmul.bf16.gmra.mxu0 %v1531
          %v1740 = vpop.f32.mrf.mxu0
          %v1741 = vadd.f32 %v1629, %v1740
          %v1742 = vpop.f32.mrf.mxu0
          %v1743 = vadd.f32 %v1629, %v1742
          %1744 = vmatmul.bf16.gmra.mxu0 %v1532
          %v1745 = vpop.f32.mrf.mxu0
          %v1746 = vadd.f32 %v1629, %v1745
          %v1747 = vpop.f32.mrf.mxu0
          %v1748 = vadd.f32 %v1629, %v1747
          %1749 = vdwg.mxu0
          %v1750 = vpack.c.bf16 %v1741, %v1722
          %v1751 = vpack.c.bf16 %v1743, %v1724
          %v1752 = vpack.c.bf16 %v1746, %v1727
          %v1753 = vpack.c.bf16 %v1748, %v1729
          %1754 = vst [vmem:[%s737] sm:$0xff] %v1750
          %1755 = vst [vmem:[%s737 + $0x8] sm:$0xff] %v1751
          %1756 = vst [vmem:[%s737 + $0x10] sm:$0xff] %v1752
          %1757 = vst [vmem:[%s737 + $0x18] sm:$0xff] %v1753
        $region100: #{bert_lora_classifier_forward.9} parent=83 // pred_fallthru
          _
        %s1758 = smul.u32 4, %s36
        %p1759 = scmp.lt.s32.totalorder %s1758, 7
        %s1760 = scalar_select %p1759, %s1758, 7
        %s1761 = smul.addr %s1760, 4
        %s1762 = scalar_lea.vmem %s16, %s1761
        %s1763 = smul.u32 4, %s36
        %p1764 = scmp.lt.s32.totalorder %s1763, 7
        %s1765 = scalar_select %p1764, %s1763, 7
        %s1766 = smul.addr %s1765, 4
        %s1767 = scalar_lea.vmem %s17, %s1766
        %s1768 = smul.u32 4, %s36
        %p1769 = scmp.lt.s32.totalorder %s1768, 7
        %s1770 = scalar_select %p1769, %s1768, 7
        %s1771 = smul.addr %s1770, 2
        %s1772 = smul.addr %s1771, 4
        %s1773 = scalar_lea.vmem %s18, %s1772
        // Predicated region
        $region101: #{bert_lora_classifier_forward.9} parent=83 // pred_check
          %p1774 = pneg %p423
        $region102: #{bert_lora_classifier_forward.9} parent=83 // pred_check_branch
          %1776 = sbr.rel (%p1774) target = $region104
        $region103: #{bert_lora_classifier_forward.9} parent=83 // pred_region
          %s1777 = smul.u32 4, %s36
        $region104: #{bert_lora_classifier_forward.9} parent=83 // pred_fallthru
          _
        // Predicated region
        $region105: #{bert_lora_classifier_forward.9} parent=83 // pred_check
          %p1778 = pneg %p449
        $region106: #{bert_lora_classifier_forward.9} parent=83 // pred_check_branch
          %1780 = sbr.rel (%p1778) target = $region108
        $region107: #{bert_lora_classifier_forward.9} parent=83 // pred_region
          %s1781 = smul.u32 4, %s36
        $region108: #{bert_lora_classifier_forward.9} parent=83 // pred_fallthru
          _
        // Predicated region
        $region109: #{bert_lora_classifier_forward.9} parent=83 // pred_check
          %p1782 = pneg %p475
        $region110: #{bert_lora_classifier_forward.9} parent=83 // pred_check_branch
          %1784 = sbr.rel (%p1782) target = $region112
        $region111: #{bert_lora_classifier_forward.9} parent=83 // pred_region
          %s1785 = smul.u32 4, %s36
        $region112: #{bert_lora_classifier_forward.9} parent=83 // pred_fallthru
          _
      $region84: #{bert_lora_classifier_forward.9} parent=5 // pred_fallthru
        _
      %p1786 = scmp.le.s32.totalorder 2, %s27
      // Predicated region
      $region113: #{bert_lora_classifier_forward.9} parent=5 // pred_check
        %p1787 = pneg %p1786
      $region114: #{bert_lora_classifier_forward.9} parent=5 // pred_check_branch
        %1789 = sbr.rel (%p1787) target = $region116
      $region115: #{bert_lora_classifier_forward.9} parent=5 // pred_region
        %s1790 = ssub.s32 %s27, 2
        // Predicated region
        $region117: #{bert_lora_classifier_forward.9} parent=115 // pred_check
          %p1791 = pneg %p429
        $region118: #{bert_lora_classifier_forward.9} parent=115 // pred_check_branch
          %1793 = sbr.rel (%p1791) target = $region120
        $region119: #{bert_lora_classifier_forward.9} parent=115 // pred_region
          %s1794 = smul.u32 4, %s38
          %p1795 = scmp.lt.s32.totalorder %s1794, 7
          %s1796 = scalar_select %p1795, %s1794, 7
          %s1797 = smul.addr %s1796, 4
          %s1798 = scalar_lea.vmem %s16, %s1797
        $region120: #{bert_lora_classifier_forward.9} parent=115 // pred_fallthru
          _
        // Predicated region
        $region121: #{bert_lora_classifier_forward.9} parent=115 // pred_check
          %p1799 = pneg %p455
        $region122: #{bert_lora_classifier_forward.9} parent=115 // pred_check_branch
          %1801 = sbr.rel (%p1799) target = $region124
        $region123: #{bert_lora_classifier_forward.9} parent=115 // pred_region
          %s1802 = smul.u32 4, %s38
          %p1803 = scmp.lt.s32.totalorder %s1802, 7
          %s1804 = scalar_select %p1803, %s1802, 7
          %s1805 = smul.addr %s1804, 4
          %s1806 = scalar_lea.vmem %s17, %s1805
        $region124: #{bert_lora_classifier_forward.9} parent=115 // pred_fallthru
          _
        // Predicated region
        $region125: #{bert_lora_classifier_forward.9} parent=115 // pred_check
          %p1807 = pneg %p481
        $region126: #{bert_lora_classifier_forward.9} parent=115 // pred_check_branch
          %1809 = sbr.rel (%p1807) target = $region128
        $region127: #{bert_lora_classifier_forward.9} parent=115 // pred_region
          %s1810 = smul.u32 4, %s38
          %p1811 = scmp.lt.s32.totalorder %s1810, 7
          %s1812 = scalar_select %p1811, %s1810, 7
          %s1813 = smul.addr %s1812, 2
          %s1814 = smul.addr %s1813, 4
          %s1815 = scalar_lea.vmem %s18, %s1814
        $region128: #{bert_lora_classifier_forward.9} parent=115 // pred_fallthru
          _
      $region116: #{bert_lora_classifier_forward.9} parent=5 // pred_fallthru
        _
    $region6: #{bert_lora_classifier_forward.9} parent=1 // loop_footer
      %s31 = sadd.s32 1, %s27
    $region7: #{bert_lora_classifier_forward.9} parent=1 // loop_footer_branch
      %26 = sbr.rel target = $region3
    $region8: #{bert_lora_classifier_forward.9} parent=1 // loop_exit
      _
    %1816 = vsyncpa [#allocation5], 1
    %s1817 = scalar_lea.sflag [#allocation5], 1
    %1818 = vsyncpa %s1817, 1
    %1819 = vsyncpa [#allocation7], 1

</llo_original>
